<compile_context>
chip_gen: v6e
topology: v6e:2x2x1
jax: 0.10.0
libtpu: 0.0.40
codegen_flags: <defaults>
</compile_context>

<pallas_src>
import functools
import math

import jax
import jax.numpy as jnp
from jax.experimental import pallas as pl
from jax.experimental.pallas import tpu as pltpu

LN_EPS = 1e-5


def _layernorm(x, gamma, beta):
    mu = jnp.mean(x, axis=-1, keepdims=True)
    var = jnp.mean((x - mu) ** 2, axis=-1, keepdims=True)
    return (x - mu) * jax.lax.rsqrt(var + LN_EPS) * gamma + beta


def _gelu(x, *, approximate: bool):
    if approximate:
        # tanh formulation -> EUP (otherwise-idle VLIW slot)
        c = math.sqrt(2.0 / math.pi)
        return 0.5 * x * (1.0 + jnp.tanh(c * (x + 0.044715 * x * x * x)))
    # PyTorch nn.GELU() default = exact erf formulation.
    return 0.5 * x * (1.0 + jax.lax.erf(x * (1.0 / math.sqrt(2.0))))


def _encoder_kernel(
    x_ref,
    g1_ref, b1_ref,
    wqkv_ref, bqkv_ref,
    wo_ref, bo_ref,
    g2_ref, b2_ref,
    w1_ref, bm1_ref,
    w2_ref, bm2_ref,
    o_ref,
    *, heads: int, fast: bool,
):
    x = x_ref[0]                                   # (N, F) f32
    n, f = x.shape
    dh = f // heads
    mm_dtype = wqkv_ref.dtype                      # bf16 when fast, f32 otherwise
    scale = jnp.float32(1.0 / math.sqrt(f))        # module divides by sqrt(feats)

    def project(a, w_ref, b_ref):
        # MXU matmul: operands in mm_dtype, f32 accumulation, f32 bias add.
        return jnp.dot(a.astype(mm_dtype), w_ref[...],
                       preferred_element_type=jnp.float32) + b_ref[...]

    # ---- LayerNorm 1 (f32) ----
    xn = _layernorm(x, g1_ref[...], b1_ref[...])

    # ---- fused QKV projection: single (N,F) x (F,3F) MXU pass ----
    qkv = project(xn, wqkv_ref, bqkv_ref)          # (N, 3F) f32
    q = qkv[:, :f] * scale                         # fold 1/sqrt(F) into q
    k = qkv[:, f:2 * f]
    v = qkv[:, 2 * f:]

    # ---- batched multi-head attention (no per-head loop / concatenate) ----
    qh = q.reshape(n, heads, dh).transpose(1, 0, 2).astype(mm_dtype)   # (H,N,dh)
    kh = k.reshape(n, heads, dh).transpose(1, 0, 2).astype(mm_dtype)
    vh = v.reshape(n, heads, dh).transpose(1, 0, 2).astype(mm_dtype)

    s = jnp.einsum('hqd,hkd->hqk', qh, kh,
                   preferred_element_type=jnp.float32)                 # (H,N,N)
    s = s - jnp.max(s, axis=-1, keepdims=True)
    p = jnp.exp(s)
    p = p * pl.reciprocal(jnp.sum(p, axis=-1, keepdims=True), approx=fast)
    ctx = jnp.einsum('hqk,hkd->hqd', p.astype(mm_dtype), vh,
                     preferred_element_type=jnp.float32)               # (H,N,dh)
    attn = ctx.transpose(1, 0, 2).reshape(n, f)                        # (N, F)

    o = project(attn, wo_ref, bo_ref)
    out1 = o + x                                                       # residual 1

    # ---- LayerNorm 2 + MLP (Linear -> GELU -> Linear -> GELU, per module) ----
    on = _layernorm(out1, g2_ref[...], b2_ref[...])
    h1 = _gelu(project(on, w1_ref, bm1_ref), approximate=fast)
    m = _gelu(project(h1, w2_ref, bm2_ref), approximate=fast)
    o_ref[0] = (m + out1).astype(o_ref.dtype)                          # residual 2


def transformer_encoder(x, params, *, heads: int, fast: bool = True):
    """x: (B, N, F) float32.  params: PyTorch-style list (weights stored (in,out))."""
    (g1, b1, wq, bq, wk, bk, wv, bv, wo, bo, g2, b2, w1, bm1, w2, bm2) = params
    B, N, F = x.shape
    assert F % heads == 0

    # Fuse Q/K/V into one lane-dense (F, 3F) weight / (1, 3F) bias.
    wqkv = jnp.concatenate([wq, wk, wv], axis=1)
    bqkv = jnp.concatenate([bq, bk, bv], axis=1)

    mm_dtype = jnp.bfloat16 if fast else jnp.float32
    kparams = [
        g1, b1,
        wqkv.astype(mm_dtype), bqkv,
        wo.astype(mm_dtype), bo,
        g2, b2,
        w1.astype(mm_dtype), bm1,
        w2.astype(mm_dtype), bm2,
    ]

    def rep_spec(p):
        zeros = (0,) * p.ndim
        return pl.BlockSpec(p.shape, lambda b, _z=zeros: _z)

    in_specs = [pl.BlockSpec((1, N, F), lambda b: (b, 0, 0))] + [rep_spec(p) for p in kparams]
    out_specs = pl.BlockSpec((1, N, F), lambda b: (b, 0, 0))

    # VMEM budget: params + double-buffered activation blocks + temp headroom,
    # floored at 32 MiB (above v5e's 16 MiB default scoped limit) and capped at
    # 64 MiB so it never exceeds v7x physical VMEM.
    param_bytes = sum(int(p.size) * p.dtype.itemsize for p in kparams)
    act_bytes = 2 * 2 * N * F * 4
    tmp_bytes = 4 * N * (3 * F + heads * N + int(w1.shape[1]) + 4 * F)
    vmem_limit = int(min(64 * 2 ** 20,
                         max(32 * 2 ** 20, 4 * (param_bytes + act_bytes + tmp_bytes))))

    kernel = functools.partial(_encoder_kernel, heads=heads, fast=fast)
    return pl.pallas_call(
        kernel,
        out_shape=jax.ShapeDtypeStruct((B, N, F), x.dtype),
        grid=(B,),
        in_specs=in_specs,
        out_specs=out_specs,
        compiler_params=pltpu.CompilerParams(
            dimension_semantics=("parallel",),
            vmem_limit_bytes=vmem_limit,
        ),
    )(x, *kparams)


def make_params(key, feats, mlp_hidden):
    """Deterministic synthetic parameters.  Linear weights stored (in, out)."""
    ks = jax.random.split(key, 12)
    s = 0.1

    def w(k, shape):
        return s * jax.random.normal(k, shape, dtype=jnp.float32)

    gamma1 = jnp.ones((1, feats), jnp.float32)
    beta1 = jnp.zeros((1, feats), jnp.float32)
    wq = w(ks[0], (feats, feats)); bq = w(ks[1], (1, feats))
    wk = w(ks[2], (feats, feats)); bk = w(ks[3], (1, feats))
    wv = w(ks[4], (feats, feats)); bv = w(ks[5], (1, feats))
    wo = w(ks[6], (feats, feats)); bo = w(ks[7], (1, feats))
    gamma2 = jnp.ones((1, feats), jnp.float32)
    beta2 = jnp.zeros((1, feats), jnp.float32)
    w1 = w(ks[8], (feats, mlp_hidden)); bm1 = w(ks[9], (1, mlp_hidden))
    w2 = w(ks[10], (mlp_hidden, feats)); bm2 = w(ks[11], (1, feats))
    return [gamma1, beta1, wq, bq, wk, bk, wv, bv, wo, bo,
            gamma2, beta2, w1, bm1, w2, bm2]


def reference_forward(x, params, heads):
    """Pure-JAX reference mirroring the PyTorch module exactly."""
    (g1, b1, wq, bq, wk, bk, wv, bv, wo, bo, g2, b2, w1, bm1, w2, bm2) = params
    B, N, F = x.shape
    dh = F // heads

    def ln(y, g, b):
        mu = jnp.mean(y, -1, keepdims=True)
        var = jnp.mean((y - mu) ** 2, -1, keepdims=True)
        return (y - mu) / jnp.sqrt(var + LN_EPS) * g + b

    xn = ln(x, g1, b1)
    q = (xn @ wq + bq).reshape(B, N, heads, dh).transpose(0, 2, 1, 3)
    k = (xn @ wk + bk).reshape(B, N, heads, dh).transpose(0, 2, 1, 3)
    v = (xn @ wv + bv).reshape(B, N, heads, dh).transpose(0, 2, 1, 3)
    score = jax.nn.softmax(jnp.einsum('bhif,bhjf->bhij', q, k) / (F ** 0.5), axis=-1)
    attn = jnp.einsum('bhij,bhjf->bihf', score, v).reshape(B, N, F)
    o = attn @ wo + bo
    out1 = o + x
    on = ln(out1, g2, b2)
    gelu = lambda t: jax.nn.gelu(t, approximate=False)
    m = gelu(gelu(on @ w1 + bm1) @ w2 + bm2)
    return m + out1


if __name__ == "__main__":
    # Small but lane-dense shapes (F and MLP hidden multiples of 128).
    B, N, F, HEADS, MLP = 2, 8, 128, 8, 256
    key = jax.random.PRNGKey(0)
    kx, kp = jax.random.split(key)
    x = jax.random.normal(kx, (B, N, F), dtype=jnp.float32)
    params = make_params(kp, F, MLP)

    ref = reference_forward(x, params, HEADS)

    # Precise path (f32 matmuls, exact reciprocal, exact-erf GELU): tight check.
    out_f32 = jax.block_until_ready(transformer_encoder(x, params, heads=HEADS, fast=False))
    assert out_f32.shape == (B, N, F)
    err_f32 = float(jnp.max(jnp.abs(out_f32 - ref)))
    assert jnp.allclose(out_f32, ref, atol=1e-4, rtol=1e-4), err_f32

    # Fast path (bf16 MXU operands, approx reciprocal, tanh GELU): loose check.
    out_fast = jax.block_until_ready(transformer_encoder(x, params, heads=HEADS, fast=True))
    err_fast = float(jnp.max(jnp.abs(out_fast - ref)))
    tol = 3e-2 * float(jnp.max(jnp.abs(ref))) + 3e-2
    assert err_fast <= tol, (err_fast, tol)

    print("KERNEL_OK")
</pallas_src>

<mosaic_0001>
module attributes {stable_mosaic.version = 11 : i64} {
  func.func @_encoder_kernel(%arg0: i32, %arg1: memref<1x8x128xf32, #tpu.memory_space<vmem>>, %arg2: memref<1x128xf32, #tpu.memory_space<vmem>>, %arg3: memref<1x128xf32, #tpu.memory_space<vmem>>, %arg4: memref<128x384xf32, #tpu.memory_space<vmem>>, %arg5: memref<1x384xf32, #tpu.memory_space<vmem>>, %arg6: memref<128x128xf32, #tpu.memory_space<vmem>>, %arg7: memref<1x128xf32, #tpu.memory_space<vmem>>, %arg8: memref<1x128xf32, #tpu.memory_space<vmem>>, %arg9: memref<1x128xf32, #tpu.memory_space<vmem>>, %arg10: memref<128x256xf32, #tpu.memory_space<vmem>>, %arg11: memref<1x256xf32, #tpu.memory_space<vmem>>, %arg12: memref<256x128xf32, #tpu.memory_space<vmem>>, %arg13: memref<1x128xf32, #tpu.memory_space<vmem>>, %arg14: memref<1x8x128xf32, #tpu.memory_space<vmem>>) attributes {dimension_semantics = [#tpu.dimension_semantics<parallel>], iteration_bounds = array<i64: 2>, scalar_prefetch = 0 : i64, scratch_operands = 0 : i64, tpu.core_type = #tpu.core_type<tc>, window_params = [{transform_indices = @transform_0, window_bounds = array<i64: 1, 8, 128>}, {pipeline_mode = #tpu.pipeline_mode<synchronous>, transform_indices = @transform_1, window_bounds = array<i64: 1, 128>}, {pipeline_mode = #tpu.pipeline_mode<synchronous>, transform_indices = @transform_2, window_bounds = array<i64: 1, 128>}, {pipeline_mode = #tpu.pipeline_mode<synchronous>, transform_indices = @transform_3, window_bounds = array<i64: 128, 384>}, {pipeline_mode = #tpu.pipeline_mode<synchronous>, transform_indices = @transform_4, window_bounds = array<i64: 1, 384>}, {pipeline_mode = #tpu.pipeline_mode<synchronous>, transform_indices = @transform_5, window_bounds = array<i64: 128, 128>}, {pipeline_mode = #tpu.pipeline_mode<synchronous>, transform_indices = @transform_6, window_bounds = array<i64: 1, 128>}, {pipeline_mode = #tpu.pipeline_mode<synchronous>, transform_indices = @transform_7, window_bounds = array<i64: 1, 128>}, {pipeline_mode = #tpu.pipeline_mode<synchronous>, transform_indices = @transform_8, window_bounds = array<i64: 1, 128>}, {pipeline_mode = #tpu.pipeline_mode<synchronous>, transform_indices = @transform_9, window_bounds = array<i64: 128, 256>}, {pipeline_mode = #tpu.pipeline_mode<synchronous>, transform_indices = @transform_10, window_bounds = array<i64: 1, 256>}, {pipeline_mode = #tpu.pipeline_mode<synchronous>, transform_indices = @transform_11, window_bounds = array<i64: 256, 128>}, {pipeline_mode = #tpu.pipeline_mode<synchronous>, transform_indices = @transform_12, window_bounds = array<i64: 1, 128>}, {transform_indices = @transform_13, window_bounds = array<i64: 1, 8, 128>}]} {
    %c0 = arith.constant 0 : index
    %c0_0 = arith.constant 0 : index
    %c0_1 = arith.constant 0 : index
    %0 = vector.load %arg1[%c0, %c0_0, %c0_1] : memref<1x8x128xf32, #tpu.memory_space<vmem>>, vector<1x8x128xf32>
    %1 = vector.shape_cast %0 : vector<1x8x128xf32> to vector<8x128xf32>
    %c0_2 = arith.constant 0 : index
    %c0_3 = arith.constant 0 : index
    %2 = vector.load %arg2[%c0_2, %c0_3] : memref<1x128xf32, #tpu.memory_space<vmem>>, vector<1x128xf32>
    %c0_4 = arith.constant 0 : index
    %c0_5 = arith.constant 0 : index
    %3 = vector.load %arg3[%c0_4, %c0_5] : memref<1x128xf32, #tpu.memory_space<vmem>>, vector<1x128xf32>
    %cst = arith.constant dense<0.000000e+00> : vector<8xf32>
    %4 = vector.multi_reduction <add>, %1, %cst [1] : vector<8x128xf32> to vector<8xf32>
    %5 = vector.shape_cast %4 : vector<8xf32> to vector<8x1xf32>
    %cst_6 = arith.constant 1.280000e+02 : f32
    %6 = vector.broadcast %cst_6 : f32 to vector<8x1xf32>
    %7 = arith.divf %5, %6 : vector<8x1xf32>
    %8 = vector.broadcast %7 : vector<8x1xf32> to vector<8x128xf32>
    %9 = arith.subf %1, %8 : vector<8x128xf32>
    %10 = arith.mulf %9, %9 : vector<8x128xf32>
    %cst_7 = arith.constant dense<0.000000e+00> : vector<8xf32>
    %11 = vector.multi_reduction <add>, %10, %cst_7 [1] : vector<8x128xf32> to vector<8xf32>
    %12 = vector.shape_cast %11 : vector<8xf32> to vector<8x1xf32>
    %cst_8 = arith.constant 1.280000e+02 : f32
    %13 = vector.broadcast %cst_8 : f32 to vector<8x1xf32>
    %14 = arith.divf %12, %13 : vector<8x1xf32>
    %15 = vector.broadcast %7 : vector<8x1xf32> to vector<8x128xf32>
    %16 = arith.subf %1, %15 : vector<8x128xf32>
    %cst_9 = arith.constant 9.99999974E-6 : f32
    %17 = vector.broadcast %cst_9 : f32 to vector<8x1xf32>
    %18 = arith.addf %14, %17 : vector<8x1xf32>
    %19 = math.rsqrt %18 : vector<8x1xf32>
    %20 = vector.broadcast %19 : vector<8x1xf32> to vector<8x128xf32>
    %21 = arith.mulf %16, %20 : vector<8x128xf32>
    %22 = vector.broadcast %2 : vector<1x128xf32> to vector<8x128xf32>
    %23 = arith.mulf %21, %22 : vector<8x128xf32>
    %24 = vector.broadcast %3 : vector<1x128xf32> to vector<8x128xf32>
    %25 = arith.addf %23, %24 : vector<8x128xf32>
    %c0_10 = arith.constant 0 : index
    %c0_11 = arith.constant 0 : index
    %26 = vector.load %arg4[%c0_10, %c0_11] : memref<128x384xf32, #tpu.memory_space<vmem>>, vector<128x384xf32>
    %cst_12 = arith.constant dense<0.000000e+00> : vector<8x384xf32>
    %27 = tpu.matmul %25, %26, %cst_12 {dimension_numbers = #tpu.dot_dimension_numbers<[1], [0], [0], [1], [0, 0, 1, 1], [], []>} : vector<8x128xf32>, vector<128x384xf32>, vector<8x384xf32> -> vector<8x384xf32>
    %c0_13 = arith.constant 0 : index
    %c0_14 = arith.constant 0 : index
    %28 = vector.load %arg5[%c0_13, %c0_14] : memref<1x384xf32, #tpu.memory_space<vmem>>, vector<1x384xf32>
    %29 = vector.broadcast %28 : vector<1x384xf32> to vector<8x384xf32>
    %30 = arith.addf %27, %29 : vector<8x384xf32>
    %31 = vector.extract_strided_slice %30 {offsets = [0, 0], sizes = [8, 128], strides = [1, 1]} : vector<8x384xf32> to vector<8x128xf32>
    %cst_15 = arith.constant 0.0883883461 : f32
    %32 = vector.broadcast %cst_15 : f32 to vector<8x128xf32>
    %33 = arith.mulf %31, %32 : vector<8x128xf32>
    %34 = vector.extract_strided_slice %30 {offsets = [0, 128], sizes = [8, 128], strides = [1, 1]} : vector<8x384xf32> to vector<8x128xf32>
    %35 = vector.extract_strided_slice %30 {offsets = [0, 256], sizes = [8, 128], strides = [1, 1]} : vector<8x384xf32> to vector<8x128xf32>
    %36 = vector.shape_cast %33 : vector<8x128xf32> to vector<8x8x16xf32>
    %37 = tpu.transpose %36, [1, 0, 2] : vector<8x8x16xf32> -> vector<8x8x16xf32>
    %38 = vector.shape_cast %34 : vector<8x128xf32> to vector<8x8x16xf32>
    %39 = tpu.transpose %38, [1, 0, 2] : vector<8x8x16xf32> -> vector<8x8x16xf32>
    %40 = vector.shape_cast %35 : vector<8x128xf32> to vector<8x8x16xf32>
    %41 = tpu.transpose %40, [1, 0, 2] : vector<8x8x16xf32> -> vector<8x8x16xf32>
    "tpu.trace_start"() <{level = 10 : i32, message = "hqd,hkd->hqk"}> : () -> ()
    %cst_16 = arith.constant dense<0.000000e+00> : vector<8x8x8xf32>
    %42 = tpu.matmul %37, %39, %cst_16 {dimension_numbers = #tpu.dot_dimension_numbers<[2], [2], [1], [1], [0, 0, 0, 1, 1, 1], [0], [0]>} : vector<8x8x16xf32>, vector<8x8x16xf32>, vector<8x8x8xf32> -> vector<8x8x8xf32>
    "tpu.trace_stop"() : () -> ()
    %cst_17 = arith.constant dense<0xFF800000> : vector<8x8xf32>
    %43 = vector.multi_reduction <maximumf>, %42, %cst_17 [2] : vector<8x8x8xf32> to vector<8x8xf32>
    %44 = vector.shape_cast %43 : vector<8x8xf32> to vector<8x8x1xf32>
    %45 = vector.broadcast %44 : vector<8x8x1xf32> to vector<8x8x8xf32>
    %46 = arith.subf %42, %45 : vector<8x8x8xf32>
    %47 = math.exp %46 : vector<8x8x8xf32>
    %cst_18 = arith.constant dense<0.000000e+00> : vector<8x8xf32>
    %48 = vector.multi_reduction <add>, %47, %cst_18 [2] : vector<8x8x8xf32> to vector<8x8xf32>
    %49 = vector.shape_cast %48 : vector<8x8xf32> to vector<8x8x1xf32>
    %50 = tpu.reciprocal %49 : vector<8x8x1xf32> -> vector<8x8x1xf32>
    %51 = vector.broadcast %50 : vector<8x8x1xf32> to vector<8x8x8xf32>
    %52 = arith.mulf %47, %51 : vector<8x8x8xf32>
    "tpu.trace_start"() <{level = 10 : i32, message = "hqk,hkd->hqd"}> : () -> ()
    %cst_19 = arith.constant dense<0.000000e+00> : vector<8x8x16xf32>
    %53 = tpu.matmul %52, %41, %cst_19 {dimension_numbers = #tpu.dot_dimension_numbers<[2], [1], [1], [2], [0, 0, 0, 1, 1, 2], [0], [0]>} : vector<8x8x8xf32>, vector<8x8x16xf32>, vector<8x8x16xf32> -> vector<8x8x16xf32>
    "tpu.trace_stop"() : () -> ()
    %54 = tpu.transpose %53, [1, 0, 2] : vector<8x8x16xf32> -> vector<8x8x16xf32>
    %55 = vector.shape_cast %54 : vector<8x8x16xf32> to vector<8x128xf32>
    %c0_20 = arith.constant 0 : index
    %c0_21 = arith.constant 0 : index
    %56 = vector.load %arg6[%c0_20, %c0_21] : memref<128x128xf32, #tpu.memory_space<vmem>>, vector<128x128xf32>
    %cst_22 = arith.constant dense<0.000000e+00> : vector<8x128xf32>
    %57 = tpu.matmul %55, %56, %cst_22 {dimension_numbers = #tpu.dot_dimension_numbers<[1], [0], [0], [1], [0, 0, 1, 1], [], []>} : vector<8x128xf32>, vector<128x128xf32>, vector<8x128xf32> -> vector<8x128xf32>
    %c0_23 = arith.constant 0 : index
    %c0_24 = arith.constant 0 : index
    %58 = vector.load %arg7[%c0_23, %c0_24] : memref<1x128xf32, #tpu.memory_space<vmem>>, vector<1x128xf32>
    %59 = vector.broadcast %58 : vector<1x128xf32> to vector<8x128xf32>
    %60 = arith.addf %57, %59 : vector<8x128xf32>
    %61 = arith.addf %60, %1 : vector<8x128xf32>
    %c0_25 = arith.constant 0 : index
    %c0_26 = arith.constant 0 : index
    %62 = vector.load %arg8[%c0_25, %c0_26] : memref<1x128xf32, #tpu.memory_space<vmem>>, vector<1x128xf32>
    %c0_27 = arith.constant 0 : index
    %c0_28 = arith.constant 0 : index
    %63 = vector.load %arg9[%c0_27, %c0_28] : memref<1x128xf32, #tpu.memory_space<vmem>>, vector<1x128xf32>
    %cst_29 = arith.constant dense<0.000000e+00> : vector<8xf32>
    %64 = vector.multi_reduction <add>, %61, %cst_29 [1] : vector<8x128xf32> to vector<8xf32>
    %65 = vector.shape_cast %64 : vector<8xf32> to vector<8x1xf32>
    %cst_30 = arith.constant 1.280000e+02 : f32
    %66 = vector.broadcast %cst_30 : f32 to vector<8x1xf32>
    %67 = arith.divf %65, %66 : vector<8x1xf32>
    %68 = vector.broadcast %67 : vector<8x1xf32> to vector<8x128xf32>
    %69 = arith.subf %61, %68 : vector<8x128xf32>
    %70 = arith.mulf %69, %69 : vector<8x128xf32>
    %cst_31 = arith.constant dense<0.000000e+00> : vector<8xf32>
    %71 = vector.multi_reduction <add>, %70, %cst_31 [1] : vector<8x128xf32> to vector<8xf32>
    %72 = vector.shape_cast %71 : vector<8xf32> to vector<8x1xf32>
    %cst_32 = arith.constant 1.280000e+02 : f32
    %73 = vector.broadcast %cst_32 : f32 to vector<8x1xf32>
    %74 = arith.divf %72, %73 : vector<8x1xf32>
    %75 = vector.broadcast %67 : vector<8x1xf32> to vector<8x128xf32>
    %76 = arith.subf %61, %75 : vector<8x128xf32>
    %cst_33 = arith.constant 9.99999974E-6 : f32
    %77 = vector.broadcast %cst_33 : f32 to vector<8x1xf32>
    %78 = arith.addf %74, %77 : vector<8x1xf32>
    %79 = math.rsqrt %78 : vector<8x1xf32>
    %80 = vector.broadcast %79 : vector<8x1xf32> to vector<8x128xf32>
    %81 = arith.mulf %76, %80 : vector<8x128xf32>
    %82 = vector.broadcast %62 : vector<1x128xf32> to vector<8x128xf32>
    %83 = arith.mulf %81, %82 : vector<8x128xf32>
    %84 = vector.broadcast %63 : vector<1x128xf32> to vector<8x128xf32>
    %85 = arith.addf %83, %84 : vector<8x128xf32>
    %c0_34 = arith.constant 0 : index
    %c0_35 = arith.constant 0 : index
    %86 = vector.load %arg10[%c0_34, %c0_35] : memref<128x256xf32, #tpu.memory_space<vmem>>, vector<128x256xf32>
    %cst_36 = arith.constant dense<0.000000e+00> : vector<8x256xf32>
    %87 = tpu.matmul %85, %86, %cst_36 {dimension_numbers = #tpu.dot_dimension_numbers<[1], [0], [0], [1], [0, 0, 1, 1], [], []>} : vector<8x128xf32>, vector<128x256xf32>, vector<8x256xf32> -> vector<8x256xf32>
    %c0_37 = arith.constant 0 : index
    %c0_38 = arith.constant 0 : index
    %88 = vector.load %arg11[%c0_37, %c0_38] : memref<1x256xf32, #tpu.memory_space<vmem>>, vector<1x256xf32>
    %89 = vector.broadcast %88 : vector<1x256xf32> to vector<8x256xf32>
    %90 = arith.addf %87, %89 : vector<8x256xf32>
    %cst_39 = arith.constant 5.000000e-01 : f32
    %91 = vector.broadcast %cst_39 : f32 to vector<8x256xf32>
    %92 = arith.mulf %91, %90 : vector<8x256xf32>
    %cst_40 = arith.constant 0.707106769 : f32
    %93 = vector.broadcast %cst_40 : f32 to vector<8x256xf32>
    %94 = arith.mulf %90, %93 : vector<8x256xf32>
    %95 = math.erf %94 : vector<8x256xf32>
    %cst_41 = arith.constant 1.000000e+00 : f32
    %96 = vector.broadcast %cst_41 : f32 to vector<8x256xf32>
    %97 = arith.addf %96, %95 : vector<8x256xf32>
    %98 = arith.mulf %92, %97 : vector<8x256xf32>
    %c0_42 = arith.constant 0 : index
    %c0_43 = arith.constant 0 : index
    %99 = vector.load %arg12[%c0_42, %c0_43] : memref<256x128xf32, #tpu.memory_space<vmem>>, vector<256x128xf32>
    %cst_44 = arith.constant dense<0.000000e+00> : vector<8x128xf32>
    %100 = tpu.matmul %98, %99, %cst_44 {dimension_numbers = #tpu.dot_dimension_numbers<[1], [0], [0], [1], [0, 0, 1, 1], [], []>} : vector<8x256xf32>, vector<256x128xf32>, vector<8x128xf32> -> vector<8x128xf32>
    %c0_45 = arith.constant 0 : index
    %c0_46 = arith.constant 0 : index
    %101 = vector.load %arg13[%c0_45, %c0_46] : memref<1x128xf32, #tpu.memory_space<vmem>>, vector<1x128xf32>
    %102 = vector.broadcast %101 : vector<1x128xf32> to vector<8x128xf32>
    %103 = arith.addf %100, %102 : vector<8x128xf32>
    %cst_47 = arith.constant 5.000000e-01 : f32
    %104 = vector.broadcast %cst_47 : f32 to vector<8x128xf32>
    %105 = arith.mulf %104, %103 : vector<8x128xf32>
    %cst_48 = arith.constant 0.707106769 : f32
    %106 = vector.broadcast %cst_48 : f32 to vector<8x128xf32>
    %107 = arith.mulf %103, %106 : vector<8x128xf32>
    %108 = math.erf %107 : vector<8x128xf32>
    %cst_49 = arith.constant 1.000000e+00 : f32
    %109 = vector.broadcast %cst_49 : f32 to vector<8x128xf32>
    %110 = arith.addf %109, %108 : vector<8x128xf32>
    %111 = arith.mulf %105, %110 : vector<8x128xf32>
    %112 = arith.addf %111, %61 : vector<8x128xf32>
    %c0_50 = arith.constant 0 : index
    %c0_51 = arith.constant 0 : index
    %c0_52 = arith.constant 0 : index
    %113 = vector.load %arg14[%c0_50, %c0_51, %c0_52] : memref<1x8x128xf32, #tpu.memory_space<vmem>>, vector<1x8x128xf32>
    %114 = vector.shape_cast %113 : vector<1x8x128xf32> to vector<8x128xf32>
    %115 = vector.shape_cast %112 : vector<8x128xf32> to vector<1x8x128xf32>
    tpu.vector_store %arg14[%c0_50, %c0_51, %c0_52], %115 {strides = array<i32>} : memref<1x8x128xf32, #tpu.memory_space<vmem>>, vector<1x8x128xf32>,
    return
  }
  func.func @transform_0(%arg0: i32) -> (i32, i32, i32) {
    %c0_i32 = arith.constant 0 : i32
    %c0_i32_0 = arith.constant 0 : i32
    %c0_i32_1 = arith.constant 0 : i32
    return %arg0, %c0_i32, %c0_i32_0 : i32, i32, i32
  }
  func.func @transform_1(%arg0: i32) -> (i32, i32) {
    %c0_i32 = arith.constant 0 : i32
    %c0_i32_0 = arith.constant 0 : i32
    %c0_i32_1 = arith.constant 0 : i32
    return %c0_i32, %c0_i32_0 : i32, i32
  }
  func.func @transform_2(%arg0: i32) -> (i32, i32) {
    %c0_i32 = arith.constant 0 : i32
    %c0_i32_0 = arith.constant 0 : i32
    %c0_i32_1 = arith.constant 0 : i32
    return %c0_i32, %c0_i32_0 : i32, i32
  }
  func.func @transform_3(%arg0: i32) -> (i32, i32) {
    %c0_i32 = arith.constant 0 : i32
    %c0_i32_0 = arith.constant 0 : i32
    %c0_i32_1 = arith.constant 0 : i32
    return %c0_i32, %c0_i32_0 : i32, i32
  }
  func.func @transform_4(%arg0: i32) -> (i32, i32) {
    %c0_i32 = arith.constant 0 : i32
    %c0_i32_0 = arith.constant 0 : i32
    %c0_i32_1 = arith.constant 0 : i32
    return %c0_i32, %c0_i32_0 : i32, i32
  }
  func.func @transform_5(%arg0: i32) -> (i32, i32) {
    %c0_i32 = arith.constant 0 : i32
    %c0_i32_0 = arith.constant 0 : i32
    %c0_i32_1 = arith.constant 0 : i32
    return %c0_i32, %c0_i32_0 : i32, i32
  }
  func.func @transform_6(%arg0: i32) -> (i32, i32) {
    %c0_i32 = arith.constant 0 : i32
    %c0_i32_0 = arith.constant 0 : i32
    %c0_i32_1 = arith.constant 0 : i32
    return %c0_i32, %c0_i32_0 : i32, i32
  }
  func.func @transform_7(%arg0: i32) -> (i32, i32) {
    %c0_i32 = arith.constant 0 : i32
    %c0_i32_0 = arith.constant 0 : i32
    %c0_i32_1 = arith.constant 0 : i32
    return %c0_i32, %c0_i32_0 : i32, i32
  }
  func.func @transform_8(%arg0: i32) -> (i32, i32) {
    %c0_i32 = arith.constant 0 : i32
    %c0_i32_0 = arith.constant 0 : i32
    %c0_i32_1 = arith.constant 0 : i32
    return %c0_i32, %c0_i32_0 : i32, i32
  }
  func.func @transform_9(%arg0: i32) -> (i32, i32) {
    %c0_i32 = arith.constant 0 : i32
    %c0_i32_0 = arith.constant 0 : i32
    %c0_i32_1 = arith.constant 0 : i32
    return %c0_i32, %c0_i32_0 : i32, i32
  }
  func.func @transform_10(%arg0: i32) -> (i32, i32) {
    %c0_i32 = arith.constant 0 : i32
    %c0_i32_0 = arith.constant 0 : i32
    %c0_i32_1 = arith.constant 0 : i32
    return %c0_i32, %c0_i32_0 : i32, i32
  }
  func.func @transform_11(%arg0: i32) -> (i32, i32) {
    %c0_i32 = arith.constant 0 : i32
    %c0_i32_0 = arith.constant 0 : i32
    %c0_i32_1 = arith.constant 0 : i32
    return %c0_i32, %c0_i32_0 : i32, i32
  }
  func.func @transform_12(%arg0: i32) -> (i32, i32) {
    %c0_i32 = arith.constant 0 : i32
    %c0_i32_0 = arith.constant 0 : i32
    %c0_i32_1 = arith.constant 0 : i32
    return %c0_i32, %c0_i32_0 : i32, i32
  }
  func.func @transform_13(%arg0: i32) -> (i32, i32, i32) {
    %c0_i32 = arith.constant 0 : i32
    %c0_i32_0 = arith.constant 0 : i32
    %c0_i32_1 = arith.constant 0 : i32
    return %arg0, %c0_i32, %c0_i32_0 : i32, i32, i32
  }
}

</mosaic_0001>

<llo_original>
// kernel: tpu_custom_call.1
$region0: #{tpu_custom_call.1}
  #allocation0 [shape = 'u32[]', space=smem, size = 0x4, offset = 0x4, fixed_abs, tag = 'smem constant byte address 0x4 - core index']
  #allocation1 [shape = 'u32[144,128]{1,0:T(1,128)}', space=vmem, size = 0x12000, scoped, tag = 'internal scratch']
  %s0 = inlined_call_operand.hbm [shape: f32[2,8,128], index: 0, kind: input, shape index: {}]
  %s1 = inlined_call_operand.hbm [shape: f32[1,128], index: 1, kind: input, shape index: {}]
  %s2 = inlined_call_operand.hbm [shape: f32[1,128], index: 2, kind: input, shape index: {}]
  %s3 = inlined_call_operand.hbm [shape: f32[128,384], index: 3, kind: input, shape index: {}]
  %s4 = inlined_call_operand.vmem [shape: f32[1,384], index: 4, kind: input, shape index: {}]
  %s5 = inlined_call_operand.hbm [shape: f32[128,128], index: 5, kind: input, shape index: {}]
  %s6 = inlined_call_operand.vmem [shape: f32[1,128], index: 6, kind: input, shape index: {}]
  %s7 = inlined_call_operand.vmem [shape: f32[1,128], index: 7, kind: input, shape index: {}]
  %s8 = inlined_call_operand.vmem [shape: f32[1,128], index: 8, kind: input, shape index: {}]
  %s9 = inlined_call_operand.hbm [shape: f32[128,256], index: 9, kind: input, shape index: {}]
  %s10 = inlined_call_operand.vmem [shape: f32[1,256], index: 10, kind: input, shape index: {}]
  %s11 = inlined_call_operand.hbm [shape: f32[256,128], index: 11, kind: input, shape index: {}]
  %s12 = inlined_call_operand.vmem [shape: f32[1,128], index: 12, kind: input, shape index: {}]
  %s13 = inlined_call_operand.hbm [shape: f32[2,8,128], index: 13, kind: output, shape index: {}]
  %s14 = sld [smem:[#allocation0]]
  $region113: #{tpu_custom_call.1} parent=0
    _
  %s16 = ssub.s32 1, %s14
  %s17 = scalar_select 0, %s16, %s14
  $region1: #{tpu_custom_call.1} parent=0
    #allocation2 [shape = 'u8[8192]{0}', space=vmem, size = 0x2000, scoped, tag = 'input window, operand 0']
    #allocation3 [shape = 's32[2]{0}', space=sflag, size = 0x8, scoped, tag = 'scoped memory for tpu_custom_call.1']
    #allocation4 [shape = 's32[2]{0}', space=sflag, size = 0x8, scoped, tag = 'scoped memory for tpu_custom_call.1']
    #allocation5 [shape = 'u8[512]{0}', space=vmem, size = 0x400, scoped, tag = 'input window, operand 1, single buffered']
    #allocation6 [shape = 's32[1]{0}', space=sflag, size = 0x4, scoped, tag = 'scoped memory for tpu_custom_call.1']
    #allocation7 [shape = 'u8[512]{0}', space=vmem, size = 0x400, scoped, tag = 'input window, operand 2, single buffered']
    #allocation8 [shape = 'u8[196608]{0}', space=vmem, size = 0x30000, scoped, tag = 'input window, operand 3, single buffered']
    #allocation9 [shape = 's32[1]{0}', space=sflag, size = 0x4, scoped, tag = 'scoped memory for tpu_custom_call.1']
    #allocation10 [shape = 'u8[65536]{0}', space=vmem, size = 0x10000, scoped, tag = 'input window, operand 5, single buffered']
    #allocation11 [shape = 'u8[131072]{0}', space=vmem, size = 0x20000, scoped, tag = 'input window, operand 9, single buffered']
    #allocation12 [shape = 's32[1]{0}', space=sflag, size = 0x4, scoped, tag = 'scoped memory for tpu_custom_call.1']
    #allocation13 [shape = 'u8[131072]{0}', space=vmem, size = 0x20000, scoped, tag = 'input window, operand 11, single buffered']
    #allocation14 [shape = 'u8[8192]{0}', space=vmem, size = 0x2000, scoped, tag = 'output window, operand 0']
    %18 = vsyncpa [#allocation3], 0
    %s19 = scalar_lea.sflag [#allocation3], 1
    %20 = vsyncpa %s19, 0
    %21 = vsyncpa [#allocation6], 0
    %22 = vsyncpa [#allocation9], 0
    %23 = vsyncpa [#allocation12], 0
    %24 = vsyncpa [#allocation4], 0
    %s25 = scalar_lea.sflag [#allocation4], 1
    %26 = vsyncpa %s25, 0
    loop: start=0, step=1, limit=4
    $region2: #{tpu_custom_call.1} parent=1 // loop_pre_header
      _
    $region3: #{tpu_custom_call.1} parent=1 // loop_header
      %s28 = sphi 0, %s32
      %p29 = scmp.ge.s32.totalorder %s28, 4
      %s38 = sphi 0, %s40
      %s41 = sphi 0, %s38
      %s42 = sphi 0, %s41
      %s58 = sphi 0, %s42
      %s62 = sphi 0, %s62
      %s64 = sphi 0, %s62
      %s65 = sphi 0, %s64
      %s79 = sphi 0, %s65
      %s83 = sphi 0, %s83
      %s85 = sphi 0, %s83
      %s86 = sphi 0, %s85
      %s100 = sphi 0, %s86
      %s104 = sphi 0, %s104
      %s106 = sphi 0, %s104
      %s107 = sphi 0, %s106
      %s121 = sphi 0, %s107
      %s125 = sphi 0, %s125
      %s127 = sphi 0, %s125
      %s128 = sphi 0, %s127
      %s142 = sphi 0, %s128
      %s146 = sphi 0, %s146
      %s148 = sphi 0, %s146
      %s149 = sphi 0, %s148
      %s163 = sphi 0, %s149
      %s167 = sphi 0, %s167
      %s169 = sphi 0, %s167
      %s170 = sphi 0, %s169
      %s184 = sphi 0, %s170
      %s188 = sphi 0, %s188
      %s190 = sphi 0, %s188
      %s191 = sphi 0, %s190
      %s205 = sphi 0, %s191
      %s209 = sphi 0, %s209
      %s211 = sphi 0, %s209
      %s212 = sphi 0, %s211
      %s226 = sphi 0, %s212
      %s230 = sphi 0, %s230
      %s232 = sphi 0, %s230
      %s233 = sphi 0, %s232
      %s247 = sphi 0, %s233
      %s251 = sphi 0, %s251
      %s253 = sphi 0, %s251
      %s254 = sphi 0, %s253
      %s268 = sphi 0, %s254
      %s272 = sphi 0, %s272
      %s274 = sphi 0, %s272
      %s275 = sphi 0, %s274
      %s289 = sphi 0, %s275
      %s293 = sphi 0, %s293
      %s295 = sphi 0, %s293
      %s296 = sphi 0, %s295
      %s310 = sphi 0, %s296
      %s316 = sphi 0, %s318
      %s319 = sphi 0, %s316
      %s320 = sphi 0, %s319
      %s336 = sphi 0, %s320
    $region4: #{tpu_custom_call.1} parent=1 // loop_header_branch
      %31 = sbr.rel (%p29) target = $region8
    $region5: #{tpu_custom_call.1} parent=1 // loop_body
      %s33 = ssub.s32 %s28, 1
      %s34 = ssub.s32 %s28, 2
      %s35 = sadd.s32 %s28, 1
      %s36 = ssub.s32 %s28, %s35
      %p37 = scmp.eq.s32.totalorder %s36, 0
      %s39 = sadd.s32 %s38, 1
      %s40 = scalar_select %p37, %s38, %s39
      %p43 = pneg %p37
      %p44 = scmp.eq.s32.totalorder %s28, 1
      %p45 = por %p43, %p44
      %p46 = scmp.ne.s32.totalorder %s38, %s41
      %p47 = scmp.eq.s32.totalorder %s28, 0
      %p48 = por %p46, %p47
      %p49 = scmp.ne.s32.totalorder %s38, %s41
      %p50 = scmp.eq.s32.totalorder %s33, 1
      %p51 = por %p49, %p50
      %p52 = scmp.ne.s32.totalorder %s41, %s42
      %p53 = scmp.eq.s32.totalorder %s33, 0
      %p54 = por %p52, %p53
      %p55 = scmp.ne.s32.totalorder %s41, %s42
      %p56 = scmp.eq.s32.totalorder %s34, 1
      %p57 = por %p55, %p56
      %p59 = scmp.ne.s32.totalorder %s42, %s58
      %p60 = scmp.eq.s32.totalorder %s34, 0
      %p61 = por %p59, %p60
      %s63 = sadd.s32 %s62, 1
      %p66 = scmp.eq.s32.totalorder %s28, 1
      %p67 = scmp.ne.s32.totalorder %s62, %s64
      %p68 = scmp.eq.s32.totalorder %s28, 0
      %p69 = por %p67, %p68
      %p70 = scmp.ne.s32.totalorder %s62, %s64
      %p71 = scmp.eq.s32.totalorder %s33, 1
      %p72 = por %p70, %p71
      %p73 = scmp.ne.s32.totalorder %s64, %s65
      %p74 = scmp.eq.s32.totalorder %s33, 0
      %p75 = por %p73, %p74
      %p76 = scmp.ne.s32.totalorder %s64, %s65
      %p77 = scmp.eq.s32.totalorder %s34, 1
      %p78 = por %p76, %p77
      %p80 = scmp.ne.s32.totalorder %s65, %s79
      %p81 = scmp.eq.s32.totalorder %s34, 0
      %p82 = por %p80, %p81
      %s84 = sadd.s32 %s83, 1
      %p87 = scmp.eq.s32.totalorder %s28, 1
      %p88 = scmp.ne.s32.totalorder %s83, %s85
      %p89 = scmp.eq.s32.totalorder %s28, 0
      %p90 = por %p88, %p89
      %p91 = scmp.ne.s32.totalorder %s83, %s85
      %p92 = scmp.eq.s32.totalorder %s33, 1
      %p93 = por %p91, %p92
      %p94 = scmp.ne.s32.totalorder %s85, %s86
      %p95 = scmp.eq.s32.totalorder %s33, 0
      %p96 = por %p94, %p95
      %p97 = scmp.ne.s32.totalorder %s85, %s86
      %p98 = scmp.eq.s32.totalorder %s34, 1
      %p99 = por %p97, %p98
      %p101 = scmp.ne.s32.totalorder %s86, %s100
      %p102 = scmp.eq.s32.totalorder %s34, 0
      %p103 = por %p101, %p102
      %s105 = sadd.s32 %s104, 1
      %p108 = scmp.eq.s32.totalorder %s28, 1
      %p109 = scmp.ne.s32.totalorder %s104, %s106
      %p110 = scmp.eq.s32.totalorder %s28, 0
      %p111 = por %p109, %p110
      %p112 = scmp.ne.s32.totalorder %s104, %s106
      %p113 = scmp.eq.s32.totalorder %s33, 1
      %p114 = por %p112, %p113
      %p115 = scmp.ne.s32.totalorder %s106, %s107
      %p116 = scmp.eq.s32.totalorder %s33, 0
      %p117 = por %p115, %p116
      %p118 = scmp.ne.s32.totalorder %s106, %s107
      %p119 = scmp.eq.s32.totalorder %s34, 1
      %p120 = por %p118, %p119
      %p122 = scmp.ne.s32.totalorder %s107, %s121
      %p123 = scmp.eq.s32.totalorder %s34, 0
      %p124 = por %p122, %p123
      %s126 = sadd.s32 %s125, 1
      %p129 = scmp.eq.s32.totalorder %s28, 1
      %p130 = scmp.ne.s32.totalorder %s125, %s127
      %p131 = scmp.eq.s32.totalorder %s28, 0
      %p132 = por %p130, %p131
      %p133 = scmp.ne.s32.totalorder %s125, %s127
      %p134 = scmp.eq.s32.totalorder %s33, 1
      %p135 = por %p133, %p134
      %p136 = scmp.ne.s32.totalorder %s127, %s128
      %p137 = scmp.eq.s32.totalorder %s33, 0
      %p138 = por %p136, %p137
      %p139 = scmp.ne.s32.totalorder %s127, %s128
      %p140 = scmp.eq.s32.totalorder %s34, 1
      %p141 = por %p139, %p140
      %p143 = scmp.ne.s32.totalorder %s128, %s142
      %p144 = scmp.eq.s32.totalorder %s34, 0
      %p145 = por %p143, %p144
      %s147 = sadd.s32 %s146, 1
      %p150 = scmp.eq.s32.totalorder %s28, 1
      %p151 = scmp.ne.s32.totalorder %s146, %s148
      %p152 = scmp.eq.s32.totalorder %s28, 0
      %p153 = por %p151, %p152
      %p154 = scmp.ne.s32.totalorder %s146, %s148
      %p155 = scmp.eq.s32.totalorder %s33, 1
      %p156 = por %p154, %p155
      %p157 = scmp.ne.s32.totalorder %s148, %s149
      %p158 = scmp.eq.s32.totalorder %s33, 0
      %p159 = por %p157, %p158
      %p160 = scmp.ne.s32.totalorder %s148, %s149
      %p161 = scmp.eq.s32.totalorder %s34, 1
      %p162 = por %p160, %p161
      %p164 = scmp.ne.s32.totalorder %s149, %s163
      %p165 = scmp.eq.s32.totalorder %s34, 0
      %p166 = por %p164, %p165
      %s168 = sadd.s32 %s167, 1
      %p171 = scmp.eq.s32.totalorder %s28, 1
      %p172 = scmp.ne.s32.totalorder %s167, %s169
      %p173 = scmp.eq.s32.totalorder %s28, 0
      %p174 = por %p172, %p173
      %p175 = scmp.ne.s32.totalorder %s167, %s169
      %p176 = scmp.eq.s32.totalorder %s33, 1
      %p177 = por %p175, %p176
      %p178 = scmp.ne.s32.totalorder %s169, %s170
      %p179 = scmp.eq.s32.totalorder %s33, 0
      %p180 = por %p178, %p179
      %p181 = scmp.ne.s32.totalorder %s169, %s170
      %p182 = scmp.eq.s32.totalorder %s34, 1
      %p183 = por %p181, %p182
      %p185 = scmp.ne.s32.totalorder %s170, %s184
      %p186 = scmp.eq.s32.totalorder %s34, 0
      %p187 = por %p185, %p186
      %s189 = sadd.s32 %s188, 1
      %p192 = scmp.eq.s32.totalorder %s28, 1
      %p193 = scmp.ne.s32.totalorder %s188, %s190
      %p194 = scmp.eq.s32.totalorder %s28, 0
      %p195 = por %p193, %p194
      %p196 = scmp.ne.s32.totalorder %s188, %s190
      %p197 = scmp.eq.s32.totalorder %s33, 1
      %p198 = por %p196, %p197
      %p199 = scmp.ne.s32.totalorder %s190, %s191
      %p200 = scmp.eq.s32.totalorder %s33, 0
      %p201 = por %p199, %p200
      %p202 = scmp.ne.s32.totalorder %s190, %s191
      %p203 = scmp.eq.s32.totalorder %s34, 1
      %p204 = por %p202, %p203
      %p206 = scmp.ne.s32.totalorder %s191, %s205
      %p207 = scmp.eq.s32.totalorder %s34, 0
      %p208 = por %p206, %p207
      %s210 = sadd.s32 %s209, 1
      %p213 = scmp.eq.s32.totalorder %s28, 1
      %p214 = scmp.ne.s32.totalorder %s209, %s211
      %p215 = scmp.eq.s32.totalorder %s28, 0
      %p216 = por %p214, %p215
      %p217 = scmp.ne.s32.totalorder %s209, %s211
      %p218 = scmp.eq.s32.totalorder %s33, 1
      %p219 = por %p217, %p218
      %p220 = scmp.ne.s32.totalorder %s211, %s212
      %p221 = scmp.eq.s32.totalorder %s33, 0
      %p222 = por %p220, %p221
      %p223 = scmp.ne.s32.totalorder %s211, %s212
      %p224 = scmp.eq.s32.totalorder %s34, 1
      %p225 = por %p223, %p224
      %p227 = scmp.ne.s32.totalorder %s212, %s226
      %p228 = scmp.eq.s32.totalorder %s34, 0
      %p229 = por %p227, %p228
      %s231 = sadd.s32 %s230, 1
      %p234 = scmp.eq.s32.totalorder %s28, 1
      %p235 = scmp.ne.s32.totalorder %s230, %s232
      %p236 = scmp.eq.s32.totalorder %s28, 0
      %p237 = por %p235, %p236
      %p238 = scmp.ne.s32.totalorder %s230, %s232
      %p239 = scmp.eq.s32.totalorder %s33, 1
      %p240 = por %p238, %p239
      %p241 = scmp.ne.s32.totalorder %s232, %s233
      %p242 = scmp.eq.s32.totalorder %s33, 0
      %p243 = por %p241, %p242
      %p244 = scmp.ne.s32.totalorder %s232, %s233
      %p245 = scmp.eq.s32.totalorder %s34, 1
      %p246 = por %p244, %p245
      %p248 = scmp.ne.s32.totalorder %s233, %s247
      %p249 = scmp.eq.s32.totalorder %s34, 0
      %p250 = por %p248, %p249
      %s252 = sadd.s32 %s251, 1
      %p255 = scmp.eq.s32.totalorder %s28, 1
      %p256 = scmp.ne.s32.totalorder %s251, %s253
      %p257 = scmp.eq.s32.totalorder %s28, 0
      %p258 = por %p256, %p257
      %p259 = scmp.ne.s32.totalorder %s251, %s253
      %p260 = scmp.eq.s32.totalorder %s33, 1
      %p261 = por %p259, %p260
      %p262 = scmp.ne.s32.totalorder %s253, %s254
      %p263 = scmp.eq.s32.totalorder %s33, 0
      %p264 = por %p262, %p263
      %p265 = scmp.ne.s32.totalorder %s253, %s254
      %p266 = scmp.eq.s32.totalorder %s34, 1
      %p267 = por %p265, %p266
      %p269 = scmp.ne.s32.totalorder %s254, %s268
      %p270 = scmp.eq.s32.totalorder %s34, 0
      %p271 = por %p269, %p270
      %s273 = sadd.s32 %s272, 1
      %p276 = scmp.eq.s32.totalorder %s28, 1
      %p277 = scmp.ne.s32.totalorder %s272, %s274
      %p278 = scmp.eq.s32.totalorder %s28, 0
      %p279 = por %p277, %p278
      %p280 = scmp.ne.s32.totalorder %s272, %s274
      %p281 = scmp.eq.s32.totalorder %s33, 1
      %p282 = por %p280, %p281
      %p283 = scmp.ne.s32.totalorder %s274, %s275
      %p284 = scmp.eq.s32.totalorder %s33, 0
      %p285 = por %p283, %p284
      %p286 = scmp.ne.s32.totalorder %s274, %s275
      %p287 = scmp.eq.s32.totalorder %s34, 1
      %p288 = por %p286, %p287
      %p290 = scmp.ne.s32.totalorder %s275, %s289
      %p291 = scmp.eq.s32.totalorder %s34, 0
      %p292 = por %p290, %p291
      %s294 = sadd.s32 %s293, 1
      %p297 = scmp.eq.s32.totalorder %s28, 1
      %p298 = scmp.ne.s32.totalorder %s293, %s295
      %p299 = scmp.eq.s32.totalorder %s28, 0
      %p300 = por %p298, %p299
      %p301 = scmp.ne.s32.totalorder %s293, %s295
      %p302 = scmp.eq.s32.totalorder %s33, 1
      %p303 = por %p301, %p302
      %p304 = scmp.ne.s32.totalorder %s295, %s296
      %p305 = scmp.eq.s32.totalorder %s33, 0
      %p306 = por %p304, %p305
      %p307 = scmp.ne.s32.totalorder %s295, %s296
      %p308 = scmp.eq.s32.totalorder %s34, 1
      %p309 = por %p307, %p308
      %p311 = scmp.ne.s32.totalorder %s296, %s310
      %p312 = scmp.eq.s32.totalorder %s34, 0
      %p313 = por %p311, %p312
      %s314 = ssub.s32 %s28, %s35
      %p315 = scmp.eq.s32.totalorder %s314, 0
      %s317 = sadd.s32 %s316, 1
      %s318 = scalar_select %p315, %s316, %s317
      %p321 = pneg %p315
      %p322 = scmp.eq.s32.totalorder %s28, 1
      %p323 = por %p321, %p322
      %p324 = scmp.ne.s32.totalorder %s316, %s319
      %p325 = scmp.eq.s32.totalorder %s28, 0
      %p326 = por %p324, %p325
      %p327 = scmp.ne.s32.totalorder %s316, %s319
      %p328 = scmp.eq.s32.totalorder %s33, 1
      %p329 = por %p327, %p328
      %p330 = scmp.ne.s32.totalorder %s319, %s320
      %p331 = scmp.eq.s32.totalorder %s33, 0
      %p332 = por %p330, %p331
      %p333 = scmp.ne.s32.totalorder %s319, %s320
      %p334 = scmp.eq.s32.totalorder %s34, 1
      %p335 = por %p333, %p334
      %p337 = scmp.ne.s32.totalorder %s320, %s336
      %p338 = scmp.eq.s32.totalorder %s34, 0
      %p339 = por %p337, %p338
      %p340 = scmp.le.s32.totalorder 1, %s28
      %p341 = scmp.lt.s32.totalorder %s28, 3
      %p342 = pnand %p340, %p341
      %p343 = pneg %p342
      // Predicated region
      $region9: #{tpu_custom_call.1} parent=5 // pred_check
        _
      $region10: #{tpu_custom_call.1} parent=5 // pred_check_branch
        %345 = sbr.rel (%p342) target = $region12
      $region11: #{tpu_custom_call.1} parent=5 // pred_region
        %s346 = ssub.s32 %s28, 1
        // Predicated region
        $region13: #{tpu_custom_call.1} parent=11 // pred_check
          %p347 = pneg %p75
        $region14: #{tpu_custom_call.1} parent=11 // pred_check_branch
          %349 = sbr.rel (%p347) target = $region16
        $region15: #{tpu_custom_call.1} parent=11 // pred_region
          %s351 = ssub.s32 16, 16
          %352 = vsyncadd [#allocation6], %s351
          %s354 = sshll.u32 [#allocation5], 4
          %s355 = int_to_ptr.vmem [resolvable:$true] %s354
          %357 = dma.hbm_to_vmem [thread:$0]  %s1, 16, %s355, [#allocation6]
        $region16: #{tpu_custom_call.1} parent=11 // pred_fallthru
          _
        // Predicated region
        $region17: #{tpu_custom_call.1} parent=11 // pred_check
          %p358 = pneg %p96
        $region18: #{tpu_custom_call.1} parent=11 // pred_check_branch
          %360 = sbr.rel (%p358) target = $region20
        $region19: #{tpu_custom_call.1} parent=11 // pred_region
          %s362 = ssub.s32 16, 16
          %363 = vsyncadd [#allocation6], %s362
          %s365 = sshll.u32 [#allocation7], 4
          %s366 = int_to_ptr.vmem [resolvable:$true] %s365
          %368 = dma.hbm_to_vmem [thread:$0]  %s2, 16, %s366, [#allocation6]
        $region20: #{tpu_custom_call.1} parent=11 // pred_fallthru
          _
        // Predicated region
        $region21: #{tpu_custom_call.1} parent=11 // pred_check
          %p369 = pneg %p117
        $region22: #{tpu_custom_call.1} parent=11 // pred_check_branch
          %371 = sbr.rel (%p369) target = $region24
        $region23: #{tpu_custom_call.1} parent=11 // pred_region
          %s373 = ssub.s32 6144, 6144
          %374 = vsyncadd [#allocation9], %s373
          %s375 = sshll.u32 [#allocation8], 4
          %s376 = int_to_ptr.vmem [resolvable:$true] %s375
          %381 = dma.hbm_to_vmem [thread:$0]  %s3, 6144, %s376, [#allocation9], 384, 384, 24
        $region24: #{tpu_custom_call.1} parent=11 // pred_fallthru
          _
        // Predicated region
        $region25: #{tpu_custom_call.1} parent=11 // pred_check
          %p382 = pneg %p138
        $region26: #{tpu_custom_call.1} parent=11 // pred_check_branch
          %384 = sbr.rel (%p382) target = $region28
        $region27: #{tpu_custom_call.1} parent=11 // pred_region
          _
        $region28: #{tpu_custom_call.1} parent=11 // pred_fallthru
          _
        // Predicated region
        $region29: #{tpu_custom_call.1} parent=11 // pred_check
          %p385 = pneg %p159
        $region30: #{tpu_custom_call.1} parent=11 // pred_check_branch
          %387 = sbr.rel (%p385) target = $region32
        $region31: #{tpu_custom_call.1} parent=11 // pred_region
          %s389 = ssub.s32 2048, 2048
          %390 = vsyncadd [#allocation9], %s389
          %s391 = sshll.u32 [#allocation10], 4
          %s392 = int_to_ptr.vmem [resolvable:$true] %s391
          %397 = dma.hbm_to_vmem [thread:$0]  %s5, 2048, %s392, [#allocation9], 128, 128, 8
        $region32: #{tpu_custom_call.1} parent=11 // pred_fallthru
          _
        // Predicated region
        $region33: #{tpu_custom_call.1} parent=11 // pred_check
          %p398 = pneg %p180
        $region34: #{tpu_custom_call.1} parent=11 // pred_check_branch
          %400 = sbr.rel (%p398) target = $region36
        $region35: #{tpu_custom_call.1} parent=11 // pred_region
          _
        $region36: #{tpu_custom_call.1} parent=11 // pred_fallthru
          _
        // Predicated region
        $region37: #{tpu_custom_call.1} parent=11 // pred_check
          %p401 = pneg %p201
        $region38: #{tpu_custom_call.1} parent=11 // pred_check_branch
          %403 = sbr.rel (%p401) target = $region40
        $region39: #{tpu_custom_call.1} parent=11 // pred_region
          _
        $region40: #{tpu_custom_call.1} parent=11 // pred_fallthru
          _
        // Predicated region
        $region41: #{tpu_custom_call.1} parent=11 // pred_check
          %p404 = pneg %p222
        $region42: #{tpu_custom_call.1} parent=11 // pred_check_branch
          %406 = sbr.rel (%p404) target = $region44
        $region43: #{tpu_custom_call.1} parent=11 // pred_region
          _
        $region44: #{tpu_custom_call.1} parent=11 // pred_fallthru
          _
        // Predicated region
        $region45: #{tpu_custom_call.1} parent=11 // pred_check
          %p407 = pneg %p243
        $region46: #{tpu_custom_call.1} parent=11 // pred_check_branch
          %409 = sbr.rel (%p407) target = $region48
        $region47: #{tpu_custom_call.1} parent=11 // pred_region
          %s411 = ssub.s32 4096, 4096
          %412 = vsyncadd [#allocation12], %s411
          %s413 = sshll.u32 [#allocation11], 4
          %s414 = int_to_ptr.vmem [resolvable:$true] %s413
          %419 = dma.hbm_to_vmem [thread:$0]  %s9, 4096, %s414, [#allocation12], 256, 256, 16
        $region48: #{tpu_custom_call.1} parent=11 // pred_fallthru
          _
        // Predicated region
        $region49: #{tpu_custom_call.1} parent=11 // pred_check
          %p420 = pneg %p264
        $region50: #{tpu_custom_call.1} parent=11 // pred_check_branch
          %422 = sbr.rel (%p420) target = $region52
        $region51: #{tpu_custom_call.1} parent=11 // pred_region
          _
        $region52: #{tpu_custom_call.1} parent=11 // pred_fallthru
          _
        // Predicated region
        $region53: #{tpu_custom_call.1} parent=11 // pred_check
          %p423 = pneg %p285
        $region54: #{tpu_custom_call.1} parent=11 // pred_check_branch
          %425 = sbr.rel (%p423) target = $region56
        $region55: #{tpu_custom_call.1} parent=11 // pred_region
          %s427 = ssub.s32 4096, 4096
          %428 = vsyncadd [#allocation12], %s427
          %s429 = sshll.u32 [#allocation13], 4
          %s430 = int_to_ptr.vmem [resolvable:$true] %s429
          %435 = dma.hbm_to_vmem [thread:$0]  %s11, 4096, %s430, [#allocation12], 128, 128, 8
        $region56: #{tpu_custom_call.1} parent=11 // pred_fallthru
          _
        // Predicated region
        $region57: #{tpu_custom_call.1} parent=11 // pred_check
          %p436 = pneg %p306
        $region58: #{tpu_custom_call.1} parent=11 // pred_check_branch
          %438 = sbr.rel (%p436) target = $region60
        $region59: #{tpu_custom_call.1} parent=11 // pred_region
          _
        $region60: #{tpu_custom_call.1} parent=11 // pred_fallthru
          _
      $region12: #{tpu_custom_call.1} parent=5 // pred_fallthru
        _
      %p439 = scmp.lt.s32.totalorder %s28, 2
      // Predicated region
      $region61: #{tpu_custom_call.1} parent=5 // pred_check
        %p440 = pneg %p439
      $region62: #{tpu_custom_call.1} parent=5 // pred_check_branch
        %442 = sbr.rel (%p440) target = $region64
      $region63: #{tpu_custom_call.1} parent=5 // pred_region
        // Predicated region
        $region65: #{tpu_custom_call.1} parent=63 // pred_check
          %p443 = pneg %p48
        $region66: #{tpu_custom_call.1} parent=63 // pred_check_branch
          %445 = sbr.rel (%p443) target = $region68
        $region67: #{tpu_custom_call.1} parent=63 // pred_region
          %s446 = sand.u32 %s38, 1
          %s447 = scalar_lea.sflag [#allocation3], %s446
          %s448 = sand.u32 %s38, 1
          %s449 = smul.addr %s448, 8
          %s450 = scalar_lea.vmem [#allocation2], %s449
          %s452 = ssub.s32 128, 128
          %453 = vsyncadd %s447, %s452
          %s454 = smul.addr %s28, 128
          %s455 = scalar_lea.hbm %s0, %s454
          %s457 = sshll.u32 %s450, 4
          %s458 = int_to_ptr.vmem [resolvable:$true] %s457
          %460 = dma.hbm_to_vmem [thread:$0]  %s455, 128, %s458, %s447
        $region68: #{tpu_custom_call.1} parent=63 // pred_fallthru
          _
      $region64: #{tpu_custom_call.1} parent=5 // pred_fallthru
        _
      %p461 = scmp.le.s32.totalorder 1, %s28
      %p462 = scmp.lt.s32.totalorder %s28, 3
      %p463 = pnand %p461, %p462
      %p464 = pneg %p463
      // Predicated region
      $region69: #{tpu_custom_call.1} parent=5 // pred_check
        _
      $region70: #{tpu_custom_call.1} parent=5 // pred_check_branch
        %466 = sbr.rel (%p463) target = $region72
      $region71: #{tpu_custom_call.1} parent=5 // pred_region
        %s467 = ssub.s32 %s28, 1
        %s468 = sand.u32 %s41, 1
        %s469 = scalar_lea.sflag [#allocation3], %s468
        %s470 = sand.u32 %s41, 1
        %s471 = smul.addr %s470, 8
        %s472 = scalar_lea.vmem [#allocation2], %s471
        // Predicated region
        $region73: #{tpu_custom_call.1} parent=71 // pred_check
          %p473 = pneg %p54
        $region74: #{tpu_custom_call.1} parent=71 // pred_check_branch
          %475 = sbr.rel (%p473) target = $region76
        $region75: #{tpu_custom_call.1} parent=71 // pred_region
          %476 = dma.done %s469, 128
        $region76: #{tpu_custom_call.1} parent=71 // pred_fallthru
          _
        // Predicated region
        $region77: #{tpu_custom_call.1} parent=71 // pred_check
          %p477 = pneg %p75
        $region78: #{tpu_custom_call.1} parent=71 // pred_check_branch
          %479 = sbr.rel (%p477) target = $region80
        $region79: #{tpu_custom_call.1} parent=71 // pred_region
          %480 = dma.done [#allocation6], 16
        $region80: #{tpu_custom_call.1} parent=71 // pred_fallthru
          _
        // Predicated region
        $region81: #{tpu_custom_call.1} parent=71 // pred_check
          %p481 = pneg %p96
        $region82: #{tpu_custom_call.1} parent=71 // pred_check_branch
          %483 = sbr.rel (%p481) target = $region84
        $region83: #{tpu_custom_call.1} parent=71 // pred_region
          %484 = dma.done [#allocation6], 16
        $region84: #{tpu_custom_call.1} parent=71 // pred_fallthru
          _
        // Predicated region
        $region85: #{tpu_custom_call.1} parent=71 // pred_check
          %p485 = pneg %p117
        $region86: #{tpu_custom_call.1} parent=71 // pred_check_branch
          %487 = sbr.rel (%p485) target = $region88
        $region87: #{tpu_custom_call.1} parent=71 // pred_region
          %488 = dma.done [#allocation9], 6144
        $region88: #{tpu_custom_call.1} parent=71 // pred_fallthru
          _
        // Predicated region
        $region89: #{tpu_custom_call.1} parent=71 // pred_check
          %p489 = pneg %p159
        $region90: #{tpu_custom_call.1} parent=71 // pred_check_branch
          %491 = sbr.rel (%p489) target = $region92
        $region91: #{tpu_custom_call.1} parent=71 // pred_region
          %492 = dma.done [#allocation9], 2048
        $region92: #{tpu_custom_call.1} parent=71 // pred_fallthru
          _
        // Predicated region
        $region93: #{tpu_custom_call.1} parent=71 // pred_check
          %p493 = pneg %p243
        $region94: #{tpu_custom_call.1} parent=71 // pred_check_branch
          %495 = sbr.rel (%p493) target = $region96
        $region95: #{tpu_custom_call.1} parent=71 // pred_region
          %496 = dma.done [#allocation12], 4096
        $region96: #{tpu_custom_call.1} parent=71 // pred_fallthru
          _
        // Predicated region
        $region97: #{tpu_custom_call.1} parent=71 // pred_check
          %p497 = pneg %p285
        $region98: #{tpu_custom_call.1} parent=71 // pred_check_branch
          %499 = sbr.rel (%p497) target = $region100
        $region99: #{tpu_custom_call.1} parent=71 // pred_region
          %500 = dma.done [#allocation12], 4096
        $region100: #{tpu_custom_call.1} parent=71 // pred_fallthru
          _
        %s501 = sand.u32 %s41, 1
        %s502 = scalar_lea.sflag [#allocation3], %s501
        %s503 = sand.u32 %s41, 1
        %s504 = smul.addr %s503, 8
        %s505 = scalar_lea.vmem [#allocation2], %s504
        %p506 = pneg %p54
        %p507 = pneg %p51
        %p508 = pneg %p75
        %p509 = pneg %p72
        %p510 = pneg %p96
        %p511 = pneg %p93
        %p512 = pneg %p117
        %p513 = pneg %p114
        %p514 = pneg %p138
        %p515 = pneg %p135
        %p516 = pneg %p159
        %p517 = pneg %p156
        %p518 = pneg %p180
        %p519 = pneg %p177
        %p520 = pneg %p201
        %p521 = pneg %p198
        %p522 = pneg %p222
        %p523 = pneg %p219
        %p524 = pneg %p243
        %p525 = pneg %p240
        %p526 = pneg %p264
        %p527 = pneg %p261
        %p528 = pneg %p285
        %p529 = pneg %p282
        %p530 = pneg %p306
        %p531 = pneg %p303
        %p532 = pneg %p332
        %p533 = pneg %p329
        %s534 = sand.u32 %s319, 1
        %s535 = scalar_lea.sflag [#allocation4], %s534
        %s536 = sand.u32 %s319, 1
        %s537 = smul.addr %s536, 8
        %s538 = scalar_lea.vmem [#allocation14], %s537
        %v539 = vld [vmem:[%s472] sm:$0xff]
        %v540 = vld [vmem:[#allocation5] sm:$0x1]
        %v541 = vld [vmem:[#allocation7] sm:$0x1]
        %542 = vadd.xlane.f32.xlu0 %v539
        %v543 = vpop.xlane.xlu0 %542
        %v544 = vrcp.pop 128.0
        %v545 = vmul.f32 %v543, %v544
        %v546 = vsub.f32 %v539, %v545
        %v547 = vmul.f32 %v546, %v546
        %548 = vadd.xlane.f32.xlu0 %v547
        %v549 = vpop.xlane.xlu0 %548
        %v550 = vmul.f32 %v549, %v544
        %v551 = vadd.f32 %v550, 1e-05
        %v552 = vrsqrt.pop %v551
        %v553 = vmul.f32 %v546, %v552
        %v555 = vlaneseq
        %v556 = vshrl.u32 %v555, 7
        %v557 = vsub.s32 0, %v556
        %v558 = vrot.slane %v540, %v557
        %v560 = vmul.f32 %v553, %v558
        %v562 = vlaneseq
        %v563 = vshrl.u32 %v562, 7
        %v564 = vsub.s32 0, %v563
        %v565 = vrot.slane %v541, %v564
        %v567 = vadd.f32 %v560, %v565
        %v568 = vld [vmem:[#allocation8] sm:$0xff]
        %v569 = vld [vmem:[#allocation8 + $0x8] sm:$0xff]
        %v570 = vld [vmem:[#allocation8 + $0x10] sm:$0xff]
        %v571 = vld [vmem:[#allocation8 + $0x18] sm:$0xff]
        %v572 = vld [vmem:[#allocation8 + $0x20] sm:$0xff]
        %v573 = vld [vmem:[#allocation8 + $0x28] sm:$0xff]
        %v574 = vld [vmem:[#allocation8 + $0x30] sm:$0xff]
        %v575 = vld [vmem:[#allocation8 + $0x38] sm:$0xff]
        %v576 = vld [vmem:[#allocation8 + $0x40] sm:$0xff]
        %v577 = vld [vmem:[#allocation8 + $0x48] sm:$0xff]
        %v578 = vld [vmem:[#allocation8 + $0x50] sm:$0xff]
        %v579 = vld [vmem:[#allocation8 + $0x58] sm:$0xff]
        %v580 = vld [vmem:[#allocation8 + $0x60] sm:$0xff]
        %v581 = vld [vmem:[#allocation8 + $0x68] sm:$0xff]
        %v582 = vld [vmem:[#allocation8 + $0x70] sm:$0xff]
        %v583 = vld [vmem:[#allocation8 + $0x78] sm:$0xff]
        %v584 = vld [vmem:[#allocation8 + $0x80] sm:$0xff]
        %v585 = vld [vmem:[#allocation8 + $0x88] sm:$0xff]
        %v586 = vld [vmem:[#allocation8 + $0x90] sm:$0xff]
        %v587 = vld [vmem:[#allocation8 + $0x98] sm:$0xff]
        %v588 = vld [vmem:[#allocation8 + $0xa0] sm:$0xff]
        %v589 = vld [vmem:[#allocation8 + $0xa8] sm:$0xff]
        %v590 = vld [vmem:[#allocation8 + $0xb0] sm:$0xff]
        %v591 = vld [vmem:[#allocation8 + $0xb8] sm:$0xff]
        %v592 = vld [vmem:[#allocation8 + $0xc0] sm:$0xff]
        %v593 = vld [vmem:[#allocation8 + $0xc8] sm:$0xff]
        %v594 = vld [vmem:[#allocation8 + $0xd0] sm:$0xff]
        %v595 = vld [vmem:[#allocation8 + $0xd8] sm:$0xff]
        %v596 = vld [vmem:[#allocation8 + $0xe0] sm:$0xff]
        %v597 = vld [vmem:[#allocation8 + $0xe8] sm:$0xff]
        %v598 = vld [vmem:[#allocation8 + $0xf0] sm:$0xff]
        %v599 = vld [vmem:[#allocation8 + $0xf8] sm:$0xff]
        %v600 = vld [vmem:[#allocation8 + $0x100] sm:$0xff]
        %v601 = vld [vmem:[#allocation8 + $0x108] sm:$0xff]
        %v602 = vld [vmem:[#allocation8 + $0x110] sm:$0xff]
        %v603 = vld [vmem:[#allocation8 + $0x118] sm:$0xff]
        %v604 = vld [vmem:[#allocation8 + $0x120] sm:$0xff]
        %v605 = vld [vmem:[#allocation8 + $0x128] sm:$0xff]
        %v606 = vld [vmem:[#allocation8 + $0x130] sm:$0xff]
        %v607 = vld [vmem:[#allocation8 + $0x138] sm:$0xff]
        %v608 = vld [vmem:[#allocation8 + $0x140] sm:$0xff]
        %v609 = vld [vmem:[#allocation8 + $0x148] sm:$0xff]
        %v610 = vld [vmem:[#allocation8 + $0x150] sm:$0xff]
        %v611 = vld [vmem:[#allocation8 + $0x158] sm:$0xff]
        %v612 = vld [vmem:[#allocation8 + $0x160] sm:$0xff]
        %v613 = vld [vmem:[#allocation8 + $0x168] sm:$0xff]
        %v614 = vld [vmem:[#allocation8 + $0x170] sm:$0xff]
        %v615 = vld [vmem:[#allocation8 + $0x178] sm:$0xff]
        %v616 = vld [vmem:[%s4] sm:$0x7]
        %v618 = vlaneseq
        %v619 = vshrl.u32 %v618, 7
        %v620 = vsub.s32 0, %v619
        %v621 = vrot.slane %v616, %v620
        %v622 = vlaneseq
        %v623 = vshrl.u32 %v622, 7
        %v624 = vsub.s32 1, %v623
        %v625 = vrot.slane %v616, %v624
        %v626 = vlaneseq
        %v627 = vshrl.u32 %v626, 7
        %v628 = vsub.s32 2, %v627
        %v629 = vrot.slane %v616, %v628
        %633 = vmatprep.subr.mxu0 %v614
        %634 = vmatpush1.msra.mxu0 %v613
        %635 = vmatprep.subr.mxu0 %v611
        %636 = vmatpush1.msra.mxu0 %v610
        %637 = vmatprep.subr.mxu0 %v608
        %638 = vmatpush1.msra.mxu0 %v607
        %639 = vmatprep.subr.mxu0 %v605
        %640 = vmatpush1.msra.mxu0 %v604
        %641 = vmatprep.subr.mxu0 %v602
        %642 = vmatpush1.msra.mxu0 %v601
        %643 = vmatprep.subr.mxu0 %v599
        %644 = vmatpush1.msra.mxu0 %v598
        %645 = vmatprep.subr.mxu0 %v596
        %646 = vmatpush1.msra.mxu0 %v595
        %647 = vmatprep.subr.mxu0 %v593
        %648 = vmatpush1.msra.mxu0 %v592
        %649 = vmatprep.subr.mxu0 %v590
        %650 = vmatpush1.msra.mxu0 %v589
        %651 = vmatprep.subr.mxu0 %v587
        %652 = vmatpush1.msra.mxu0 %v586
        %653 = vmatprep.subr.mxu0 %v584
        %654 = vmatpush1.msra.mxu0 %v583
        %655 = vmatprep.subr.mxu0 %v581
        %656 = vmatpush1.msra.mxu0 %v580
        %657 = vmatprep.subr.mxu0 %v578
        %658 = vmatpush1.msra.mxu0 %v577
        %659 = vmatprep.subr.mxu0 %v575
        %660 = vmatpush1.msra.mxu0 %v574
        %661 = vmatprep.subr.mxu0 %v572
        %662 = vmatpush1.msra.mxu0 %v571
        %663 = vmatprep.subr.mxu0 %v569
        %664 = vmatpush1.msra.mxu0 %v568
        %665 = vmatprep.subr.mxu0 0.0
        %666 = vmatpush2.msra.mxu0 0.0
        %667 = vmatprep.subr.mxu0 0.0
        %668 = vmatpush2.msra.mxu0 0.0
        %669 = vmatprep.subr.mxu0 0.0
        %670 = vmatpush2.msra.mxu0 0.0
        %671 = vmatprep.subr.mxu0 0.0
        %672 = vmatpush2.msra.mxu0 0.0
        %673 = vmatprep.subr.mxu0 0.0
        %674 = vmatpush2.msra.mxu0 0.0
        %675 = vmatprep.subr.mxu0 0.0
        %676 = vmatpush2.msra.mxu0 0.0
        %677 = vmatprep.subr.mxu0 0.0
        %678 = vmatpush2.msra.mxu0 0.0
        %679 = vmatprep.subr.mxu0 0.0
        %680 = vmatpush2.msra.mxu0 0.0
        %681 = vmatprep.subr.mxu0 0.0
        %682 = vmatpush2.msra.mxu0 0.0
        %683 = vmatprep.subr.mxu0 0.0
        %684 = vmatpush2.msra.mxu0 0.0
        %685 = vmatprep.subr.mxu0 0.0
        %686 = vmatpush2.msra.mxu0 0.0
        %687 = vmatprep.subr.mxu0 0.0
        %688 = vmatpush2.msra.mxu0 0.0
        %689 = vmatprep.subr.mxu0 0.0
        %690 = vmatpush2.msra.mxu0 0.0
        %691 = vmatprep.subr.mxu0 0.0
        %692 = vmatpush2.msra.mxu0 0.0
        %693 = vmatprep.subr.mxu0 0.0
        %694 = vmatpush2.msra.mxu0 0.0
        %695 = vmatprep.subr.mxu0 0.0
        %696 = vmatpush2.msra.mxu0 0.0
        %697 = vmatprep.mubr.f32.mxu0 0.0
        %698 = vmatmul.mubr.f32.gmra.mxu0 %v567
        %v699 = vpop.f32.mrf.mxu0
        %v700 = vadd.f32 %v621, %v699
        %v701 = vpop.f32.mrf.mxu0
        %v702 = vadd.f32 %v625, %v701
        %703 = vdwg.mxu0
        %704 = vmatprep.subr.mxu0 0.0
        %705 = vmatpush1.msra.mxu0 %v615
        %706 = vmatprep.subr.mxu0 0.0
        %707 = vmatpush1.msra.mxu0 %v612
        %708 = vmatprep.subr.mxu0 0.0
        %709 = vmatpush1.msra.mxu0 %v609
        %710 = vmatprep.subr.mxu0 0.0
        %711 = vmatpush1.msra.mxu0 %v606
        %712 = vmatprep.subr.mxu0 0.0
        %713 = vmatpush1.msra.mxu0 %v603
        %714 = vmatprep.subr.mxu0 0.0
        %715 = vmatpush1.msra.mxu0 %v600
        %716 = vmatprep.subr.mxu0 0.0
        %717 = vmatpush1.msra.mxu0 %v597
        %718 = vmatprep.subr.mxu0 0.0
        %719 = vmatpush1.msra.mxu0 %v594
        %720 = vmatprep.subr.mxu0 0.0
        %721 = vmatpush1.msra.mxu0 %v591
        %722 = vmatprep.subr.mxu0 0.0
        %723 = vmatpush1.msra.mxu0 %v588
        %724 = vmatprep.subr.mxu0 0.0
        %725 = vmatpush1.msra.mxu0 %v585
        %726 = vmatprep.subr.mxu0 0.0
        %727 = vmatpush1.msra.mxu0 %v582
        %728 = vmatprep.subr.mxu0 0.0
        %729 = vmatpush1.msra.mxu0 %v579
        %730 = vmatprep.subr.mxu0 0.0
        %731 = vmatpush1.msra.mxu0 %v576
        %732 = vmatprep.subr.mxu0 0.0
        %733 = vmatpush1.msra.mxu0 %v573
        %734 = vmatprep.subr.mxu0 0.0
        %735 = vmatpush1.msra.mxu0 %v570
        %736 = vmatprep.subr.mxu0 0.0
        %737 = vmatpush2.msra.mxu0 0.0
        %738 = vmatprep.subr.mxu0 0.0
        %739 = vmatpush2.msra.mxu0 0.0
        %740 = vmatprep.subr.mxu0 0.0
        %741 = vmatpush2.msra.mxu0 0.0
        %742 = vmatprep.subr.mxu0 0.0
        %743 = vmatpush2.msra.mxu0 0.0
        %744 = vmatprep.subr.mxu0 0.0
        %745 = vmatpush2.msra.mxu0 0.0
        %746 = vmatprep.subr.mxu0 0.0
        %747 = vmatpush2.msra.mxu0 0.0
        %748 = vmatprep.subr.mxu0 0.0
        %749 = vmatpush2.msra.mxu0 0.0
        %750 = vmatprep.subr.mxu0 0.0
        %751 = vmatpush2.msra.mxu0 0.0
        %752 = vmatprep.subr.mxu0 0.0
        %753 = vmatpush2.msra.mxu0 0.0
        %754 = vmatprep.subr.mxu0 0.0
        %755 = vmatpush2.msra.mxu0 0.0
        %756 = vmatprep.subr.mxu0 0.0
        %757 = vmatpush2.msra.mxu0 0.0
        %758 = vmatprep.subr.mxu0 0.0
        %759 = vmatpush2.msra.mxu0 0.0
        %760 = vmatprep.subr.mxu0 0.0
        %761 = vmatpush2.msra.mxu0 0.0
        %762 = vmatprep.subr.mxu0 0.0
        %763 = vmatpush2.msra.mxu0 0.0
        %764 = vmatprep.subr.mxu0 0.0
        %765 = vmatpush2.msra.mxu0 0.0
        %766 = vmatprep.subr.mxu0 0.0
        %767 = vmatpush2.msra.mxu0 0.0
        %768 = vmatprep.mubr.f32.mxu0 0.0
        %769 = vmatmul.mubr.f32.gmra.mxu0 %v567
        %v770 = vpop.f32.mrf.mxu0
        %v771 = vadd.f32 %v629, %v770
        %v772 = vpop.f32.mrf.mxu0
        %773 = vdwg.mxu0
        %v774 = vmul.f32 %v700, 0.088388346
        %776 = vrot.lane.b32.xlu0 %v774, 112
        %v777 = vpop.permute.xlu0 %776
        %779 = vrot.lane.b32.xlu0 %v774, 96
        %v780 = vpop.permute.xlu0 %779
        %782 = vrot.lane.b32.xlu0 %v774, 80
        %v783 = vpop.permute.xlu0 %782
        %785 = vrot.lane.b32.xlu0 %v774, 64
        %v786 = vpop.permute.xlu0 %785
        %788 = vrot.lane.b32.xlu0 %v774, 48
        %v789 = vpop.permute.xlu0 %788
        %791 = vrot.lane.b32.xlu0 %v774, 32
        %v792 = vpop.permute.xlu0 %791
        %794 = vrot.lane.b32.xlu0 %v774, 16
        %v795 = vpop.permute.xlu0 %794
        %v797 = vcombine.low %v774, %v780
        %v798 = vcombine.high %v774, %v780
        %v800 = vunpack.c.l.s4 1983009808
        %v801 = vunpack.c.0.s8 %v800
        %v802 = vlaneseq
        %v803 = vshrl.u32 %v802, 7
        %v804 = vsub.s32 %v801, %v803
        %v805 = vrot.slane %v797, %v804
        %v807 = vunpack.c.l.s4 1983009808
        %v808 = vunpack.c.0.s8 %v807
        %v809 = vlaneseq
        %v810 = vshrl.u32 %v809, 7
        %v811 = vsub.s32 %v808, %v810
        %v812 = vrot.slane %v798, %v811
        %v813 = vcombine.low %v777, %v783
        %v814 = vcombine.high %v777, %v783
        %v816 = vunpack.c.l.s4 1983009808
        %v817 = vunpack.c.0.s8 %v816
        %v818 = vlaneseq
        %v819 = vshrl.u32 %v818, 7
        %v820 = vsub.s32 %v817, %v819
        %v821 = vrot.slane %v813, %v820
        %v823 = vunpack.c.l.s4 1983009808
        %v824 = vunpack.c.0.s8 %v823
        %v825 = vlaneseq
        %v826 = vshrl.u32 %v825, 7
        %v827 = vsub.s32 %v824, %v826
        %v828 = vrot.slane %v814, %v827
        %v829 = vcombine.low %v786, %v792
        %v830 = vcombine.high %v786, %v792
        %v832 = vunpack.c.l.s4 1983009808
        %v833 = vunpack.c.0.s8 %v832
        %v834 = vlaneseq
        %v835 = vshrl.u32 %v834, 7
        %v836 = vsub.s32 %v833, %v835
        %v837 = vrot.slane %v829, %v836
        %v839 = vunpack.c.l.s4 1983009808
        %v840 = vunpack.c.0.s8 %v839
        %v841 = vlaneseq
        %v842 = vshrl.u32 %v841, 7
        %v843 = vsub.s32 %v840, %v842
        %v844 = vrot.slane %v830, %v843
        %v845 = vcombine.low %v789, %v795
        %v846 = vcombine.high %v789, %v795
        %v848 = vunpack.c.l.s4 1983009808
        %v849 = vunpack.c.0.s8 %v848
        %v850 = vlaneseq
        %v851 = vshrl.u32 %v850, 7
        %v852 = vsub.s32 %v849, %v851
        %v853 = vrot.slane %v845, %v852
        %v855 = vunpack.c.l.s4 1983009808
        %v856 = vunpack.c.0.s8 %v855
        %v857 = vlaneseq
        %v858 = vshrl.u32 %v857, 7
        %v859 = vsub.s32 %v856, %v858
        %v860 = vrot.slane %v846, %v859
        %v861 = vcombine.low %v805, %v821
        %v862 = vcombine.high %v805, %v821
        %v864 = vunpack.c.l.s4 1934713408
        %v865 = vunpack.c.0.s8 %v864
        %v866 = vlaneseq
        %v867 = vshrl.u32 %v866, 7
        %v868 = vsub.s32 %v865, %v867
        %v869 = vrot.slane %v861, %v868
        %v871 = vunpack.c.l.s4 1934713408
        %v872 = vunpack.c.0.s8 %v871
        %v873 = vlaneseq
        %v874 = vshrl.u32 %v873, 7
        %v875 = vsub.s32 %v872, %v874
        %v876 = vrot.slane %v862, %v875
        %v877 = vcombine.low %v812, %v828
        %v878 = vcombine.high %v812, %v828
        %v880 = vunpack.c.l.s4 1934713408
        %v881 = vunpack.c.0.s8 %v880
        %v882 = vlaneseq
        %v883 = vshrl.u32 %v882, 7
        %v884 = vsub.s32 %v881, %v883
        %v885 = vrot.slane %v877, %v884
        %v887 = vunpack.c.l.s4 1934713408
        %v888 = vunpack.c.0.s8 %v887
        %v889 = vlaneseq
        %v890 = vshrl.u32 %v889, 7
        %v891 = vsub.s32 %v888, %v890
        %v892 = vrot.slane %v878, %v891
        %v893 = vcombine.low %v837, %v853
        %v894 = vcombine.high %v837, %v853
        %v896 = vunpack.c.l.s4 1934713408
        %v897 = vunpack.c.0.s8 %v896
        %v898 = vlaneseq
        %v899 = vshrl.u32 %v898, 7
        %v900 = vsub.s32 %v897, %v899
        %v901 = vrot.slane %v893, %v900
        %v903 = vunpack.c.l.s4 1934713408
        %v904 = vunpack.c.0.s8 %v903
        %v905 = vlaneseq
        %v906 = vshrl.u32 %v905, 7
        %v907 = vsub.s32 %v904, %v906
        %v908 = vrot.slane %v894, %v907
        %v909 = vcombine.low %v844, %v860
        %v910 = vcombine.high %v844, %v860
        %v912 = vunpack.c.l.s4 1934713408
        %v913 = vunpack.c.0.s8 %v912
        %v914 = vlaneseq
        %v915 = vshrl.u32 %v914, 7
        %v916 = vsub.s32 %v913, %v915
        %v917 = vrot.slane %v909, %v916
        %v919 = vunpack.c.l.s4 1934713408
        %v920 = vunpack.c.0.s8 %v919
        %v921 = vlaneseq
        %v922 = vshrl.u32 %v921, 7
        %v923 = vsub.s32 %v920, %v922
        %v924 = vrot.slane %v910, %v923
        %v925 = vcombine.low %v869, %v901
        %v926 = vcombine.high %v869, %v901
        %v927 = vcombine.low %v876, %v908
        %v928 = vcombine.high %v876, %v908
        %v929 = vcombine.low %v885, %v917
        %v930 = vcombine.high %v885, %v917
        %v931 = vcombine.low %v892, %v924
        %v932 = vcombine.high %v892, %v924
        %v933 = vcombine.low %v925, %v927
        %v934 = vcombine.high %v925, %v927
        %v936 = vunpack.c.l.s4 1983009808
        %v937 = vunpack.c.0.s8 %v936
        %v938 = vlaneseq
        %v939 = vshrl.u32 %v938, 7
        %v940 = vsub.s32 %v937, %v939
        %v941 = vrot.slane %v933, %v940
        %v943 = vunpack.c.l.s4 1983009808
        %v944 = vunpack.c.0.s8 %v943
        %v945 = vlaneseq
        %v946 = vshrl.u32 %v945, 7
        %v947 = vsub.s32 %v944, %v946
        %v948 = vrot.slane %v934, %v947
        %v949 = vcombine.low %v926, %v928
        %v950 = vcombine.high %v926, %v928
        %v952 = vunpack.c.l.s4 1983009808
        %v953 = vunpack.c.0.s8 %v952
        %v954 = vlaneseq
        %v955 = vshrl.u32 %v954, 7
        %v956 = vsub.s32 %v953, %v955
        %v957 = vrot.slane %v949, %v956
        %v959 = vunpack.c.l.s4 1983009808
        %v960 = vunpack.c.0.s8 %v959
        %v961 = vlaneseq
        %v962 = vshrl.u32 %v961, 7
        %v963 = vsub.s32 %v960, %v962
        %v964 = vrot.slane %v950, %v963
        %v965 = vcombine.low %v929, %v931
        %v966 = vcombine.high %v929, %v931
        %v968 = vunpack.c.l.s4 1983009808
        %v969 = vunpack.c.0.s8 %v968
        %v970 = vlaneseq
        %v971 = vshrl.u32 %v970, 7
        %v972 = vsub.s32 %v969, %v971
        %v973 = vrot.slane %v965, %v972
        %v975 = vunpack.c.l.s4 1983009808
        %v976 = vunpack.c.0.s8 %v975
        %v977 = vlaneseq
        %v978 = vshrl.u32 %v977, 7
        %v979 = vsub.s32 %v976, %v978
        %v980 = vrot.slane %v966, %v979
        %v981 = vcombine.low %v930, %v932
        %v982 = vcombine.high %v930, %v932
        %v984 = vunpack.c.l.s4 1983009808
        %v985 = vunpack.c.0.s8 %v984
        %v986 = vlaneseq
        %v987 = vshrl.u32 %v986, 7
        %v988 = vsub.s32 %v985, %v987
        %v989 = vrot.slane %v981, %v988
        %v991 = vunpack.c.l.s4 1983009808
        %v992 = vunpack.c.0.s8 %v991
        %v993 = vlaneseq
        %v994 = vshrl.u32 %v993, 7
        %v995 = vsub.s32 %v992, %v994
        %v996 = vrot.slane %v982, %v995
        %v997 = vcombine.low %v941, %v957
        %v998 = vcombine.high %v941, %v957
        %v1000 = vunpack.c.l.s4 1934713408
        %v1001 = vunpack.c.0.s8 %v1000
        %v1002 = vlaneseq
        %v1003 = vshrl.u32 %v1002, 7
        %v1004 = vsub.s32 %v1001, %v1003
        %v1005 = vrot.slane %v997, %v1004
        %v1007 = vunpack.c.l.s4 1934713408
        %v1008 = vunpack.c.0.s8 %v1007
        %v1009 = vlaneseq
        %v1010 = vshrl.u32 %v1009, 7
        %v1011 = vsub.s32 %v1008, %v1010
        %v1012 = vrot.slane %v998, %v1011
        %v1013 = vcombine.low %v948, %v964
        %v1014 = vcombine.high %v948, %v964
        %v1016 = vunpack.c.l.s4 1934713408
        %v1017 = vunpack.c.0.s8 %v1016
        %v1018 = vlaneseq
        %v1019 = vshrl.u32 %v1018, 7
        %v1020 = vsub.s32 %v1017, %v1019
        %v1021 = vrot.slane %v1013, %v1020
        %v1023 = vunpack.c.l.s4 1934713408
        %v1024 = vunpack.c.0.s8 %v1023
        %v1025 = vlaneseq
        %v1026 = vshrl.u32 %v1025, 7
        %v1027 = vsub.s32 %v1024, %v1026
        %v1028 = vrot.slane %v1014, %v1027
        %v1029 = vcombine.low %v973, %v989
        %v1030 = vcombine.high %v973, %v989
        %v1032 = vunpack.c.l.s4 1934713408
        %v1033 = vunpack.c.0.s8 %v1032
        %v1034 = vlaneseq
        %v1035 = vshrl.u32 %v1034, 7
        %v1036 = vsub.s32 %v1033, %v1035
        %v1037 = vrot.slane %v1029, %v1036
        %v1039 = vunpack.c.l.s4 1934713408
        %v1040 = vunpack.c.0.s8 %v1039
        %v1041 = vlaneseq
        %v1042 = vshrl.u32 %v1041, 7
        %v1043 = vsub.s32 %v1040, %v1042
        %v1044 = vrot.slane %v1030, %v1043
        %v1045 = vcombine.low %v980, %v996
        %v1046 = vcombine.high %v980, %v996
        %v1048 = vunpack.c.l.s4 1934713408
        %v1049 = vunpack.c.0.s8 %v1048
        %v1050 = vlaneseq
        %v1051 = vshrl.u32 %v1050, 7
        %v1052 = vsub.s32 %v1049, %v1051
        %v1053 = vrot.slane %v1045, %v1052
        %v1055 = vunpack.c.l.s4 1934713408
        %v1056 = vunpack.c.0.s8 %v1055
        %v1057 = vlaneseq
        %v1058 = vshrl.u32 %v1057, 7
        %v1059 = vsub.s32 %v1056, %v1058
        %v1060 = vrot.slane %v1046, %v1059
        %v1061 = vcombine.low %v1005, %v1037
        %v1062 = vcombine.high %v1005, %v1037
        %v1063 = vcombine.low %v1012, %v1044
        %v1064 = vcombine.high %v1012, %v1044
        %v1065 = vcombine.low %v1021, %v1053
        %v1066 = vcombine.high %v1021, %v1053
        %v1067 = vcombine.low %v1028, %v1060
        %v1068 = vcombine.high %v1028, %v1060
        %1070 = vrot.lane.b32.xlu0 %v702, 112
        %v1071 = vpop.permute.xlu0 %1070
        %1073 = vrot.lane.b32.xlu0 %v702, 96
        %v1074 = vpop.permute.xlu0 %1073
        %1076 = vrot.lane.b32.xlu0 %v702, 80
        %v1077 = vpop.permute.xlu0 %1076
        %1079 = vrot.lane.b32.xlu0 %v702, 64
        %v1080 = vpop.permute.xlu0 %1079
        %1082 = vrot.lane.b32.xlu0 %v702, 48
        %v1083 = vpop.permute.xlu0 %1082
        %1085 = vrot.lane.b32.xlu0 %v702, 32
        %v1086 = vpop.permute.xlu0 %1085
        %1088 = vrot.lane.b32.xlu0 %v702, 16
        %v1089 = vpop.permute.xlu0 %1088
        %v1091 = vcombine.low %v702, %v1074
        %v1092 = vcombine.high %v702, %v1074
        %v1094 = vunpack.c.l.s4 1983009808
        %v1095 = vunpack.c.0.s8 %v1094
        %v1096 = vlaneseq
        %v1097 = vshrl.u32 %v1096, 7
        %v1098 = vsub.s32 %v1095, %v1097
        %v1099 = vrot.slane %v1091, %v1098
        %v1101 = vunpack.c.l.s4 1983009808
        %v1102 = vunpack.c.0.s8 %v1101
        %v1103 = vlaneseq
        %v1104 = vshrl.u32 %v1103, 7
        %v1105 = vsub.s32 %v1102, %v1104
        %v1106 = vrot.slane %v1092, %v1105
        %v1107 = vcombine.low %v1071, %v1077
        %v1108 = vcombine.high %v1071, %v1077
        %v1110 = vunpack.c.l.s4 1983009808
        %v1111 = vunpack.c.0.s8 %v1110
        %v1112 = vlaneseq
        %v1113 = vshrl.u32 %v1112, 7
        %v1114 = vsub.s32 %v1111, %v1113
        %v1115 = vrot.slane %v1107, %v1114
        %v1117 = vunpack.c.l.s4 1983009808
        %v1118 = vunpack.c.0.s8 %v1117
        %v1119 = vlaneseq
        %v1120 = vshrl.u32 %v1119, 7
        %v1121 = vsub.s32 %v1118, %v1120
        %v1122 = vrot.slane %v1108, %v1121
        %v1123 = vcombine.low %v1080, %v1086
        %v1124 = vcombine.high %v1080, %v1086
        %v1126 = vunpack.c.l.s4 1983009808
        %v1127 = vunpack.c.0.s8 %v1126
        %v1128 = vlaneseq
        %v1129 = vshrl.u32 %v1128, 7
        %v1130 = vsub.s32 %v1127, %v1129
        %v1131 = vrot.slane %v1123, %v1130
        %v1133 = vunpack.c.l.s4 1983009808
        %v1134 = vunpack.c.0.s8 %v1133
        %v1135 = vlaneseq
        %v1136 = vshrl.u32 %v1135, 7
        %v1137 = vsub.s32 %v1134, %v1136
        %v1138 = vrot.slane %v1124, %v1137
        %v1139 = vcombine.low %v1083, %v1089
        %v1140 = vcombine.high %v1083, %v1089
        %v1142 = vunpack.c.l.s4 1983009808
        %v1143 = vunpack.c.0.s8 %v1142
        %v1144 = vlaneseq
        %v1145 = vshrl.u32 %v1144, 7
        %v1146 = vsub.s32 %v1143, %v1145
        %v1147 = vrot.slane %v1139, %v1146
        %v1149 = vunpack.c.l.s4 1983009808
        %v1150 = vunpack.c.0.s8 %v1149
        %v1151 = vlaneseq
        %v1152 = vshrl.u32 %v1151, 7
        %v1153 = vsub.s32 %v1150, %v1152
        %v1154 = vrot.slane %v1140, %v1153
        %v1155 = vcombine.low %v1099, %v1115
        %v1156 = vcombine.high %v1099, %v1115
        %v1158 = vunpack.c.l.s4 1934713408
        %v1159 = vunpack.c.0.s8 %v1158
        %v1160 = vlaneseq
        %v1161 = vshrl.u32 %v1160, 7
        %v1162 = vsub.s32 %v1159, %v1161
        %v1163 = vrot.slane %v1155, %v1162
        %v1165 = vunpack.c.l.s4 1934713408
        %v1166 = vunpack.c.0.s8 %v1165
        %v1167 = vlaneseq
        %v1168 = vshrl.u32 %v1167, 7
        %v1169 = vsub.s32 %v1166, %v1168
        %v1170 = vrot.slane %v1156, %v1169
        %v1171 = vcombine.low %v1106, %v1122
        %v1172 = vcombine.high %v1106, %v1122
        %v1174 = vunpack.c.l.s4 1934713408
        %v1175 = vunpack.c.0.s8 %v1174
        %v1176 = vlaneseq
        %v1177 = vshrl.u32 %v1176, 7
        %v1178 = vsub.s32 %v1175, %v1177
        %v1179 = vrot.slane %v1171, %v1178
        %v1181 = vunpack.c.l.s4 1934713408
        %v1182 = vunpack.c.0.s8 %v1181
        %v1183 = vlaneseq
        %v1184 = vshrl.u32 %v1183, 7
        %v1185 = vsub.s32 %v1182, %v1184
        %v1186 = vrot.slane %v1172, %v1185
        %v1187 = vcombine.low %v1131, %v1147
        %v1188 = vcombine.high %v1131, %v1147
        %v1190 = vunpack.c.l.s4 1934713408
        %v1191 = vunpack.c.0.s8 %v1190
        %v1192 = vlaneseq
        %v1193 = vshrl.u32 %v1192, 7
        %v1194 = vsub.s32 %v1191, %v1193
        %v1195 = vrot.slane %v1187, %v1194
        %v1197 = vunpack.c.l.s4 1934713408
        %v1198 = vunpack.c.0.s8 %v1197
        %v1199 = vlaneseq
        %v1200 = vshrl.u32 %v1199, 7
        %v1201 = vsub.s32 %v1198, %v1200
        %v1202 = vrot.slane %v1188, %v1201
        %v1203 = vcombine.low %v1138, %v1154
        %v1204 = vcombine.high %v1138, %v1154
        %v1206 = vunpack.c.l.s4 1934713408
        %v1207 = vunpack.c.0.s8 %v1206
        %v1208 = vlaneseq
        %v1209 = vshrl.u32 %v1208, 7
        %v1210 = vsub.s32 %v1207, %v1209
        %v1211 = vrot.slane %v1203, %v1210
        %v1213 = vunpack.c.l.s4 1934713408
        %v1214 = vunpack.c.0.s8 %v1213
        %v1215 = vlaneseq
        %v1216 = vshrl.u32 %v1215, 7
        %v1217 = vsub.s32 %v1214, %v1216
        %v1218 = vrot.slane %v1204, %v1217
        %v1219 = vcombine.low %v1163, %v1195
        %v1220 = vcombine.high %v1163, %v1195
        %v1221 = vcombine.low %v1170, %v1202
        %v1222 = vcombine.high %v1170, %v1202
        %v1223 = vcombine.low %v1179, %v1211
        %v1224 = vcombine.high %v1179, %v1211
        %v1225 = vcombine.low %v1186, %v1218
        %v1226 = vcombine.high %v1186, %v1218
        %v1227 = vcombine.low %v1219, %v1221
        %v1228 = vcombine.high %v1219, %v1221
        %v1230 = vunpack.c.l.s4 1983009808
        %v1231 = vunpack.c.0.s8 %v1230
        %v1232 = vlaneseq
        %v1233 = vshrl.u32 %v1232, 7
        %v1234 = vsub.s32 %v1231, %v1233
        %v1235 = vrot.slane %v1227, %v1234
        %v1237 = vunpack.c.l.s4 1983009808
        %v1238 = vunpack.c.0.s8 %v1237
        %v1239 = vlaneseq
        %v1240 = vshrl.u32 %v1239, 7
        %v1241 = vsub.s32 %v1238, %v1240
        %v1242 = vrot.slane %v1228, %v1241
        %v1243 = vcombine.low %v1220, %v1222
        %v1244 = vcombine.high %v1220, %v1222
        %v1246 = vunpack.c.l.s4 1983009808
        %v1247 = vunpack.c.0.s8 %v1246
        %v1248 = vlaneseq
        %v1249 = vshrl.u32 %v1248, 7
        %v1250 = vsub.s32 %v1247, %v1249
        %v1251 = vrot.slane %v1243, %v1250
        %v1253 = vunpack.c.l.s4 1983009808
        %v1254 = vunpack.c.0.s8 %v1253
        %v1255 = vlaneseq
        %v1256 = vshrl.u32 %v1255, 7
        %v1257 = vsub.s32 %v1254, %v1256
        %v1258 = vrot.slane %v1244, %v1257
        %v1259 = vcombine.low %v1223, %v1225
        %v1260 = vcombine.high %v1223, %v1225
        %v1262 = vunpack.c.l.s4 1983009808
        %v1263 = vunpack.c.0.s8 %v1262
        %v1264 = vlaneseq
        %v1265 = vshrl.u32 %v1264, 7
        %v1266 = vsub.s32 %v1263, %v1265
        %v1267 = vrot.slane %v1259, %v1266
        %v1269 = vunpack.c.l.s4 1983009808
        %v1270 = vunpack.c.0.s8 %v1269
        %v1271 = vlaneseq
        %v1272 = vshrl.u32 %v1271, 7
        %v1273 = vsub.s32 %v1270, %v1272
        %v1274 = vrot.slane %v1260, %v1273
        %v1275 = vcombine.low %v1224, %v1226
        %v1276 = vcombine.high %v1224, %v1226
        %v1278 = vunpack.c.l.s4 1983009808
        %v1279 = vunpack.c.0.s8 %v1278
        %v1280 = vlaneseq
        %v1281 = vshrl.u32 %v1280, 7
        %v1282 = vsub.s32 %v1279, %v1281
        %v1283 = vrot.slane %v1275, %v1282
        %v1285 = vunpack.c.l.s4 1983009808
        %v1286 = vunpack.c.0.s8 %v1285
        %v1287 = vlaneseq
        %v1288 = vshrl.u32 %v1287, 7
        %v1289 = vsub.s32 %v1286, %v1288
        %v1290 = vrot.slane %v1276, %v1289
        %v1291 = vcombine.low %v1235, %v1251
        %v1292 = vcombine.high %v1235, %v1251
        %v1294 = vunpack.c.l.s4 1934713408
        %v1295 = vunpack.c.0.s8 %v1294
        %v1296 = vlaneseq
        %v1297 = vshrl.u32 %v1296, 7
        %v1298 = vsub.s32 %v1295, %v1297
        %v1299 = vrot.slane %v1291, %v1298
        %v1301 = vunpack.c.l.s4 1934713408
        %v1302 = vunpack.c.0.s8 %v1301
        %v1303 = vlaneseq
        %v1304 = vshrl.u32 %v1303, 7
        %v1305 = vsub.s32 %v1302, %v1304
        %v1306 = vrot.slane %v1292, %v1305
        %v1307 = vcombine.low %v1242, %v1258
        %v1308 = vcombine.high %v1242, %v1258
        %v1310 = vunpack.c.l.s4 1934713408
        %v1311 = vunpack.c.0.s8 %v1310
        %v1312 = vlaneseq
        %v1313 = vshrl.u32 %v1312, 7
        %v1314 = vsub.s32 %v1311, %v1313
        %v1315 = vrot.slane %v1307, %v1314
        %v1317 = vunpack.c.l.s4 1934713408
        %v1318 = vunpack.c.0.s8 %v1317
        %v1319 = vlaneseq
        %v1320 = vshrl.u32 %v1319, 7
        %v1321 = vsub.s32 %v1318, %v1320
        %v1322 = vrot.slane %v1308, %v1321
        %v1323 = vcombine.low %v1267, %v1283
        %v1324 = vcombine.high %v1267, %v1283
        %v1326 = vunpack.c.l.s4 1934713408
        %v1327 = vunpack.c.0.s8 %v1326
        %v1328 = vlaneseq
        %v1329 = vshrl.u32 %v1328, 7
        %v1330 = vsub.s32 %v1327, %v1329
        %v1331 = vrot.slane %v1323, %v1330
        %v1333 = vunpack.c.l.s4 1934713408
        %v1334 = vunpack.c.0.s8 %v1333
        %v1335 = vlaneseq
        %v1336 = vshrl.u32 %v1335, 7
        %v1337 = vsub.s32 %v1334, %v1336
        %v1338 = vrot.slane %v1324, %v1337
        %v1339 = vcombine.low %v1274, %v1290
        %v1340 = vcombine.high %v1274, %v1290
        %v1342 = vunpack.c.l.s4 1934713408
        %v1343 = vunpack.c.0.s8 %v1342
        %v1344 = vlaneseq
        %v1345 = vshrl.u32 %v1344, 7
        %v1346 = vsub.s32 %v1343, %v1345
        %v1347 = vrot.slane %v1339, %v1346
        %v1349 = vunpack.c.l.s4 1934713408
        %v1350 = vunpack.c.0.s8 %v1349
        %v1351 = vlaneseq
        %v1352 = vshrl.u32 %v1351, 7
        %v1353 = vsub.s32 %v1350, %v1352
        %v1354 = vrot.slane %v1340, %v1353
        %v1355 = vcombine.low %v1299, %v1331
        %v1356 = vcombine.high %v1299, %v1331
        %v1357 = vcombine.low %v1306, %v1338
        %v1358 = vcombine.high %v1306, %v1338
        %v1359 = vcombine.low %v1315, %v1347
        %v1360 = vcombine.high %v1315, %v1347
        %v1361 = vcombine.low %v1322, %v1354
        %v1362 = vcombine.high %v1322, %v1354
        %1364 = vrot.lane.b32.xlu0 %v771, 112
        %v1365 = vpop.permute.xlu0 %1364
        %1367 = vrot.lane.b32.xlu0 %v771, 96
        %v1368 = vpop.permute.xlu0 %1367
        %1370 = vrot.lane.b32.xlu0 %v771, 80
        %v1371 = vpop.permute.xlu0 %1370
        %1373 = vrot.lane.b32.xlu0 %v771, 64
        %v1374 = vpop.permute.xlu0 %1373
        %1376 = vrot.lane.b32.xlu0 %v771, 48
        %v1377 = vpop.permute.xlu0 %1376
        %1379 = vrot.lane.b32.xlu0 %v771, 32
        %v1380 = vpop.permute.xlu0 %1379
        %1382 = vrot.lane.b32.xlu0 %v771, 16
        %v1383 = vpop.permute.xlu0 %1382
        %v1385 = vcombine.low %v771, %v1368
        %v1386 = vcombine.high %v771, %v1368
        %v1388 = vunpack.c.l.s4 1983009808
        %v1389 = vunpack.c.0.s8 %v1388
        %v1390 = vlaneseq
        %v1391 = vshrl.u32 %v1390, 7
        %v1392 = vsub.s32 %v1389, %v1391
        %v1393 = vrot.slane %v1385, %v1392
        %v1395 = vunpack.c.l.s4 1983009808
        %v1396 = vunpack.c.0.s8 %v1395
        %v1397 = vlaneseq
        %v1398 = vshrl.u32 %v1397, 7
        %v1399 = vsub.s32 %v1396, %v1398
        %v1400 = vrot.slane %v1386, %v1399
        %v1401 = vcombine.low %v1365, %v1371
        %v1402 = vcombine.high %v1365, %v1371
        %v1404 = vunpack.c.l.s4 1983009808
        %v1405 = vunpack.c.0.s8 %v1404
        %v1406 = vlaneseq
        %v1407 = vshrl.u32 %v1406, 7
        %v1408 = vsub.s32 %v1405, %v1407
        %v1409 = vrot.slane %v1401, %v1408
        %v1411 = vunpack.c.l.s4 1983009808
        %v1412 = vunpack.c.0.s8 %v1411
        %v1413 = vlaneseq
        %v1414 = vshrl.u32 %v1413, 7
        %v1415 = vsub.s32 %v1412, %v1414
        %v1416 = vrot.slane %v1402, %v1415
        %v1417 = vcombine.low %v1374, %v1380
        %v1418 = vcombine.high %v1374, %v1380
        %v1420 = vunpack.c.l.s4 1983009808
        %v1421 = vunpack.c.0.s8 %v1420
        %v1422 = vlaneseq
        %v1423 = vshrl.u32 %v1422, 7
        %v1424 = vsub.s32 %v1421, %v1423
        %v1425 = vrot.slane %v1417, %v1424
        %v1427 = vunpack.c.l.s4 1983009808
        %v1428 = vunpack.c.0.s8 %v1427
        %v1429 = vlaneseq
        %v1430 = vshrl.u32 %v1429, 7
        %v1431 = vsub.s32 %v1428, %v1430
        %v1432 = vrot.slane %v1418, %v1431
        %v1433 = vcombine.low %v1377, %v1383
        %v1434 = vcombine.high %v1377, %v1383
        %v1436 = vunpack.c.l.s4 1983009808
        %v1437 = vunpack.c.0.s8 %v1436
        %v1438 = vlaneseq
        %v1439 = vshrl.u32 %v1438, 7
        %v1440 = vsub.s32 %v1437, %v1439
        %v1441 = vrot.slane %v1433, %v1440
        %v1443 = vunpack.c.l.s4 1983009808
        %v1444 = vunpack.c.0.s8 %v1443
        %v1445 = vlaneseq
        %v1446 = vshrl.u32 %v1445, 7
        %v1447 = vsub.s32 %v1444, %v1446
        %v1448 = vrot.slane %v1434, %v1447
        %v1449 = vcombine.low %v1393, %v1409
        %v1450 = vcombine.high %v1393, %v1409
        %v1452 = vunpack.c.l.s4 1934713408
        %v1453 = vunpack.c.0.s8 %v1452
        %v1454 = vlaneseq
        %v1455 = vshrl.u32 %v1454, 7
        %v1456 = vsub.s32 %v1453, %v1455
        %v1457 = vrot.slane %v1449, %v1456
        %v1459 = vunpack.c.l.s4 1934713408
        %v1460 = vunpack.c.0.s8 %v1459
        %v1461 = vlaneseq
        %v1462 = vshrl.u32 %v1461, 7
        %v1463 = vsub.s32 %v1460, %v1462
        %v1464 = vrot.slane %v1450, %v1463
        %v1465 = vcombine.low %v1400, %v1416
        %v1466 = vcombine.high %v1400, %v1416
        %v1468 = vunpack.c.l.s4 1934713408
        %v1469 = vunpack.c.0.s8 %v1468
        %v1470 = vlaneseq
        %v1471 = vshrl.u32 %v1470, 7
        %v1472 = vsub.s32 %v1469, %v1471
        %v1473 = vrot.slane %v1465, %v1472
        %v1475 = vunpack.c.l.s4 1934713408
        %v1476 = vunpack.c.0.s8 %v1475
        %v1477 = vlaneseq
        %v1478 = vshrl.u32 %v1477, 7
        %v1479 = vsub.s32 %v1476, %v1478
        %v1480 = vrot.slane %v1466, %v1479
        %v1481 = vcombine.low %v1425, %v1441
        %v1482 = vcombine.high %v1425, %v1441
        %v1484 = vunpack.c.l.s4 1934713408
        %v1485 = vunpack.c.0.s8 %v1484
        %v1486 = vlaneseq
        %v1487 = vshrl.u32 %v1486, 7
        %v1488 = vsub.s32 %v1485, %v1487
        %v1489 = vrot.slane %v1481, %v1488
        %v1491 = vunpack.c.l.s4 1934713408
        %v1492 = vunpack.c.0.s8 %v1491
        %v1493 = vlaneseq
        %v1494 = vshrl.u32 %v1493, 7
        %v1495 = vsub.s32 %v1492, %v1494
        %v1496 = vrot.slane %v1482, %v1495
        %v1497 = vcombine.low %v1432, %v1448
        %v1498 = vcombine.high %v1432, %v1448
        %v1500 = vunpack.c.l.s4 1934713408
        %v1501 = vunpack.c.0.s8 %v1500
        %v1502 = vlaneseq
        %v1503 = vshrl.u32 %v1502, 7
        %v1504 = vsub.s32 %v1501, %v1503
        %v1505 = vrot.slane %v1497, %v1504
        %v1507 = vunpack.c.l.s4 1934713408
        %v1508 = vunpack.c.0.s8 %v1507
        %v1509 = vlaneseq
        %v1510 = vshrl.u32 %v1509, 7
        %v1511 = vsub.s32 %v1508, %v1510
        %v1512 = vrot.slane %v1498, %v1511
        %v1513 = vcombine.low %v1457, %v1489
        %v1514 = vcombine.high %v1457, %v1489
        %v1515 = vcombine.low %v1464, %v1496
        %v1516 = vcombine.high %v1464, %v1496
        %v1517 = vcombine.low %v1473, %v1505
        %v1518 = vcombine.high %v1473, %v1505
        %v1519 = vcombine.low %v1480, %v1512
        %v1520 = vcombine.high %v1480, %v1512
        %v1521 = vcombine.low %v1513, %v1515
        %v1522 = vcombine.high %v1513, %v1515
        %v1524 = vunpack.c.l.s4 1983009808
        %v1525 = vunpack.c.0.s8 %v1524
        %v1526 = vlaneseq
        %v1527 = vshrl.u32 %v1526, 7
        %v1528 = vsub.s32 %v1525, %v1527
        %v1529 = vrot.slane %v1521, %v1528
        %v1531 = vunpack.c.l.s4 1983009808
        %v1532 = vunpack.c.0.s8 %v1531
        %v1533 = vlaneseq
        %v1534 = vshrl.u32 %v1533, 7
        %v1535 = vsub.s32 %v1532, %v1534
        %v1536 = vrot.slane %v1522, %v1535
        %v1537 = vcombine.low %v1514, %v1516
        %v1538 = vcombine.high %v1514, %v1516
        %v1540 = vunpack.c.l.s4 1983009808
        %v1541 = vunpack.c.0.s8 %v1540
        %v1542 = vlaneseq
        %v1543 = vshrl.u32 %v1542, 7
        %v1544 = vsub.s32 %v1541, %v1543
        %v1545 = vrot.slane %v1537, %v1544
        %v1547 = vunpack.c.l.s4 1983009808
        %v1548 = vunpack.c.0.s8 %v1547
        %v1549 = vlaneseq
        %v1550 = vshrl.u32 %v1549, 7
        %v1551 = vsub.s32 %v1548, %v1550
        %v1552 = vrot.slane %v1538, %v1551
        %v1553 = vcombine.low %v1517, %v1519
        %v1554 = vcombine.high %v1517, %v1519
        %v1556 = vunpack.c.l.s4 1983009808
        %v1557 = vunpack.c.0.s8 %v1556
        %v1558 = vlaneseq
        %v1559 = vshrl.u32 %v1558, 7
        %v1560 = vsub.s32 %v1557, %v1559
        %v1561 = vrot.slane %v1553, %v1560
        %v1563 = vunpack.c.l.s4 1983009808
        %v1564 = vunpack.c.0.s8 %v1563
        %v1565 = vlaneseq
        %v1566 = vshrl.u32 %v1565, 7
        %v1567 = vsub.s32 %v1564, %v1566
        %v1568 = vrot.slane %v1554, %v1567
        %v1569 = vcombine.low %v1518, %v1520
        %v1570 = vcombine.high %v1518, %v1520
        %v1572 = vunpack.c.l.s4 1983009808
        %v1573 = vunpack.c.0.s8 %v1572
        %v1574 = vlaneseq
        %v1575 = vshrl.u32 %v1574, 7
        %v1576 = vsub.s32 %v1573, %v1575
        %v1577 = vrot.slane %v1569, %v1576
        %v1579 = vunpack.c.l.s4 1983009808
        %v1580 = vunpack.c.0.s8 %v1579
        %v1581 = vlaneseq
        %v1582 = vshrl.u32 %v1581, 7
        %v1583 = vsub.s32 %v1580, %v1582
        %v1584 = vrot.slane %v1570, %v1583
        %v1585 = vcombine.low %v1529, %v1545
        %v1586 = vcombine.high %v1529, %v1545
        %v1588 = vunpack.c.l.s4 1934713408
        %v1589 = vunpack.c.0.s8 %v1588
        %v1590 = vlaneseq
        %v1591 = vshrl.u32 %v1590, 7
        %v1592 = vsub.s32 %v1589, %v1591
        %v1593 = vrot.slane %v1585, %v1592
        %v1595 = vunpack.c.l.s4 1934713408
        %v1596 = vunpack.c.0.s8 %v1595
        %v1597 = vlaneseq
        %v1598 = vshrl.u32 %v1597, 7
        %v1599 = vsub.s32 %v1596, %v1598
        %v1600 = vrot.slane %v1586, %v1599
        %v1601 = vcombine.low %v1536, %v1552
        %v1602 = vcombine.high %v1536, %v1552
        %v1604 = vunpack.c.l.s4 1934713408
        %v1605 = vunpack.c.0.s8 %v1604
        %v1606 = vlaneseq
        %v1607 = vshrl.u32 %v1606, 7
        %v1608 = vsub.s32 %v1605, %v1607
        %v1609 = vrot.slane %v1601, %v1608
        %v1611 = vunpack.c.l.s4 1934713408
        %v1612 = vunpack.c.0.s8 %v1611
        %v1613 = vlaneseq
        %v1614 = vshrl.u32 %v1613, 7
        %v1615 = vsub.s32 %v1612, %v1614
        %v1616 = vrot.slane %v1602, %v1615
        %v1617 = vcombine.low %v1561, %v1577
        %v1618 = vcombine.high %v1561, %v1577
        %v1620 = vunpack.c.l.s4 1934713408
        %v1621 = vunpack.c.0.s8 %v1620
        %v1622 = vlaneseq
        %v1623 = vshrl.u32 %v1622, 7
        %v1624 = vsub.s32 %v1621, %v1623
        %v1625 = vrot.slane %v1617, %v1624
        %v1627 = vunpack.c.l.s4 1934713408
        %v1628 = vunpack.c.0.s8 %v1627
        %v1629 = vlaneseq
        %v1630 = vshrl.u32 %v1629, 7
        %v1631 = vsub.s32 %v1628, %v1630
        %v1632 = vrot.slane %v1618, %v1631
        %v1633 = vcombine.low %v1568, %v1584
        %v1634 = vcombine.high %v1568, %v1584
        %v1636 = vunpack.c.l.s4 1934713408
        %v1637 = vunpack.c.0.s8 %v1636
        %v1638 = vlaneseq
        %v1639 = vshrl.u32 %v1638, 7
        %v1640 = vsub.s32 %v1637, %v1639
        %v1641 = vrot.slane %v1633, %v1640
        %v1643 = vunpack.c.l.s4 1934713408
        %v1644 = vunpack.c.0.s8 %v1643
        %v1645 = vlaneseq
        %v1646 = vshrl.u32 %v1645, 7
        %v1647 = vsub.s32 %v1644, %v1646
        %v1648 = vrot.slane %v1634, %v1647
        %v1649 = vcombine.low %v1593, %v1625
        %v1650 = vcombine.high %v1593, %v1625
        %v1651 = vcombine.low %v1600, %v1632
        %v1652 = vcombine.high %v1600, %v1632
        %v1653 = vcombine.low %v1609, %v1641
        %v1654 = vcombine.high %v1609, %v1641
        %v1655 = vcombine.low %v1616, %v1648
        %v1656 = vcombine.high %v1616, %v1648
        %vm1657 = vcmask 130048
        %v1659 = vsel %vm1657, %v1061, 0
        %v1662 = vsel %vm1657, %v1355, 0
        %1664 = vmatprep.subr.mxu0 0.0
        %1665 = vmatpush1.xpose.msra.mxu0 0.0
        %1666 = vmatprep.subr.mxu0 0.0
        %1667 = vmatpush1.xpose.msra.mxu0 0.0
        %1668 = vmatprep.subr.mxu0 0.0
        %1669 = vmatpush1.xpose.msra.mxu0 0.0
        %1670 = vmatprep.subr.mxu0 0.0
        %1671 = vmatpush1.xpose.msra.mxu0 0.0
        %1672 = vmatprep.subr.mxu0 0.0
        %1673 = vmatpush1.xpose.msra.mxu0 0.0
        %1674 = vmatprep.subr.mxu0 0.0
        %1675 = vmatpush1.xpose.msra.mxu0 0.0
        %1676 = vmatprep.subr.mxu0 0.0
        %1677 = vmatpush1.xpose.msra.mxu0 0.0
        %1678 = vmatprep.subr.mxu0 0.0
        %1679 = vmatpush1.xpose.msra.mxu0 0.0
        %1680 = vmatprep.subr.mxu0 0.0
        %1681 = vmatpush1.xpose.msra.mxu0 0.0
        %1682 = vmatprep.subr.mxu0 0.0
        %1683 = vmatpush1.xpose.msra.mxu0 0.0
        %1684 = vmatprep.subr.mxu0 0.0
        %1685 = vmatpush1.xpose.msra.mxu0 0.0
        %1686 = vmatprep.subr.mxu0 0.0
        %1687 = vmatpush1.xpose.msra.mxu0 0.0
        %1688 = vmatprep.subr.mxu0 0.0
        %1689 = vmatpush1.xpose.msra.mxu0 0.0
        %1690 = vmatprep.subr.mxu0 0.0
        %1691 = vmatpush1.xpose.msra.mxu0 0.0
        %1692 = vmatprep.subr.mxu0 0.0
        %1693 = vmatpush1.xpose.msra.mxu0 0.0
        %1694 = vmatprep.subr.mxu0 0.0
        %1695 = vmatpush1.xpose.msra.mxu0 %v1662
        %1696 = vmatprep.subr.mxu0 0.0
        %1697 = vmatpush2.xpose.msra.mxu0 0.0
        %1698 = vmatprep.subr.mxu0 0.0
        %1699 = vmatpush2.xpose.msra.mxu0 0.0
        %1700 = vmatprep.subr.mxu0 0.0
        %1701 = vmatpush2.xpose.msra.mxu0 0.0
        %1702 = vmatprep.subr.mxu0 0.0
        %1703 = vmatpush2.xpose.msra.mxu0 0.0
        %1704 = vmatprep.subr.mxu0 0.0
        %1705 = vmatpush2.xpose.msra.mxu0 0.0
        %1706 = vmatprep.subr.mxu0 0.0
        %1707 = vmatpush2.xpose.msra.mxu0 0.0
        %1708 = vmatprep.subr.mxu0 0.0
        %1709 = vmatpush2.xpose.msra.mxu0 0.0
        %1710 = vmatprep.subr.mxu0 0.0
        %1711 = vmatpush2.xpose.msra.mxu0 0.0
        %1712 = vmatprep.subr.mxu0 0.0
        %1713 = vmatpush2.xpose.msra.mxu0 0.0
        %1714 = vmatprep.subr.mxu0 0.0
        %1715 = vmatpush2.xpose.msra.mxu0 0.0
        %1716 = vmatprep.subr.mxu0 0.0
        %1717 = vmatpush2.xpose.msra.mxu0 0.0
        %1718 = vmatprep.subr.mxu0 0.0
        %1719 = vmatpush2.xpose.msra.mxu0 0.0
        %1720 = vmatprep.subr.mxu0 0.0
        %1721 = vmatpush2.xpose.msra.mxu0 0.0
        %1722 = vmatprep.subr.mxu0 0.0
        %1723 = vmatpush2.xpose.msra.mxu0 0.0
        %1724 = vmatprep.subr.mxu0 0.0
        %1725 = vmatpush2.xpose.msra.mxu0 0.0
        %1726 = vmatprep.subr.mxu0 0.0
        %1727 = vmatpush2.xpose.msra.mxu0 0.0
        %1728 = vmatprep.mubr.f32.mxu0 0.0
        %1729 = vmatmul.mubr.f32.gmra.mxu0 %v1659
        %v1730 = vpop.f32.mrf.mxu0
        %v1731 = vadd.f32 0.0, %v1730
        %v1732 = vpop.f32.mrf.mxu0
        %1733 = vdwg.mxu0
        %v1735 = vsel %vm1657, %v1062, 0
        %v1738 = vsel %vm1657, %v1356, 0
        %1740 = vmatprep.subr.mxu0 0.0
        %1741 = vmatpush1.xpose.msra.mxu0 0.0
        %1742 = vmatprep.subr.mxu0 0.0
        %1743 = vmatpush1.xpose.msra.mxu0 0.0
        %1744 = vmatprep.subr.mxu0 0.0
        %1745 = vmatpush1.xpose.msra.mxu0 0.0
        %1746 = vmatprep.subr.mxu0 0.0
        %1747 = vmatpush1.xpose.msra.mxu0 0.0
        %1748 = vmatprep.subr.mxu0 0.0
        %1749 = vmatpush1.xpose.msra.mxu0 0.0
        %1750 = vmatprep.subr.mxu0 0.0
        %1751 = vmatpush1.xpose.msra.mxu0 0.0
        %1752 = vmatprep.subr.mxu0 0.0
        %1753 = vmatpush1.xpose.msra.mxu0 0.0
        %1754 = vmatprep.subr.mxu0 0.0
        %1755 = vmatpush1.xpose.msra.mxu0 0.0
        %1756 = vmatprep.subr.mxu0 0.0
        %1757 = vmatpush1.xpose.msra.mxu0 0.0
        %1758 = vmatprep.subr.mxu0 0.0
        %1759 = vmatpush1.xpose.msra.mxu0 0.0
        %1760 = vmatprep.subr.mxu0 0.0
        %1761 = vmatpush1.xpose.msra.mxu0 0.0
        %1762 = vmatprep.subr.mxu0 0.0
        %1763 = vmatpush1.xpose.msra.mxu0 0.0
        %1764 = vmatprep.subr.mxu0 0.0
        %1765 = vmatpush1.xpose.msra.mxu0 0.0
        %1766 = vmatprep.subr.mxu0 0.0
        %1767 = vmatpush1.xpose.msra.mxu0 0.0
        %1768 = vmatprep.subr.mxu0 0.0
        %1769 = vmatpush1.xpose.msra.mxu0 0.0
        %1770 = vmatprep.subr.mxu0 0.0
        %1771 = vmatpush1.xpose.msra.mxu0 %v1738
        %1772 = vmatprep.subr.mxu0 0.0
        %1773 = vmatpush2.xpose.msra.mxu0 0.0
        %1774 = vmatprep.subr.mxu0 0.0
        %1775 = vmatpush2.xpose.msra.mxu0 0.0
        %1776 = vmatprep.subr.mxu0 0.0
        %1777 = vmatpush2.xpose.msra.mxu0 0.0
        %1778 = vmatprep.subr.mxu0 0.0
        %1779 = vmatpush2.xpose.msra.mxu0 0.0
        %1780 = vmatprep.subr.mxu0 0.0
        %1781 = vmatpush2.xpose.msra.mxu0 0.0
        %1782 = vmatprep.subr.mxu0 0.0
        %1783 = vmatpush2.xpose.msra.mxu0 0.0
        %1784 = vmatprep.subr.mxu0 0.0
        %1785 = vmatpush2.xpose.msra.mxu0 0.0
        %1786 = vmatprep.subr.mxu0 0.0
        %1787 = vmatpush2.xpose.msra.mxu0 0.0
        %1788 = vmatprep.subr.mxu0 0.0
        %1789 = vmatpush2.xpose.msra.mxu0 0.0
        %1790 = vmatprep.subr.mxu0 0.0
        %1791 = vmatpush2.xpose.msra.mxu0 0.0
        %1792 = vmatprep.subr.mxu0 0.0
        %1793 = vmatpush2.xpose.msra.mxu0 0.0
        %1794 = vmatprep.subr.mxu0 0.0
        %1795 = vmatpush2.xpose.msra.mxu0 0.0
        %1796 = vmatprep.subr.mxu0 0.0
        %1797 = vmatpush2.xpose.msra.mxu0 0.0
        %1798 = vmatprep.subr.mxu0 0.0
        %1799 = vmatpush2.xpose.msra.mxu0 0.0
        %1800 = vmatprep.subr.mxu0 0.0
        %1801 = vmatpush2.xpose.msra.mxu0 0.0
        %1802 = vmatprep.subr.mxu0 0.0
        %1803 = vmatpush2.xpose.msra.mxu0 0.0
        %1804 = vmatprep.mubr.f32.mxu0 0.0
        %1805 = vmatmul.mubr.f32.gmra.mxu0 %v1735
        %v1806 = vpop.f32.mrf.mxu0
        %v1807 = vadd.f32 0.0, %v1806
        %v1808 = vpop.f32.mrf.mxu0
        %1809 = vdwg.mxu0
        %v1811 = vsel %vm1657, %v1063, 0
        %v1814 = vsel %vm1657, %v1357, 0
        %1816 = vmatprep.subr.mxu0 0.0
        %1817 = vmatpush1.xpose.msra.mxu0 0.0
        %1818 = vmatprep.subr.mxu0 0.0
        %1819 = vmatpush1.xpose.msra.mxu0 0.0
        %1820 = vmatprep.subr.mxu0 0.0
        %1821 = vmatpush1.xpose.msra.mxu0 0.0
        %1822 = vmatprep.subr.mxu0 0.0
        %1823 = vmatpush1.xpose.msra.mxu0 0.0
        %1824 = vmatprep.subr.mxu0 0.0
        %1825 = vmatpush1.xpose.msra.mxu0 0.0
        %1826 = vmatprep.subr.mxu0 0.0
        %1827 = vmatpush1.xpose.msra.mxu0 0.0
        %1828 = vmatprep.subr.mxu0 0.0
        %1829 = vmatpush1.xpose.msra.mxu0 0.0
        %1830 = vmatprep.subr.mxu0 0.0
        %1831 = vmatpush1.xpose.msra.mxu0 0.0
        %1832 = vmatprep.subr.mxu0 0.0
        %1833 = vmatpush1.xpose.msra.mxu0 0.0
        %1834 = vmatprep.subr.mxu0 0.0
        %1835 = vmatpush1.xpose.msra.mxu0 0.0
        %1836 = vmatprep.subr.mxu0 0.0
        %1837 = vmatpush1.xpose.msra.mxu0 0.0
        %1838 = vmatprep.subr.mxu0 0.0
        %1839 = vmatpush1.xpose.msra.mxu0 0.0
        %1840 = vmatprep.subr.mxu0 0.0
        %1841 = vmatpush1.xpose.msra.mxu0 0.0
        %1842 = vmatprep.subr.mxu0 0.0
        %1843 = vmatpush1.xpose.msra.mxu0 0.0
        %1844 = vmatprep.subr.mxu0 0.0
        %1845 = vmatpush1.xpose.msra.mxu0 0.0
        %1846 = vmatprep.subr.mxu0 0.0
        %1847 = vmatpush1.xpose.msra.mxu0 %v1814
        %1848 = vmatprep.subr.mxu0 0.0
        %1849 = vmatpush2.xpose.msra.mxu0 0.0
        %1850 = vmatprep.subr.mxu0 0.0
        %1851 = vmatpush2.xpose.msra.mxu0 0.0
        %1852 = vmatprep.subr.mxu0 0.0
        %1853 = vmatpush2.xpose.msra.mxu0 0.0
        %1854 = vmatprep.subr.mxu0 0.0
        %1855 = vmatpush2.xpose.msra.mxu0 0.0
        %1856 = vmatprep.subr.mxu0 0.0
        %1857 = vmatpush2.xpose.msra.mxu0 0.0
        %1858 = vmatprep.subr.mxu0 0.0
        %1859 = vmatpush2.xpose.msra.mxu0 0.0
        %1860 = vmatprep.subr.mxu0 0.0
        %1861 = vmatpush2.xpose.msra.mxu0 0.0
        %1862 = vmatprep.subr.mxu0 0.0
        %1863 = vmatpush2.xpose.msra.mxu0 0.0
        %1864 = vmatprep.subr.mxu0 0.0
        %1865 = vmatpush2.xpose.msra.mxu0 0.0
        %1866 = vmatprep.subr.mxu0 0.0
        %1867 = vmatpush2.xpose.msra.mxu0 0.0
        %1868 = vmatprep.subr.mxu0 0.0
        %1869 = vmatpush2.xpose.msra.mxu0 0.0
        %1870 = vmatprep.subr.mxu0 0.0
        %1871 = vmatpush2.xpose.msra.mxu0 0.0
        %1872 = vmatprep.subr.mxu0 0.0
        %1873 = vmatpush2.xpose.msra.mxu0 0.0
        %1874 = vmatprep.subr.mxu0 0.0
        %1875 = vmatpush2.xpose.msra.mxu0 0.0
        %1876 = vmatprep.subr.mxu0 0.0
        %1877 = vmatpush2.xpose.msra.mxu0 0.0
        %1878 = vmatprep.subr.mxu0 0.0
        %1879 = vmatpush2.xpose.msra.mxu0 0.0
        %1880 = vmatprep.mubr.f32.mxu0 0.0
        %1881 = vmatmul.mubr.f32.gmra.mxu0 %v1811
        %v1882 = vpop.f32.mrf.mxu0
        %v1883 = vadd.f32 0.0, %v1882
        %v1884 = vpop.f32.mrf.mxu0
        %1885 = vdwg.mxu0
        %v1887 = vsel %vm1657, %v1064, 0
        %v1890 = vsel %vm1657, %v1358, 0
        %1892 = vmatprep.subr.mxu0 0.0
        %1893 = vmatpush1.xpose.msra.mxu0 0.0
        %1894 = vmatprep.subr.mxu0 0.0
        %1895 = vmatpush1.xpose.msra.mxu0 0.0
        %1896 = vmatprep.subr.mxu0 0.0
        %1897 = vmatpush1.xpose.msra.mxu0 0.0
        %1898 = vmatprep.subr.mxu0 0.0
        %1899 = vmatpush1.xpose.msra.mxu0 0.0
        %1900 = vmatprep.subr.mxu0 0.0
        %1901 = vmatpush1.xpose.msra.mxu0 0.0
        %1902 = vmatprep.subr.mxu0 0.0
        %1903 = vmatpush1.xpose.msra.mxu0 0.0
        %1904 = vmatprep.subr.mxu0 0.0
        %1905 = vmatpush1.xpose.msra.mxu0 0.0
        %1906 = vmatprep.subr.mxu0 0.0
        %1907 = vmatpush1.xpose.msra.mxu0 0.0
        %1908 = vmatprep.subr.mxu0 0.0
        %1909 = vmatpush1.xpose.msra.mxu0 0.0
        %1910 = vmatprep.subr.mxu0 0.0
        %1911 = vmatpush1.xpose.msra.mxu0 0.0
        %1912 = vmatprep.subr.mxu0 0.0
        %1913 = vmatpush1.xpose.msra.mxu0 0.0
        %1914 = vmatprep.subr.mxu0 0.0
        %1915 = vmatpush1.xpose.msra.mxu0 0.0
        %1916 = vmatprep.subr.mxu0 0.0
        %1917 = vmatpush1.xpose.msra.mxu0 0.0
        %1918 = vmatprep.subr.mxu0 0.0
        %1919 = vmatpush1.xpose.msra.mxu0 0.0
        %1920 = vmatprep.subr.mxu0 0.0
        %1921 = vmatpush1.xpose.msra.mxu0 0.0
        %1922 = vmatprep.subr.mxu0 0.0
        %1923 = vmatpush1.xpose.msra.mxu0 %v1890
        %1924 = vmatprep.subr.mxu0 0.0
        %1925 = vmatpush2.xpose.msra.mxu0 0.0
        %1926 = vmatprep.subr.mxu0 0.0
        %1927 = vmatpush2.xpose.msra.mxu0 0.0
        %1928 = vmatprep.subr.mxu0 0.0
        %1929 = vmatpush2.xpose.msra.mxu0 0.0
        %1930 = vmatprep.subr.mxu0 0.0
        %1931 = vmatpush2.xpose.msra.mxu0 0.0
        %1932 = vmatprep.subr.mxu0 0.0
        %1933 = vmatpush2.xpose.msra.mxu0 0.0
        %1934 = vmatprep.subr.mxu0 0.0
        %1935 = vmatpush2.xpose.msra.mxu0 0.0
        %1936 = vmatprep.subr.mxu0 0.0
        %1937 = vmatpush2.xpose.msra.mxu0 0.0
        %1938 = vmatprep.subr.mxu0 0.0
        %1939 = vmatpush2.xpose.msra.mxu0 0.0
        %1940 = vmatprep.subr.mxu0 0.0
        %1941 = vmatpush2.xpose.msra.mxu0 0.0
        %1942 = vmatprep.subr.mxu0 0.0
        %1943 = vmatpush2.xpose.msra.mxu0 0.0
        %1944 = vmatprep.subr.mxu0 0.0
        %1945 = vmatpush2.xpose.msra.mxu0 0.0
        %1946 = vmatprep.subr.mxu0 0.0
        %1947 = vmatpush2.xpose.msra.mxu0 0.0
        %1948 = vmatprep.subr.mxu0 0.0
        %1949 = vmatpush2.xpose.msra.mxu0 0.0
        %1950 = vmatprep.subr.mxu0 0.0
        %1951 = vmatpush2.xpose.msra.mxu0 0.0
        %1952 = vmatprep.subr.mxu0 0.0
        %1953 = vmatpush2.xpose.msra.mxu0 0.0
        %1954 = vmatprep.subr.mxu0 0.0
        %1955 = vmatpush2.xpose.msra.mxu0 0.0
        %1956 = vmatprep.mubr.f32.mxu0 0.0
        %1957 = vmatmul.mubr.f32.gmra.mxu0 %v1887
        %v1958 = vpop.f32.mrf.mxu0
        %v1959 = vadd.f32 0.0, %v1958
        %v1960 = vpop.f32.mrf.mxu0
        %1961 = vdwg.mxu0
        %v1963 = vsel %vm1657, %v1065, 0
        %v1966 = vsel %vm1657, %v1359, 0
        %1968 = vmatprep.subr.mxu0 0.0
        %1969 = vmatpush1.xpose.msra.mxu0 0.0
        %1970 = vmatprep.subr.mxu0 0.0
        %1971 = vmatpush1.xpose.msra.mxu0 0.0
        %1972 = vmatprep.subr.mxu0 0.0
        %1973 = vmatpush1.xpose.msra.mxu0 0.0
        %1974 = vmatprep.subr.mxu0 0.0
        %1975 = vmatpush1.xpose.msra.mxu0 0.0
        %1976 = vmatprep.subr.mxu0 0.0
        %1977 = vmatpush1.xpose.msra.mxu0 0.0
        %1978 = vmatprep.subr.mxu0 0.0
        %1979 = vmatpush1.xpose.msra.mxu0 0.0
        %1980 = vmatprep.subr.mxu0 0.0
        %1981 = vmatpush1.xpose.msra.mxu0 0.0
        %1982 = vmatprep.subr.mxu0 0.0
        %1983 = vmatpush1.xpose.msra.mxu0 0.0
        %1984 = vmatprep.subr.mxu0 0.0
        %1985 = vmatpush1.xpose.msra.mxu0 0.0
        %1986 = vmatprep.subr.mxu0 0.0
        %1987 = vmatpush1.xpose.msra.mxu0 0.0
        %1988 = vmatprep.subr.mxu0 0.0
        %1989 = vmatpush1.xpose.msra.mxu0 0.0
        %1990 = vmatprep.subr.mxu0 0.0
        %1991 = vmatpush1.xpose.msra.mxu0 0.0
        %1992 = vmatprep.subr.mxu0 0.0
        %1993 = vmatpush1.xpose.msra.mxu0 0.0
        %1994 = vmatprep.subr.mxu0 0.0
        %1995 = vmatpush1.xpose.msra.mxu0 0.0
        %1996 = vmatprep.subr.mxu0 0.0
        %1997 = vmatpush1.xpose.msra.mxu0 0.0
        %1998 = vmatprep.subr.mxu0 0.0
        %1999 = vmatpush1.xpose.msra.mxu0 %v1966
        %2000 = vmatprep.subr.mxu0 0.0
        %2001 = vmatpush2.xpose.msra.mxu0 0.0
        %2002 = vmatprep.subr.mxu0 0.0
        %2003 = vmatpush2.xpose.msra.mxu0 0.0
        %2004 = vmatprep.subr.mxu0 0.0
        %2005 = vmatpush2.xpose.msra.mxu0 0.0
        %2006 = vmatprep.subr.mxu0 0.0
        %2007 = vmatpush2.xpose.msra.mxu0 0.0
        %2008 = vmatprep.subr.mxu0 0.0
        %2009 = vmatpush2.xpose.msra.mxu0 0.0
        %2010 = vmatprep.subr.mxu0 0.0
        %2011 = vmatpush2.xpose.msra.mxu0 0.0
        %2012 = vmatprep.subr.mxu0 0.0
        %2013 = vmatpush2.xpose.msra.mxu0 0.0
        %2014 = vmatprep.subr.mxu0 0.0
        %2015 = vmatpush2.xpose.msra.mxu0 0.0
        %2016 = vmatprep.subr.mxu0 0.0
        %2017 = vmatpush2.xpose.msra.mxu0 0.0
        %2018 = vmatprep.subr.mxu0 0.0
        %2019 = vmatpush2.xpose.msra.mxu0 0.0
        %2020 = vmatprep.subr.mxu0 0.0
        %2021 = vmatpush2.xpose.msra.mxu0 0.0
        %2022 = vmatprep.subr.mxu0 0.0
        %2023 = vmatpush2.xpose.msra.mxu0 0.0
        %2024 = vmatprep.subr.mxu0 0.0
        %2025 = vmatpush2.xpose.msra.mxu0 0.0
        %2026 = vmatprep.subr.mxu0 0.0
        %2027 = vmatpush2.xpose.msra.mxu0 0.0
        %2028 = vmatprep.subr.mxu0 0.0
        %2029 = vmatpush2.xpose.msra.mxu0 0.0
        %2030 = vmatprep.subr.mxu0 0.0
        %2031 = vmatpush2.xpose.msra.mxu0 0.0
        %2032 = vmatprep.mubr.f32.mxu0 0.0
        %2033 = vmatmul.mubr.f32.gmra.mxu0 %v1963
        %v2034 = vpop.f32.mrf.mxu0
        %v2035 = vadd.f32 0.0, %v2034
        %v2036 = vpop.f32.mrf.mxu0
        %2037 = vdwg.mxu0
        %v2039 = vsel %vm1657, %v1066, 0
        %v2042 = vsel %vm1657, %v1360, 0
        %2044 = vmatprep.subr.mxu0 0.0
        %2045 = vmatpush1.xpose.msra.mxu0 0.0
        %2046 = vmatprep.subr.mxu0 0.0
        %2047 = vmatpush1.xpose.msra.mxu0 0.0
        %2048 = vmatprep.subr.mxu0 0.0
        %2049 = vmatpush1.xpose.msra.mxu0 0.0
        %2050 = vmatprep.subr.mxu0 0.0
        %2051 = vmatpush1.xpose.msra.mxu0 0.0
        %2052 = vmatprep.subr.mxu0 0.0
        %2053 = vmatpush1.xpose.msra.mxu0 0.0
        %2054 = vmatprep.subr.mxu0 0.0
        %2055 = vmatpush1.xpose.msra.mxu0 0.0
        %2056 = vmatprep.subr.mxu0 0.0
        %2057 = vmatpush1.xpose.msra.mxu0 0.0
        %2058 = vmatprep.subr.mxu0 0.0
        %2059 = vmatpush1.xpose.msra.mxu0 0.0
        %2060 = vmatprep.subr.mxu0 0.0
        %2061 = vmatpush1.xpose.msra.mxu0 0.0
        %2062 = vmatprep.subr.mxu0 0.0
        %2063 = vmatpush1.xpose.msra.mxu0 0.0
        %2064 = vmatprep.subr.mxu0 0.0
        %2065 = vmatpush1.xpose.msra.mxu0 0.0
        %2066 = vmatprep.subr.mxu0 0.0
        %2067 = vmatpush1.xpose.msra.mxu0 0.0
        %2068 = vmatprep.subr.mxu0 0.0
        %2069 = vmatpush1.xpose.msra.mxu0 0.0
        %2070 = vmatprep.subr.mxu0 0.0
        %2071 = vmatpush1.xpose.msra.mxu0 0.0
        %2072 = vmatprep.subr.mxu0 0.0
        %2073 = vmatpush1.xpose.msra.mxu0 0.0
        %2074 = vmatprep.subr.mxu0 0.0
        %2075 = vmatpush1.xpose.msra.mxu0 %v2042
        %2076 = vmatprep.subr.mxu0 0.0
        %2077 = vmatpush2.xpose.msra.mxu0 0.0
        %2078 = vmatprep.subr.mxu0 0.0
        %2079 = vmatpush2.xpose.msra.mxu0 0.0
        %2080 = vmatprep.subr.mxu0 0.0
        %2081 = vmatpush2.xpose.msra.mxu0 0.0
        %2082 = vmatprep.subr.mxu0 0.0
        %2083 = vmatpush2.xpose.msra.mxu0 0.0
        %2084 = vmatprep.subr.mxu0 0.0
        %2085 = vmatpush2.xpose.msra.mxu0 0.0
        %2086 = vmatprep.subr.mxu0 0.0
        %2087 = vmatpush2.xpose.msra.mxu0 0.0
        %2088 = vmatprep.subr.mxu0 0.0
        %2089 = vmatpush2.xpose.msra.mxu0 0.0
        %2090 = vmatprep.subr.mxu0 0.0
        %2091 = vmatpush2.xpose.msra.mxu0 0.0
        %2092 = vmatprep.subr.mxu0 0.0
        %2093 = vmatpush2.xpose.msra.mxu0 0.0
        %2094 = vmatprep.subr.mxu0 0.0
        %2095 = vmatpush2.xpose.msra.mxu0 0.0
        %2096 = vmatprep.subr.mxu0 0.0
        %2097 = vmatpush2.xpose.msra.mxu0 0.0
        %2098 = vmatprep.subr.mxu0 0.0
        %2099 = vmatpush2.xpose.msra.mxu0 0.0
        %2100 = vmatprep.subr.mxu0 0.0
        %2101 = vmatpush2.xpose.msra.mxu0 0.0
        %2102 = vmatprep.subr.mxu0 0.0
        %2103 = vmatpush2.xpose.msra.mxu0 0.0
        %2104 = vmatprep.subr.mxu0 0.0
        %2105 = vmatpush2.xpose.msra.mxu0 0.0
        %2106 = vmatprep.subr.mxu0 0.0
        %2107 = vmatpush2.xpose.msra.mxu0 0.0
        %2108 = vmatprep.mubr.f32.mxu0 0.0
        %2109 = vmatmul.mubr.f32.gmra.mxu0 %v2039
        %v2110 = vpop.f32.mrf.mxu0
        %v2111 = vadd.f32 0.0, %v2110
        %v2112 = vpop.f32.mrf.mxu0
        %2113 = vdwg.mxu0
        %v2115 = vsel %vm1657, %v1067, 0
        %v2118 = vsel %vm1657, %v1361, 0
        %2120 = vmatprep.subr.mxu0 0.0
        %2121 = vmatpush1.xpose.msra.mxu0 0.0
        %2122 = vmatprep.subr.mxu0 0.0
        %2123 = vmatpush1.xpose.msra.mxu0 0.0
        %2124 = vmatprep.subr.mxu0 0.0
        %2125 = vmatpush1.xpose.msra.mxu0 0.0
        %2126 = vmatprep.subr.mxu0 0.0
        %2127 = vmatpush1.xpose.msra.mxu0 0.0
        %2128 = vmatprep.subr.mxu0 0.0
        %2129 = vmatpush1.xpose.msra.mxu0 0.0
        %2130 = vmatprep.subr.mxu0 0.0
        %2131 = vmatpush1.xpose.msra.mxu0 0.0
        %2132 = vmatprep.subr.mxu0 0.0
        %2133 = vmatpush1.xpose.msra.mxu0 0.0
        %2134 = vmatprep.subr.mxu0 0.0
        %2135 = vmatpush1.xpose.msra.mxu0 0.0
        %2136 = vmatprep.subr.mxu0 0.0
        %2137 = vmatpush1.xpose.msra.mxu0 0.0
        %2138 = vmatprep.subr.mxu0 0.0
        %2139 = vmatpush1.xpose.msra.mxu0 0.0
        %2140 = vmatprep.subr.mxu0 0.0
        %2141 = vmatpush1.xpose.msra.mxu0 0.0
        %2142 = vmatprep.subr.mxu0 0.0
        %2143 = vmatpush1.xpose.msra.mxu0 0.0
        %2144 = vmatprep.subr.mxu0 0.0
        %2145 = vmatpush1.xpose.msra.mxu0 0.0
        %2146 = vmatprep.subr.mxu0 0.0
        %2147 = vmatpush1.xpose.msra.mxu0 0.0
        %2148 = vmatprep.subr.mxu0 0.0
        %2149 = vmatpush1.xpose.msra.mxu0 0.0
        %2150 = vmatprep.subr.mxu0 0.0
        %2151 = vmatpush1.xpose.msra.mxu0 %v2118
        %2152 = vmatprep.subr.mxu0 0.0
        %2153 = vmatpush2.xpose.msra.mxu0 0.0
        %2154 = vmatprep.subr.mxu0 0.0
        %2155 = vmatpush2.xpose.msra.mxu0 0.0
        %2156 = vmatprep.subr.mxu0 0.0
        %2157 = vmatpush2.xpose.msra.mxu0 0.0
        %2158 = vmatprep.subr.mxu0 0.0
        %2159 = vmatpush2.xpose.msra.mxu0 0.0
        %2160 = vmatprep.subr.mxu0 0.0
        %2161 = vmatpush2.xpose.msra.mxu0 0.0
        %2162 = vmatprep.subr.mxu0 0.0
        %2163 = vmatpush2.xpose.msra.mxu0 0.0
        %2164 = vmatprep.subr.mxu0 0.0
        %2165 = vmatpush2.xpose.msra.mxu0 0.0
        %2166 = vmatprep.subr.mxu0 0.0
        %2167 = vmatpush2.xpose.msra.mxu0 0.0
        %2168 = vmatprep.subr.mxu0 0.0
        %2169 = vmatpush2.xpose.msra.mxu0 0.0
        %2170 = vmatprep.subr.mxu0 0.0
        %2171 = vmatpush2.xpose.msra.mxu0 0.0
        %2172 = vmatprep.subr.mxu0 0.0
        %2173 = vmatpush2.xpose.msra.mxu0 0.0
        %2174 = vmatprep.subr.mxu0 0.0
        %2175 = vmatpush2.xpose.msra.mxu0 0.0
        %2176 = vmatprep.subr.mxu0 0.0
        %2177 = vmatpush2.xpose.msra.mxu0 0.0
        %2178 = vmatprep.subr.mxu0 0.0
        %2179 = vmatpush2.xpose.msra.mxu0 0.0
        %2180 = vmatprep.subr.mxu0 0.0
        %2181 = vmatpush2.xpose.msra.mxu0 0.0
        %2182 = vmatprep.subr.mxu0 0.0
        %2183 = vmatpush2.xpose.msra.mxu0 0.0
        %2184 = vmatprep.mubr.f32.mxu0 0.0
        %2185 = vmatmul.mubr.f32.gmra.mxu0 %v2115
        %v2186 = vpop.f32.mrf.mxu0
        %v2187 = vadd.f32 0.0, %v2186
        %v2188 = vpop.f32.mrf.mxu0
        %2189 = vdwg.mxu0
        %v2191 = vsel %vm1657, %v1068, 0
        %v2194 = vsel %vm1657, %v1362, 0
        %2196 = vmatprep.subr.mxu0 0.0
        %2197 = vmatpush1.xpose.msra.mxu0 0.0
        %2198 = vmatprep.subr.mxu0 0.0
        %2199 = vmatpush1.xpose.msra.mxu0 0.0
        %2200 = vmatprep.subr.mxu0 0.0
        %2201 = vmatpush1.xpose.msra.mxu0 0.0
        %2202 = vmatprep.subr.mxu0 0.0
        %2203 = vmatpush1.xpose.msra.mxu0 0.0
        %2204 = vmatprep.subr.mxu0 0.0
        %2205 = vmatpush1.xpose.msra.mxu0 0.0
        %2206 = vmatprep.subr.mxu0 0.0
        %2207 = vmatpush1.xpose.msra.mxu0 0.0
        %2208 = vmatprep.subr.mxu0 0.0
        %2209 = vmatpush1.xpose.msra.mxu0 0.0
        %2210 = vmatprep.subr.mxu0 0.0
        %2211 = vmatpush1.xpose.msra.mxu0 0.0
        %2212 = vmatprep.subr.mxu0 0.0
        %2213 = vmatpush1.xpose.msra.mxu0 0.0
        %2214 = vmatprep.subr.mxu0 0.0
        %2215 = vmatpush1.xpose.msra.mxu0 0.0
        %2216 = vmatprep.subr.mxu0 0.0
        %2217 = vmatpush1.xpose.msra.mxu0 0.0
        %2218 = vmatprep.subr.mxu0 0.0
        %2219 = vmatpush1.xpose.msra.mxu0 0.0
        %2220 = vmatprep.subr.mxu0 0.0
        %2221 = vmatpush1.xpose.msra.mxu0 0.0
        %2222 = vmatprep.subr.mxu0 0.0
        %2223 = vmatpush1.xpose.msra.mxu0 0.0
        %2224 = vmatprep.subr.mxu0 0.0
        %2225 = vmatpush1.xpose.msra.mxu0 0.0
        %2226 = vmatprep.subr.mxu0 0.0
        %2227 = vmatpush1.xpose.msra.mxu0 %v2194
        %2228 = vmatprep.subr.mxu0 0.0
        %2229 = vmatpush2.xpose.msra.mxu0 0.0
        %2230 = vmatprep.subr.mxu0 0.0
        %2231 = vmatpush2.xpose.msra.mxu0 0.0
        %2232 = vmatprep.subr.mxu0 0.0
        %2233 = vmatpush2.xpose.msra.mxu0 0.0
        %2234 = vmatprep.subr.mxu0 0.0
        %2235 = vmatpush2.xpose.msra.mxu0 0.0
        %2236 = vmatprep.subr.mxu0 0.0
        %2237 = vmatpush2.xpose.msra.mxu0 0.0
        %2238 = vmatprep.subr.mxu0 0.0
        %2239 = vmatpush2.xpose.msra.mxu0 0.0
        %2240 = vmatprep.subr.mxu0 0.0
        %2241 = vmatpush2.xpose.msra.mxu0 0.0
        %2242 = vmatprep.subr.mxu0 0.0
        %2243 = vmatpush2.xpose.msra.mxu0 0.0
        %2244 = vmatprep.subr.mxu0 0.0
        %2245 = vmatpush2.xpose.msra.mxu0 0.0
        %2246 = vmatprep.subr.mxu0 0.0
        %2247 = vmatpush2.xpose.msra.mxu0 0.0
        %2248 = vmatprep.subr.mxu0 0.0
        %2249 = vmatpush2.xpose.msra.mxu0 0.0
        %2250 = vmatprep.subr.mxu0 0.0
        %2251 = vmatpush2.xpose.msra.mxu0 0.0
        %2252 = vmatprep.subr.mxu0 0.0
        %2253 = vmatpush2.xpose.msra.mxu0 0.0
        %2254 = vmatprep.subr.mxu0 0.0
        %2255 = vmatpush2.xpose.msra.mxu0 0.0
        %2256 = vmatprep.subr.mxu0 0.0
        %2257 = vmatpush2.xpose.msra.mxu0 0.0
        %2258 = vmatprep.subr.mxu0 0.0
        %2259 = vmatpush2.xpose.msra.mxu0 0.0
        %2260 = vmatprep.mubr.f32.mxu0 0.0
        %2261 = vmatmul.mubr.f32.gmra.mxu0 %v2191
        %v2262 = vpop.f32.mrf.mxu0
        %v2263 = vadd.f32 0.0, %v2262
        %v2264 = vpop.f32.mrf.mxu0
        %2265 = vdwg.mxu0
        %vm2266 = vcmask 64512
        %v2267 = vsel %vm2266, %v1731, -inf
        %2268 = vmax.xlane.f32.xlu0 %v2267
        %v2269 = vpop.xlane.xlu0 %2268
        %v2270 = vsel %vm2266, %v1807, -inf
        %2271 = vmax.xlane.f32.xlu0 %v2270
        %v2272 = vpop.xlane.xlu0 %2271
        %v2273 = vsel %vm2266, %v1883, -inf
        %2274 = vmax.xlane.f32.xlu0 %v2273
        %v2275 = vpop.xlane.xlu0 %2274
        %v2276 = vsel %vm2266, %v1959, -inf
        %2277 = vmax.xlane.f32.xlu0 %v2276
        %v2278 = vpop.xlane.xlu0 %2277
        %v2279 = vsel %vm2266, %v2035, -inf
        %2280 = vmax.xlane.f32.xlu0 %v2279
        %v2281 = vpop.xlane.xlu0 %2280
        %v2282 = vsel %vm2266, %v2111, -inf
        %2283 = vmax.xlane.f32.xlu0 %v2282
        %v2284 = vpop.xlane.xlu0 %2283
        %v2285 = vsel %vm2266, %v2187, -inf
        %2286 = vmax.xlane.f32.xlu0 %v2285
        %v2287 = vpop.xlane.xlu0 %2286
        %v2288 = vsel %vm2266, %v2263, -inf
        %2289 = vmax.xlane.f32.xlu0 %v2288
        %v2290 = vpop.xlane.xlu0 %2289
        %v2291 = vsub.f32 %v1731, %v2269
        %v2292 = vsub.f32 %v1807, %v2272
        %v2293 = vsub.f32 %v1883, %v2275
        %v2294 = vsub.f32 %v1959, %v2278
        %v2295 = vsub.f32 %v2035, %v2281
        %v2296 = vsub.f32 %v2111, %v2284
        %v2297 = vsub.f32 %v2187, %v2287
        %v2298 = vsub.f32 %v2263, %v2290
        %v2299 = vmul.f32 %v2291, 1.442695
        %v2300 = vpow.pop %v2299
        %v2301 = vmul.f32 %v2292, 1.442695
        %v2302 = vpow.pop %v2301
        %v2303 = vmul.f32 %v2293, 1.442695
        %v2304 = vpow.pop %v2303
        %v2305 = vmul.f32 %v2294, 1.442695
        %v2306 = vpow.pop %v2305
        %v2307 = vmul.f32 %v2295, 1.442695
        %v2308 = vpow.pop %v2307
        %v2309 = vmul.f32 %v2296, 1.442695
        %v2310 = vpow.pop %v2309
        %v2311 = vmul.f32 %v2297, 1.442695
        %v2312 = vpow.pop %v2311
        %v2313 = vmul.f32 %v2298, 1.442695
        %v2314 = vpow.pop %v2313
        %v2315 = vsel %vm2266, %v2300, 0.0
        %2316 = vadd.xlane.f32.xlu0 %v2315
        %v2317 = vpop.xlane.xlu0 %2316
        %v2318 = vsel %vm2266, %v2302, 0.0
        %2319 = vadd.xlane.f32.xlu0 %v2318
        %v2320 = vpop.xlane.xlu0 %2319
        %v2321 = vsel %vm2266, %v2304, 0.0
        %2322 = vadd.xlane.f32.xlu0 %v2321
        %v2323 = vpop.xlane.xlu0 %2322
        %v2324 = vsel %vm2266, %v2306, 0.0
        %2325 = vadd.xlane.f32.xlu0 %v2324
        %v2326 = vpop.xlane.xlu0 %2325
        %v2327 = vsel %vm2266, %v2308, 0.0
        %2328 = vadd.xlane.f32.xlu0 %v2327
        %v2329 = vpop.xlane.xlu0 %2328
        %v2330 = vsel %vm2266, %v2310, 0.0
        %2331 = vadd.xlane.f32.xlu0 %v2330
        %v2332 = vpop.xlane.xlu0 %2331
        %v2333 = vsel %vm2266, %v2312, 0.0
        %2334 = vadd.xlane.f32.xlu0 %v2333
        %v2335 = vpop.xlane.xlu0 %2334
        %v2336 = vsel %vm2266, %v2314, 0.0
        %2337 = vadd.xlane.f32.xlu0 %v2336
        %v2338 = vpop.xlane.xlu0 %2337
        %v2339 = vrcp.pop %v2317
        %v2340 = vrcp.pop %v2320
        %v2341 = vrcp.pop %v2323
        %v2342 = vrcp.pop %v2326
        %v2343 = vrcp.pop %v2329
        %v2344 = vrcp.pop %v2332
        %v2345 = vrcp.pop %v2335
        %v2346 = vrcp.pop %v2338
        %v2347 = vmul.f32 %v2300, %v2339
        %v2348 = vmul.f32 %v2302, %v2340
        %v2349 = vmul.f32 %v2304, %v2341
        %v2350 = vmul.f32 %v2306, %v2342
        %v2351 = vmul.f32 %v2308, %v2343
        %v2352 = vmul.f32 %v2310, %v2344
        %v2353 = vmul.f32 %v2312, %v2345
        %v2354 = vmul.f32 %v2314, %v2346
        %v2356 = vsel %vm2266, %v2347, 0
        %2358 = vmatprep.subr.mxu0 0.0
        %2359 = vmatpush1.msra.mxu0 0.0
        %2360 = vmatprep.subr.mxu0 0.0
        %2361 = vmatpush1.msra.mxu0 0.0
        %2362 = vmatprep.subr.mxu0 0.0
        %2363 = vmatpush1.msra.mxu0 0.0
        %2364 = vmatprep.subr.mxu0 0.0
        %2365 = vmatpush1.msra.mxu0 0.0
        %2366 = vmatprep.subr.mxu0 0.0
        %2367 = vmatpush1.msra.mxu0 0.0
        %2368 = vmatprep.subr.mxu0 0.0
        %2369 = vmatpush1.msra.mxu0 0.0
        %2370 = vmatprep.subr.mxu0 0.0
        %2371 = vmatpush1.msra.mxu0 0.0
        %2372 = vmatprep.subr.mxu0 0.0
        %2373 = vmatpush1.msra.mxu0 0.0
        %2374 = vmatprep.subr.mxu0 0.0
        %2375 = vmatpush1.msra.mxu0 0.0
        %2376 = vmatprep.subr.mxu0 0.0
        %2377 = vmatpush1.msra.mxu0 0.0
        %2378 = vmatprep.subr.mxu0 0.0
        %2379 = vmatpush1.msra.mxu0 0.0
        %2380 = vmatprep.subr.mxu0 0.0
        %2381 = vmatpush1.msra.mxu0 0.0
        %2382 = vmatprep.subr.mxu0 0.0
        %2383 = vmatpush1.msra.mxu0 0.0
        %2384 = vmatprep.subr.mxu0 0.0
        %2385 = vmatpush1.msra.mxu0 0.0
        %2386 = vmatprep.subr.mxu0 0.0
        %2387 = vmatpush1.msra.mxu0 0.0
        %2388 = vmatprep.subr.mxu0 0.0
        %2389 = vmatpush1.msra.mxu0 %v1649
        %2390 = vmatprep.subr.mxu0 0.0
        %2391 = vmatpush2.msra.mxu0 0.0
        %2392 = vmatprep.subr.mxu0 0.0
        %2393 = vmatpush2.msra.mxu0 0.0
        %2394 = vmatprep.subr.mxu0 0.0
        %2395 = vmatpush2.msra.mxu0 0.0
        %2396 = vmatprep.subr.mxu0 0.0
        %2397 = vmatpush2.msra.mxu0 0.0
        %2398 = vmatprep.subr.mxu0 0.0
        %2399 = vmatpush2.msra.mxu0 0.0
        %2400 = vmatprep.subr.mxu0 0.0
        %2401 = vmatpush2.msra.mxu0 0.0
        %2402 = vmatprep.subr.mxu0 0.0
        %2403 = vmatpush2.msra.mxu0 0.0
        %2404 = vmatprep.subr.mxu0 0.0
        %2405 = vmatpush2.msra.mxu0 0.0
        %2406 = vmatprep.subr.mxu0 0.0
        %2407 = vmatpush2.msra.mxu0 0.0
        %2408 = vmatprep.subr.mxu0 0.0
        %2409 = vmatpush2.msra.mxu0 0.0
        %2410 = vmatprep.subr.mxu0 0.0
        %2411 = vmatpush2.msra.mxu0 0.0
        %2412 = vmatprep.subr.mxu0 0.0
        %2413 = vmatpush2.msra.mxu0 0.0
        %2414 = vmatprep.subr.mxu0 0.0
        %2415 = vmatpush2.msra.mxu0 0.0
        %2416 = vmatprep.subr.mxu0 0.0
        %2417 = vmatpush2.msra.mxu0 0.0
        %2418 = vmatprep.subr.mxu0 0.0
        %2419 = vmatpush2.msra.mxu0 0.0
        %2420 = vmatprep.subr.mxu0 0.0
        %2421 = vmatpush2.msra.mxu0 0.0
        %2422 = vmatprep.mubr.f32.mxu0 0.0
        %2423 = vmatmul.mubr.f32.gmra.mxu0 %v2356
        %v2424 = vpop.f32.mrf.mxu0
        %v2425 = vadd.f32 0.0, %v2424
        %v2426 = vpop.f32.mrf.mxu0
        %2427 = vdwg.mxu0
        %v2429 = vsel %vm2266, %v2348, 0
        %2431 = vmatprep.subr.mxu0 0.0
        %2432 = vmatpush1.msra.mxu0 0.0
        %2433 = vmatprep.subr.mxu0 0.0
        %2434 = vmatpush1.msra.mxu0 0.0
        %2435 = vmatprep.subr.mxu0 0.0
        %2436 = vmatpush1.msra.mxu0 0.0
        %2437 = vmatprep.subr.mxu0 0.0
        %2438 = vmatpush1.msra.mxu0 0.0
        %2439 = vmatprep.subr.mxu0 0.0
        %2440 = vmatpush1.msra.mxu0 0.0
        %2441 = vmatprep.subr.mxu0 0.0
        %2442 = vmatpush1.msra.mxu0 0.0
        %2443 = vmatprep.subr.mxu0 0.0
        %2444 = vmatpush1.msra.mxu0 0.0
        %2445 = vmatprep.subr.mxu0 0.0
        %2446 = vmatpush1.msra.mxu0 0.0
        %2447 = vmatprep.subr.mxu0 0.0
        %2448 = vmatpush1.msra.mxu0 0.0
        %2449 = vmatprep.subr.mxu0 0.0
        %2450 = vmatpush1.msra.mxu0 0.0
        %2451 = vmatprep.subr.mxu0 0.0
        %2452 = vmatpush1.msra.mxu0 0.0
        %2453 = vmatprep.subr.mxu0 0.0
        %2454 = vmatpush1.msra.mxu0 0.0
        %2455 = vmatprep.subr.mxu0 0.0
        %2456 = vmatpush1.msra.mxu0 0.0
        %2457 = vmatprep.subr.mxu0 0.0
        %2458 = vmatpush1.msra.mxu0 0.0
        %2459 = vmatprep.subr.mxu0 0.0
        %2460 = vmatpush1.msra.mxu0 0.0
        %2461 = vmatprep.subr.mxu0 0.0
        %2462 = vmatpush1.msra.mxu0 %v1650
        %2463 = vmatprep.subr.mxu0 0.0
        %2464 = vmatpush2.msra.mxu0 0.0
        %2465 = vmatprep.subr.mxu0 0.0
        %2466 = vmatpush2.msra.mxu0 0.0
        %2467 = vmatprep.subr.mxu0 0.0
        %2468 = vmatpush2.msra.mxu0 0.0
        %2469 = vmatprep.subr.mxu0 0.0
        %2470 = vmatpush2.msra.mxu0 0.0
        %2471 = vmatprep.subr.mxu0 0.0
        %2472 = vmatpush2.msra.mxu0 0.0
        %2473 = vmatprep.subr.mxu0 0.0
        %2474 = vmatpush2.msra.mxu0 0.0
        %2475 = vmatprep.subr.mxu0 0.0
        %2476 = vmatpush2.msra.mxu0 0.0
        %2477 = vmatprep.subr.mxu0 0.0
        %2478 = vmatpush2.msra.mxu0 0.0
        %2479 = vmatprep.subr.mxu0 0.0
        %2480 = vmatpush2.msra.mxu0 0.0
        %2481 = vmatprep.subr.mxu0 0.0
        %2482 = vmatpush2.msra.mxu0 0.0
        %2483 = vmatprep.subr.mxu0 0.0
        %2484 = vmatpush2.msra.mxu0 0.0
        %2485 = vmatprep.subr.mxu0 0.0
        %2486 = vmatpush2.msra.mxu0 0.0
        %2487 = vmatprep.subr.mxu0 0.0
        %2488 = vmatpush2.msra.mxu0 0.0
        %2489 = vmatprep.subr.mxu0 0.0
        %2490 = vmatpush2.msra.mxu0 0.0
        %2491 = vmatprep.subr.mxu0 0.0
        %2492 = vmatpush2.msra.mxu0 0.0
        %2493 = vmatprep.subr.mxu0 0.0
        %2494 = vmatpush2.msra.mxu0 0.0
        %2495 = vmatprep.mubr.f32.mxu0 0.0
        %2496 = vmatmul.mubr.f32.gmra.mxu0 %v2429
        %v2497 = vpop.f32.mrf.mxu0
        %v2498 = vadd.f32 0.0, %v2497
        %v2499 = vpop.f32.mrf.mxu0
        %2500 = vdwg.mxu0
        %v2502 = vsel %vm2266, %v2349, 0
        %2504 = vmatprep.subr.mxu0 0.0
        %2505 = vmatpush1.msra.mxu0 0.0
        %2506 = vmatprep.subr.mxu0 0.0
        %2507 = vmatpush1.msra.mxu0 0.0
        %2508 = vmatprep.subr.mxu0 0.0
        %2509 = vmatpush1.msra.mxu0 0.0
        %2510 = vmatprep.subr.mxu0 0.0
        %2511 = vmatpush1.msra.mxu0 0.0
        %2512 = vmatprep.subr.mxu0 0.0
        %2513 = vmatpush1.msra.mxu0 0.0
        %2514 = vmatprep.subr.mxu0 0.0
        %2515 = vmatpush1.msra.mxu0 0.0
        %2516 = vmatprep.subr.mxu0 0.0
        %2517 = vmatpush1.msra.mxu0 0.0
        %2518 = vmatprep.subr.mxu0 0.0
        %2519 = vmatpush1.msra.mxu0 0.0
        %2520 = vmatprep.subr.mxu0 0.0
        %2521 = vmatpush1.msra.mxu0 0.0
        %2522 = vmatprep.subr.mxu0 0.0
        %2523 = vmatpush1.msra.mxu0 0.0
        %2524 = vmatprep.subr.mxu0 0.0
        %2525 = vmatpush1.msra.mxu0 0.0
        %2526 = vmatprep.subr.mxu0 0.0
        %2527 = vmatpush1.msra.mxu0 0.0
        %2528 = vmatprep.subr.mxu0 0.0
        %2529 = vmatpush1.msra.mxu0 0.0
        %2530 = vmatprep.subr.mxu0 0.0
        %2531 = vmatpush1.msra.mxu0 0.0
        %2532 = vmatprep.subr.mxu0 0.0
        %2533 = vmatpush1.msra.mxu0 0.0
        %2534 = vmatprep.subr.mxu0 0.0
        %2535 = vmatpush1.msra.mxu0 %v1651
        %2536 = vmatprep.subr.mxu0 0.0
        %2537 = vmatpush2.msra.mxu0 0.0
        %2538 = vmatprep.subr.mxu0 0.0
        %2539 = vmatpush2.msra.mxu0 0.0
        %2540 = vmatprep.subr.mxu0 0.0
        %2541 = vmatpush2.msra.mxu0 0.0
        %2542 = vmatprep.subr.mxu0 0.0
        %2543 = vmatpush2.msra.mxu0 0.0
        %2544 = vmatprep.subr.mxu0 0.0
        %2545 = vmatpush2.msra.mxu0 0.0
        %2546 = vmatprep.subr.mxu0 0.0
        %2547 = vmatpush2.msra.mxu0 0.0
        %2548 = vmatprep.subr.mxu0 0.0
        %2549 = vmatpush2.msra.mxu0 0.0
        %2550 = vmatprep.subr.mxu0 0.0
        %2551 = vmatpush2.msra.mxu0 0.0
        %2552 = vmatprep.subr.mxu0 0.0
        %2553 = vmatpush2.msra.mxu0 0.0
        %2554 = vmatprep.subr.mxu0 0.0
        %2555 = vmatpush2.msra.mxu0 0.0
        %2556 = vmatprep.subr.mxu0 0.0
        %2557 = vmatpush2.msra.mxu0 0.0
        %2558 = vmatprep.subr.mxu0 0.0
        %2559 = vmatpush2.msra.mxu0 0.0
        %2560 = vmatprep.subr.mxu0 0.0
        %2561 = vmatpush2.msra.mxu0 0.0
        %2562 = vmatprep.subr.mxu0 0.0
        %2563 = vmatpush2.msra.mxu0 0.0
        %2564 = vmatprep.subr.mxu0 0.0
        %2565 = vmatpush2.msra.mxu0 0.0
        %2566 = vmatprep.subr.mxu0 0.0
        %2567 = vmatpush2.msra.mxu0 0.0
        %2568 = vmatprep.mubr.f32.mxu0 0.0
        %2569 = vmatmul.mubr.f32.gmra.mxu0 %v2502
        %v2570 = vpop.f32.mrf.mxu0
        %v2571 = vadd.f32 0.0, %v2570
        %v2572 = vpop.f32.mrf.mxu0
        %2573 = vdwg.mxu0
        %v2575 = vsel %vm2266, %v2350, 0
        %2577 = vmatprep.subr.mxu0 0.0
        %2578 = vmatpush1.msra.mxu0 0.0
        %2579 = vmatprep.subr.mxu0 0.0
        %2580 = vmatpush1.msra.mxu0 0.0
        %2581 = vmatprep.subr.mxu0 0.0
        %2582 = vmatpush1.msra.mxu0 0.0
        %2583 = vmatprep.subr.mxu0 0.0
        %2584 = vmatpush1.msra.mxu0 0.0
        %2585 = vmatprep.subr.mxu0 0.0
        %2586 = vmatpush1.msra.mxu0 0.0
        %2587 = vmatprep.subr.mxu0 0.0
        %2588 = vmatpush1.msra.mxu0 0.0
        %2589 = vmatprep.subr.mxu0 0.0
        %2590 = vmatpush1.msra.mxu0 0.0
        %2591 = vmatprep.subr.mxu0 0.0
        %2592 = vmatpush1.msra.mxu0 0.0
        %2593 = vmatprep.subr.mxu0 0.0
        %2594 = vmatpush1.msra.mxu0 0.0
        %2595 = vmatprep.subr.mxu0 0.0
        %2596 = vmatpush1.msra.mxu0 0.0
        %2597 = vmatprep.subr.mxu0 0.0
        %2598 = vmatpush1.msra.mxu0 0.0
        %2599 = vmatprep.subr.mxu0 0.0
        %2600 = vmatpush1.msra.mxu0 0.0
        %2601 = vmatprep.subr.mxu0 0.0
        %2602 = vmatpush1.msra.mxu0 0.0
        %2603 = vmatprep.subr.mxu0 0.0
        %2604 = vmatpush1.msra.mxu0 0.0
        %2605 = vmatprep.subr.mxu0 0.0
        %2606 = vmatpush1.msra.mxu0 0.0
        %2607 = vmatprep.subr.mxu0 0.0
        %2608 = vmatpush1.msra.mxu0 %v1652
        %2609 = vmatprep.subr.mxu0 0.0
        %2610 = vmatpush2.msra.mxu0 0.0
        %2611 = vmatprep.subr.mxu0 0.0
        %2612 = vmatpush2.msra.mxu0 0.0
        %2613 = vmatprep.subr.mxu0 0.0
        %2614 = vmatpush2.msra.mxu0 0.0
        %2615 = vmatprep.subr.mxu0 0.0
        %2616 = vmatpush2.msra.mxu0 0.0
        %2617 = vmatprep.subr.mxu0 0.0
        %2618 = vmatpush2.msra.mxu0 0.0
        %2619 = vmatprep.subr.mxu0 0.0
        %2620 = vmatpush2.msra.mxu0 0.0
        %2621 = vmatprep.subr.mxu0 0.0
        %2622 = vmatpush2.msra.mxu0 0.0
        %2623 = vmatprep.subr.mxu0 0.0
        %2624 = vmatpush2.msra.mxu0 0.0
        %2625 = vmatprep.subr.mxu0 0.0
        %2626 = vmatpush2.msra.mxu0 0.0
        %2627 = vmatprep.subr.mxu0 0.0
        %2628 = vmatpush2.msra.mxu0 0.0
        %2629 = vmatprep.subr.mxu0 0.0
        %2630 = vmatpush2.msra.mxu0 0.0
        %2631 = vmatprep.subr.mxu0 0.0
        %2632 = vmatpush2.msra.mxu0 0.0
        %2633 = vmatprep.subr.mxu0 0.0
        %2634 = vmatpush2.msra.mxu0 0.0
        %2635 = vmatprep.subr.mxu0 0.0
        %2636 = vmatpush2.msra.mxu0 0.0
        %2637 = vmatprep.subr.mxu0 0.0
        %2638 = vmatpush2.msra.mxu0 0.0
        %2639 = vmatprep.subr.mxu0 0.0
        %2640 = vmatpush2.msra.mxu0 0.0
        %2641 = vmatprep.mubr.f32.mxu0 0.0
        %2642 = vmatmul.mubr.f32.gmra.mxu0 %v2575
        %v2643 = vpop.f32.mrf.mxu0
        %v2644 = vadd.f32 0.0, %v2643
        %v2645 = vpop.f32.mrf.mxu0
        %2646 = vdwg.mxu0
        %v2648 = vsel %vm2266, %v2351, 0
        %2650 = vmatprep.subr.mxu0 0.0
        %2651 = vmatpush1.msra.mxu0 0.0
        %2652 = vmatprep.subr.mxu0 0.0
        %2653 = vmatpush1.msra.mxu0 0.0
        %2654 = vmatprep.subr.mxu0 0.0
        %2655 = vmatpush1.msra.mxu0 0.0
        %2656 = vmatprep.subr.mxu0 0.0
        %2657 = vmatpush1.msra.mxu0 0.0
        %2658 = vmatprep.subr.mxu0 0.0
        %2659 = vmatpush1.msra.mxu0 0.0
        %2660 = vmatprep.subr.mxu0 0.0
        %2661 = vmatpush1.msra.mxu0 0.0
        %2662 = vmatprep.subr.mxu0 0.0
        %2663 = vmatpush1.msra.mxu0 0.0
        %2664 = vmatprep.subr.mxu0 0.0
        %2665 = vmatpush1.msra.mxu0 0.0
        %2666 = vmatprep.subr.mxu0 0.0
        %2667 = vmatpush1.msra.mxu0 0.0
        %2668 = vmatprep.subr.mxu0 0.0
        %2669 = vmatpush1.msra.mxu0 0.0
        %2670 = vmatprep.subr.mxu0 0.0
        %2671 = vmatpush1.msra.mxu0 0.0
        %2672 = vmatprep.subr.mxu0 0.0
        %2673 = vmatpush1.msra.mxu0 0.0
        %2674 = vmatprep.subr.mxu0 0.0
        %2675 = vmatpush1.msra.mxu0 0.0
        %2676 = vmatprep.subr.mxu0 0.0
        %2677 = vmatpush1.msra.mxu0 0.0
        %2678 = vmatprep.subr.mxu0 0.0
        %2679 = vmatpush1.msra.mxu0 0.0
        %2680 = vmatprep.subr.mxu0 0.0
        %2681 = vmatpush1.msra.mxu0 %v1653
        %2682 = vmatprep.subr.mxu0 0.0
        %2683 = vmatpush2.msra.mxu0 0.0
        %2684 = vmatprep.subr.mxu0 0.0
        %2685 = vmatpush2.msra.mxu0 0.0
        %2686 = vmatprep.subr.mxu0 0.0
        %2687 = vmatpush2.msra.mxu0 0.0
        %2688 = vmatprep.subr.mxu0 0.0
        %2689 = vmatpush2.msra.mxu0 0.0
        %2690 = vmatprep.subr.mxu0 0.0
        %2691 = vmatpush2.msra.mxu0 0.0
        %2692 = vmatprep.subr.mxu0 0.0
        %2693 = vmatpush2.msra.mxu0 0.0
        %2694 = vmatprep.subr.mxu0 0.0
        %2695 = vmatpush2.msra.mxu0 0.0
        %2696 = vmatprep.subr.mxu0 0.0
        %2697 = vmatpush2.msra.mxu0 0.0
        %2698 = vmatprep.subr.mxu0 0.0
        %2699 = vmatpush2.msra.mxu0 0.0
        %2700 = vmatprep.subr.mxu0 0.0
        %2701 = vmatpush2.msra.mxu0 0.0
        %2702 = vmatprep.subr.mxu0 0.0
        %2703 = vmatpush2.msra.mxu0 0.0
        %2704 = vmatprep.subr.mxu0 0.0
        %2705 = vmatpush2.msra.mxu0 0.0
        %2706 = vmatprep.subr.mxu0 0.0
        %2707 = vmatpush2.msra.mxu0 0.0
        %2708 = vmatprep.subr.mxu0 0.0
        %2709 = vmatpush2.msra.mxu0 0.0
        %2710 = vmatprep.subr.mxu0 0.0
        %2711 = vmatpush2.msra.mxu0 0.0
        %2712 = vmatprep.subr.mxu0 0.0
        %2713 = vmatpush2.msra.mxu0 0.0
        %2714 = vmatprep.mubr.f32.mxu0 0.0
        %2715 = vmatmul.mubr.f32.gmra.mxu0 %v2648
        %v2716 = vpop.f32.mrf.mxu0
        %v2717 = vadd.f32 0.0, %v2716
        %v2718 = vpop.f32.mrf.mxu0
        %2719 = vdwg.mxu0
        %v2721 = vsel %vm2266, %v2352, 0
        %2723 = vmatprep.subr.mxu0 0.0
        %2724 = vmatpush1.msra.mxu0 0.0
        %2725 = vmatprep.subr.mxu0 0.0
        %2726 = vmatpush1.msra.mxu0 0.0
        %2727 = vmatprep.subr.mxu0 0.0
        %2728 = vmatpush1.msra.mxu0 0.0
        %2729 = vmatprep.subr.mxu0 0.0
        %2730 = vmatpush1.msra.mxu0 0.0
        %2731 = vmatprep.subr.mxu0 0.0
        %2732 = vmatpush1.msra.mxu0 0.0
        %2733 = vmatprep.subr.mxu0 0.0
        %2734 = vmatpush1.msra.mxu0 0.0
        %2735 = vmatprep.subr.mxu0 0.0
        %2736 = vmatpush1.msra.mxu0 0.0
        %2737 = vmatprep.subr.mxu0 0.0
        %2738 = vmatpush1.msra.mxu0 0.0
        %2739 = vmatprep.subr.mxu0 0.0
        %2740 = vmatpush1.msra.mxu0 0.0
        %2741 = vmatprep.subr.mxu0 0.0
        %2742 = vmatpush1.msra.mxu0 0.0
        %2743 = vmatprep.subr.mxu0 0.0
        %2744 = vmatpush1.msra.mxu0 0.0
        %2745 = vmatprep.subr.mxu0 0.0
        %2746 = vmatpush1.msra.mxu0 0.0
        %2747 = vmatprep.subr.mxu0 0.0
        %2748 = vmatpush1.msra.mxu0 0.0
        %2749 = vmatprep.subr.mxu0 0.0
        %2750 = vmatpush1.msra.mxu0 0.0
        %2751 = vmatprep.subr.mxu0 0.0
        %2752 = vmatpush1.msra.mxu0 0.0
        %2753 = vmatprep.subr.mxu0 0.0
        %2754 = vmatpush1.msra.mxu0 %v1654
        %2755 = vmatprep.subr.mxu0 0.0
        %2756 = vmatpush2.msra.mxu0 0.0
        %2757 = vmatprep.subr.mxu0 0.0
        %2758 = vmatpush2.msra.mxu0 0.0
        %2759 = vmatprep.subr.mxu0 0.0
        %2760 = vmatpush2.msra.mxu0 0.0
        %2761 = vmatprep.subr.mxu0 0.0
        %2762 = vmatpush2.msra.mxu0 0.0
        %2763 = vmatprep.subr.mxu0 0.0
        %2764 = vmatpush2.msra.mxu0 0.0
        %2765 = vmatprep.subr.mxu0 0.0
        %2766 = vmatpush2.msra.mxu0 0.0
        %2767 = vmatprep.subr.mxu0 0.0
        %2768 = vmatpush2.msra.mxu0 0.0
        %2769 = vmatprep.subr.mxu0 0.0
        %2770 = vmatpush2.msra.mxu0 0.0
        %2771 = vmatprep.subr.mxu0 0.0
        %2772 = vmatpush2.msra.mxu0 0.0
        %2773 = vmatprep.subr.mxu0 0.0
        %2774 = vmatpush2.msra.mxu0 0.0
        %2775 = vmatprep.subr.mxu0 0.0
        %2776 = vmatpush2.msra.mxu0 0.0
        %2777 = vmatprep.subr.mxu0 0.0
        %2778 = vmatpush2.msra.mxu0 0.0
        %2779 = vmatprep.subr.mxu0 0.0
        %2780 = vmatpush2.msra.mxu0 0.0
        %2781 = vmatprep.subr.mxu0 0.0
        %2782 = vmatpush2.msra.mxu0 0.0
        %2783 = vmatprep.subr.mxu0 0.0
        %2784 = vmatpush2.msra.mxu0 0.0
        %2785 = vmatprep.subr.mxu0 0.0
        %2786 = vmatpush2.msra.mxu0 0.0
        %2787 = vmatprep.mubr.f32.mxu0 0.0
        %2788 = vmatmul.mubr.f32.gmra.mxu0 %v2721
        %v2789 = vpop.f32.mrf.mxu0
        %v2790 = vadd.f32 0.0, %v2789
        %v2791 = vpop.f32.mrf.mxu0
        %2792 = vdwg.mxu0
        %v2794 = vsel %vm2266, %v2353, 0
        %2796 = vmatprep.subr.mxu0 0.0
        %2797 = vmatpush1.msra.mxu0 0.0
        %2798 = vmatprep.subr.mxu0 0.0
        %2799 = vmatpush1.msra.mxu0 0.0
        %2800 = vmatprep.subr.mxu0 0.0
        %2801 = vmatpush1.msra.mxu0 0.0
        %2802 = vmatprep.subr.mxu0 0.0
        %2803 = vmatpush1.msra.mxu0 0.0
        %2804 = vmatprep.subr.mxu0 0.0
        %2805 = vmatpush1.msra.mxu0 0.0
        %2806 = vmatprep.subr.mxu0 0.0
        %2807 = vmatpush1.msra.mxu0 0.0
        %2808 = vmatprep.subr.mxu0 0.0
        %2809 = vmatpush1.msra.mxu0 0.0
        %2810 = vmatprep.subr.mxu0 0.0
        %2811 = vmatpush1.msra.mxu0 0.0
        %2812 = vmatprep.subr.mxu0 0.0
        %2813 = vmatpush1.msra.mxu0 0.0
        %2814 = vmatprep.subr.mxu0 0.0
        %2815 = vmatpush1.msra.mxu0 0.0
        %2816 = vmatprep.subr.mxu0 0.0
        %2817 = vmatpush1.msra.mxu0 0.0
        %2818 = vmatprep.subr.mxu0 0.0
        %2819 = vmatpush1.msra.mxu0 0.0
        %2820 = vmatprep.subr.mxu0 0.0
        %2821 = vmatpush1.msra.mxu0 0.0
        %2822 = vmatprep.subr.mxu0 0.0
        %2823 = vmatpush1.msra.mxu0 0.0
        %2824 = vmatprep.subr.mxu0 0.0
        %2825 = vmatpush1.msra.mxu0 0.0
        %2826 = vmatprep.subr.mxu0 0.0
        %2827 = vmatpush1.msra.mxu0 %v1655
        %2828 = vmatprep.subr.mxu0 0.0
        %2829 = vmatpush2.msra.mxu0 0.0
        %2830 = vmatprep.subr.mxu0 0.0
        %2831 = vmatpush2.msra.mxu0 0.0
        %2832 = vmatprep.subr.mxu0 0.0
        %2833 = vmatpush2.msra.mxu0 0.0
        %2834 = vmatprep.subr.mxu0 0.0
        %2835 = vmatpush2.msra.mxu0 0.0
        %2836 = vmatprep.subr.mxu0 0.0
        %2837 = vmatpush2.msra.mxu0 0.0
        %2838 = vmatprep.subr.mxu0 0.0
        %2839 = vmatpush2.msra.mxu0 0.0
        %2840 = vmatprep.subr.mxu0 0.0
        %2841 = vmatpush2.msra.mxu0 0.0
        %2842 = vmatprep.subr.mxu0 0.0
        %2843 = vmatpush2.msra.mxu0 0.0
        %2844 = vmatprep.subr.mxu0 0.0
        %2845 = vmatpush2.msra.mxu0 0.0
        %2846 = vmatprep.subr.mxu0 0.0
        %2847 = vmatpush2.msra.mxu0 0.0
        %2848 = vmatprep.subr.mxu0 0.0
        %2849 = vmatpush2.msra.mxu0 0.0
        %2850 = vmatprep.subr.mxu0 0.0
        %2851 = vmatpush2.msra.mxu0 0.0
        %2852 = vmatprep.subr.mxu0 0.0
        %2853 = vmatpush2.msra.mxu0 0.0
        %2854 = vmatprep.subr.mxu0 0.0
        %2855 = vmatpush2.msra.mxu0 0.0
        %2856 = vmatprep.subr.mxu0 0.0
        %2857 = vmatpush2.msra.mxu0 0.0
        %2858 = vmatprep.subr.mxu0 0.0
        %2859 = vmatpush2.msra.mxu0 0.0
        %2860 = vmatprep.mubr.f32.mxu0 0.0
        %2861 = vmatmul.mubr.f32.gmra.mxu0 %v2794
        %v2862 = vpop.f32.mrf.mxu0
        %v2863 = vadd.f32 0.0, %v2862
        %v2864 = vpop.f32.mrf.mxu0
        %2865 = vdwg.mxu0
        %v2867 = vsel %vm2266, %v2354, 0
        %2869 = vmatprep.subr.mxu0 0.0
        %2870 = vmatpush1.msra.mxu0 0.0
        %2871 = vmatprep.subr.mxu0 0.0
        %2872 = vmatpush1.msra.mxu0 0.0
        %2873 = vmatprep.subr.mxu0 0.0
        %2874 = vmatpush1.msra.mxu0 0.0
        %2875 = vmatprep.subr.mxu0 0.0
        %2876 = vmatpush1.msra.mxu0 0.0
        %2877 = vmatprep.subr.mxu0 0.0
        %2878 = vmatpush1.msra.mxu0 0.0
        %2879 = vmatprep.subr.mxu0 0.0
        %2880 = vmatpush1.msra.mxu0 0.0
        %2881 = vmatprep.subr.mxu0 0.0
        %2882 = vmatpush1.msra.mxu0 0.0
        %2883 = vmatprep.subr.mxu0 0.0
        %2884 = vmatpush1.msra.mxu0 0.0
        %2885 = vmatprep.subr.mxu0 0.0
        %2886 = vmatpush1.msra.mxu0 0.0
        %2887 = vmatprep.subr.mxu0 0.0
        %2888 = vmatpush1.msra.mxu0 0.0
        %2889 = vmatprep.subr.mxu0 0.0
        %2890 = vmatpush1.msra.mxu0 0.0
        %2891 = vmatprep.subr.mxu0 0.0
        %2892 = vmatpush1.msra.mxu0 0.0
        %2893 = vmatprep.subr.mxu0 0.0
        %2894 = vmatpush1.msra.mxu0 0.0
        %2895 = vmatprep.subr.mxu0 0.0
        %2896 = vmatpush1.msra.mxu0 0.0
        %2897 = vmatprep.subr.mxu0 0.0
        %2898 = vmatpush1.msra.mxu0 0.0
        %2899 = vmatprep.subr.mxu0 0.0
        %2900 = vmatpush1.msra.mxu0 %v1656
        %2901 = vmatprep.subr.mxu0 0.0
        %2902 = vmatpush2.msra.mxu0 0.0
        %2903 = vmatprep.subr.mxu0 0.0
        %2904 = vmatpush2.msra.mxu0 0.0
        %2905 = vmatprep.subr.mxu0 0.0
        %2906 = vmatpush2.msra.mxu0 0.0
        %2907 = vmatprep.subr.mxu0 0.0
        %2908 = vmatpush2.msra.mxu0 0.0
        %2909 = vmatprep.subr.mxu0 0.0
        %2910 = vmatpush2.msra.mxu0 0.0
        %2911 = vmatprep.subr.mxu0 0.0
        %2912 = vmatpush2.msra.mxu0 0.0
        %2913 = vmatprep.subr.mxu0 0.0
        %2914 = vmatpush2.msra.mxu0 0.0
        %2915 = vmatprep.subr.mxu0 0.0
        %2916 = vmatpush2.msra.mxu0 0.0
        %2917 = vmatprep.subr.mxu0 0.0
        %2918 = vmatpush2.msra.mxu0 0.0
        %2919 = vmatprep.subr.mxu0 0.0
        %2920 = vmatpush2.msra.mxu0 0.0
        %2921 = vmatprep.subr.mxu0 0.0
        %2922 = vmatpush2.msra.mxu0 0.0
        %2923 = vmatprep.subr.mxu0 0.0
        %2924 = vmatpush2.msra.mxu0 0.0
        %2925 = vmatprep.subr.mxu0 0.0
        %2926 = vmatpush2.msra.mxu0 0.0
        %2927 = vmatprep.subr.mxu0 0.0
        %2928 = vmatpush2.msra.mxu0 0.0
        %2929 = vmatprep.subr.mxu0 0.0
        %2930 = vmatpush2.msra.mxu0 0.0
        %2931 = vmatprep.subr.mxu0 0.0
        %2932 = vmatpush2.msra.mxu0 0.0
        %2933 = vmatprep.mubr.f32.mxu0 0.0
        %2934 = vmatmul.mubr.f32.gmra.mxu0 %v2867
        %v2935 = vpop.f32.mrf.mxu0
        %v2936 = vadd.f32 0.0, %v2935
        %v2937 = vpop.f32.mrf.mxu0
        %2938 = vdwg.mxu0
        %v2939 = vcombine.low %v2425, %v2571
        %v2940 = vcombine.high %v2425, %v2571
        %v2942 = vunpack.c.l.s4 1983009808
        %v2943 = vunpack.c.0.s8 %v2942
        %v2944 = vlaneseq
        %v2945 = vshrl.u32 %v2944, 7
        %v2946 = vsub.s32 %v2943, %v2945
        %v2947 = vrot.slane %v2939, %v2946
        %v2949 = vunpack.c.l.s4 1983009808
        %v2950 = vunpack.c.0.s8 %v2949
        %v2951 = vlaneseq
        %v2952 = vshrl.u32 %v2951, 7
        %v2953 = vsub.s32 %v2950, %v2952
        %v2954 = vrot.slane %v2940, %v2953
        %v2955 = vcombine.low %v2498, %v2644
        %v2956 = vcombine.high %v2498, %v2644
        %v2958 = vunpack.c.l.s4 1983009808
        %v2959 = vunpack.c.0.s8 %v2958
        %v2960 = vlaneseq
        %v2961 = vshrl.u32 %v2960, 7
        %v2962 = vsub.s32 %v2959, %v2961
        %v2963 = vrot.slane %v2955, %v2962
        %v2965 = vunpack.c.l.s4 1983009808
        %v2966 = vunpack.c.0.s8 %v2965
        %v2967 = vlaneseq
        %v2968 = vshrl.u32 %v2967, 7
        %v2969 = vsub.s32 %v2966, %v2968
        %v2970 = vrot.slane %v2956, %v2969
        %v2971 = vcombine.low %v2717, %v2863
        %v2972 = vcombine.high %v2717, %v2863
        %v2974 = vunpack.c.l.s4 1983009808
        %v2975 = vunpack.c.0.s8 %v2974
        %v2976 = vlaneseq
        %v2977 = vshrl.u32 %v2976, 7
        %v2978 = vsub.s32 %v2975, %v2977
        %v2979 = vrot.slane %v2971, %v2978
        %v2981 = vunpack.c.l.s4 1983009808
        %v2982 = vunpack.c.0.s8 %v2981
        %v2983 = vlaneseq
        %v2984 = vshrl.u32 %v2983, 7
        %v2985 = vsub.s32 %v2982, %v2984
        %v2986 = vrot.slane %v2972, %v2985
        %v2987 = vcombine.low %v2790, %v2936
        %v2988 = vcombine.high %v2790, %v2936
        %v2990 = vunpack.c.l.s4 1983009808
        %v2991 = vunpack.c.0.s8 %v2990
        %v2992 = vlaneseq
        %v2993 = vshrl.u32 %v2992, 7
        %v2994 = vsub.s32 %v2991, %v2993
        %v2995 = vrot.slane %v2987, %v2994
        %v2997 = vunpack.c.l.s4 1983009808
        %v2998 = vunpack.c.0.s8 %v2997
        %v2999 = vlaneseq
        %v3000 = vshrl.u32 %v2999, 7
        %v3001 = vsub.s32 %v2998, %v3000
        %v3002 = vrot.slane %v2988, %v3001
        %v3003 = vcombine.low %v2947, %v2963
        %v3004 = vcombine.high %v2947, %v2963
        %v3006 = vunpack.c.l.s4 1934713408
        %v3007 = vunpack.c.0.s8 %v3006
        %v3008 = vlaneseq
        %v3009 = vshrl.u32 %v3008, 7
        %v3010 = vsub.s32 %v3007, %v3009
        %v3011 = vrot.slane %v3003, %v3010
        %v3013 = vunpack.c.l.s4 1934713408
        %v3014 = vunpack.c.0.s8 %v3013
        %v3015 = vlaneseq
        %v3016 = vshrl.u32 %v3015, 7
        %v3017 = vsub.s32 %v3014, %v3016
        %v3018 = vrot.slane %v3004, %v3017
        %v3019 = vcombine.low %v2954, %v2970
        %v3020 = vcombine.high %v2954, %v2970
        %v3022 = vunpack.c.l.s4 1934713408
        %v3023 = vunpack.c.0.s8 %v3022
        %v3024 = vlaneseq
        %v3025 = vshrl.u32 %v3024, 7
        %v3026 = vsub.s32 %v3023, %v3025
        %v3027 = vrot.slane %v3019, %v3026
        %v3029 = vunpack.c.l.s4 1934713408
        %v3030 = vunpack.c.0.s8 %v3029
        %v3031 = vlaneseq
        %v3032 = vshrl.u32 %v3031, 7
        %v3033 = vsub.s32 %v3030, %v3032
        %v3034 = vrot.slane %v3020, %v3033
        %v3035 = vcombine.low %v2979, %v2995
        %v3036 = vcombine.high %v2979, %v2995
        %v3038 = vunpack.c.l.s4 1934713408
        %v3039 = vunpack.c.0.s8 %v3038
        %v3040 = vlaneseq
        %v3041 = vshrl.u32 %v3040, 7
        %v3042 = vsub.s32 %v3039, %v3041
        %v3043 = vrot.slane %v3035, %v3042
        %v3045 = vunpack.c.l.s4 1934713408
        %v3046 = vunpack.c.0.s8 %v3045
        %v3047 = vlaneseq
        %v3048 = vshrl.u32 %v3047, 7
        %v3049 = vsub.s32 %v3046, %v3048
        %v3050 = vrot.slane %v3036, %v3049
        %v3051 = vcombine.low %v2986, %v3002
        %v3052 = vcombine.high %v2986, %v3002
        %v3054 = vunpack.c.l.s4 1934713408
        %v3055 = vunpack.c.0.s8 %v3054
        %v3056 = vlaneseq
        %v3057 = vshrl.u32 %v3056, 7
        %v3058 = vsub.s32 %v3055, %v3057
        %v3059 = vrot.slane %v3051, %v3058
        %v3061 = vunpack.c.l.s4 1934713408
        %v3062 = vunpack.c.0.s8 %v3061
        %v3063 = vlaneseq
        %v3064 = vshrl.u32 %v3063, 7
        %v3065 = vsub.s32 %v3062, %v3064
        %v3066 = vrot.slane %v3052, %v3065
        %v3067 = vcombine.low %v3011, %v3043
        %v3068 = vcombine.high %v3011, %v3043
        %v3069 = vcombine.low %v3018, %v3050
        %v3070 = vcombine.high %v3018, %v3050
        %v3071 = vcombine.low %v3027, %v3059
        %v3072 = vcombine.high %v3027, %v3059
        %v3073 = vcombine.low %v3034, %v3066
        %v3074 = vcombine.high %v3034, %v3066
        %v3075 = vcombine.low %v3067, %v3069
        %v3076 = vcombine.high %v3067, %v3069
        %v3078 = vunpack.c.l.s4 1983009808
        %v3079 = vunpack.c.0.s8 %v3078
        %v3080 = vlaneseq
        %v3081 = vshrl.u32 %v3080, 7
        %v3082 = vsub.s32 %v3079, %v3081
        %v3083 = vrot.slane %v3075, %v3082
        %v3085 = vunpack.c.l.s4 1983009808
        %v3086 = vunpack.c.0.s8 %v3085
        %v3087 = vlaneseq
        %v3088 = vshrl.u32 %v3087, 7
        %v3089 = vsub.s32 %v3086, %v3088
        %v3090 = vrot.slane %v3076, %v3089
        %v3091 = vcombine.low %v3068, %v3070
        %v3092 = vcombine.high %v3068, %v3070
        %v3094 = vunpack.c.l.s4 1983009808
        %v3095 = vunpack.c.0.s8 %v3094
        %v3096 = vlaneseq
        %v3097 = vshrl.u32 %v3096, 7
        %v3098 = vsub.s32 %v3095, %v3097
        %v3099 = vrot.slane %v3091, %v3098
        %v3101 = vunpack.c.l.s4 1983009808
        %v3102 = vunpack.c.0.s8 %v3101
        %v3103 = vlaneseq
        %v3104 = vshrl.u32 %v3103, 7
        %v3105 = vsub.s32 %v3102, %v3104
        %v3106 = vrot.slane %v3092, %v3105
        %v3107 = vcombine.low %v3071, %v3073
        %v3108 = vcombine.high %v3071, %v3073
        %v3110 = vunpack.c.l.s4 1983009808
        %v3111 = vunpack.c.0.s8 %v3110
        %v3112 = vlaneseq
        %v3113 = vshrl.u32 %v3112, 7
        %v3114 = vsub.s32 %v3111, %v3113
        %v3115 = vrot.slane %v3107, %v3114
        %v3117 = vunpack.c.l.s4 1983009808
        %v3118 = vunpack.c.0.s8 %v3117
        %v3119 = vlaneseq
        %v3120 = vshrl.u32 %v3119, 7
        %v3121 = vsub.s32 %v3118, %v3120
        %v3122 = vrot.slane %v3108, %v3121
        %v3123 = vcombine.low %v3072, %v3074
        %v3124 = vcombine.high %v3072, %v3074
        %v3126 = vunpack.c.l.s4 1983009808
        %v3127 = vunpack.c.0.s8 %v3126
        %v3128 = vlaneseq
        %v3129 = vshrl.u32 %v3128, 7
        %v3130 = vsub.s32 %v3127, %v3129
        %v3131 = vrot.slane %v3123, %v3130
        %v3133 = vunpack.c.l.s4 1983009808
        %v3134 = vunpack.c.0.s8 %v3133
        %v3135 = vlaneseq
        %v3136 = vshrl.u32 %v3135, 7
        %v3137 = vsub.s32 %v3134, %v3136
        %v3138 = vrot.slane %v3124, %v3137
        %v3139 = vcombine.low %v3083, %v3099
        %v3140 = vcombine.high %v3083, %v3099
        %v3142 = vunpack.c.l.s4 1934713408
        %v3143 = vunpack.c.0.s8 %v3142
        %v3144 = vlaneseq
        %v3145 = vshrl.u32 %v3144, 7
        %v3146 = vsub.s32 %v3143, %v3145
        %v3147 = vrot.slane %v3139, %v3146
        %v3149 = vunpack.c.l.s4 1934713408
        %v3150 = vunpack.c.0.s8 %v3149
        %v3151 = vlaneseq
        %v3152 = vshrl.u32 %v3151, 7
        %v3153 = vsub.s32 %v3150, %v3152
        %v3154 = vrot.slane %v3140, %v3153
        %v3155 = vcombine.low %v3090, %v3106
        %v3156 = vcombine.high %v3090, %v3106
        %v3158 = vunpack.c.l.s4 1934713408
        %v3159 = vunpack.c.0.s8 %v3158
        %v3160 = vlaneseq
        %v3161 = vshrl.u32 %v3160, 7
        %v3162 = vsub.s32 %v3159, %v3161
        %v3163 = vrot.slane %v3155, %v3162
        %v3165 = vunpack.c.l.s4 1934713408
        %v3166 = vunpack.c.0.s8 %v3165
        %v3167 = vlaneseq
        %v3168 = vshrl.u32 %v3167, 7
        %v3169 = vsub.s32 %v3166, %v3168
        %v3170 = vrot.slane %v3156, %v3169
        %v3171 = vcombine.low %v3115, %v3131
        %v3172 = vcombine.high %v3115, %v3131
        %v3174 = vunpack.c.l.s4 1934713408
        %v3175 = vunpack.c.0.s8 %v3174
        %v3176 = vlaneseq
        %v3177 = vshrl.u32 %v3176, 7
        %v3178 = vsub.s32 %v3175, %v3177
        %v3179 = vrot.slane %v3171, %v3178
        %v3181 = vunpack.c.l.s4 1934713408
        %v3182 = vunpack.c.0.s8 %v3181
        %v3183 = vlaneseq
        %v3184 = vshrl.u32 %v3183, 7
        %v3185 = vsub.s32 %v3182, %v3184
        %v3186 = vrot.slane %v3172, %v3185
        %v3187 = vcombine.low %v3122, %v3138
        %v3188 = vcombine.high %v3122, %v3138
        %v3190 = vunpack.c.l.s4 1934713408
        %v3191 = vunpack.c.0.s8 %v3190
        %v3192 = vlaneseq
        %v3193 = vshrl.u32 %v3192, 7
        %v3194 = vsub.s32 %v3191, %v3193
        %v3195 = vrot.slane %v3187, %v3194
        %v3197 = vunpack.c.l.s4 1934713408
        %v3198 = vunpack.c.0.s8 %v3197
        %v3199 = vlaneseq
        %v3200 = vshrl.u32 %v3199, 7
        %v3201 = vsub.s32 %v3198, %v3200
        %v3202 = vrot.slane %v3188, %v3201
        %v3203 = vcombine.low %v3147, %v3179
        %v3204 = vcombine.high %v3147, %v3179
        %v3205 = vcombine.low %v3154, %v3186
        %v3206 = vcombine.high %v3154, %v3186
        %v3207 = vcombine.low %v3163, %v3195
        %v3208 = vcombine.high %v3163, %v3195
        %v3209 = vcombine.low %v3170, %v3202
        %v3210 = vcombine.high %v3170, %v3202
        %3212 = vrot.lane.b32.xlu0 %v3204, 16
        %v3213 = vpop.permute.xlu0 %3212
        %3216 = vrot.lane.b32.xlu0 %v3205, 32
        %v3217 = vpop.permute.xlu0 %3216
        %3220 = vrot.lane.b32.xlu0 %v3206, 48
        %v3221 = vpop.permute.xlu0 %3220
        %3224 = vrot.lane.b32.xlu0 %v3207, 64
        %v3225 = vpop.permute.xlu0 %3224
        %3228 = vrot.lane.b32.xlu0 %v3208, 80
        %v3229 = vpop.permute.xlu0 %3228
        %3232 = vrot.lane.b32.xlu0 %v3209, 96
        %v3233 = vpop.permute.xlu0 %3232
        %3236 = vrot.lane.b32.xlu0 %v3210, 112
        %v3237 = vpop.permute.xlu0 %3236
        %v3239 = vsel %vm1657, %v3203, %v3213
        %vm3240 = vcmask 261120
        %v3241 = vsel %vm3240, %v3239, %v3217
        %vm3242 = vcmask 392192
        %v3243 = vsel %vm3242, %v3241, %v3221
        %vm3244 = vcmask 523264
        %v3245 = vsel %vm3244, %v3243, %v3225
        %vm3246 = vcmask 654336
        %v3247 = vsel %vm3246, %v3245, %v3229
        %vm3248 = vcmask 785408
        %v3249 = vsel %vm3248, %v3247, %v3233
        %vm3250 = vcmask 916480
        %v3251 = vsel %vm3250, %v3249, %v3237
        %v3252 = vld [vmem:[#allocation10] sm:$0xff]
        %v3253 = vld [vmem:[#allocation10 + $0x8] sm:$0xff]
        %v3254 = vld [vmem:[#allocation10 + $0x10] sm:$0xff]
        %v3255 = vld [vmem:[#allocation10 + $0x18] sm:$0xff]
        %v3256 = vld [vmem:[#allocation10 + $0x20] sm:$0xff]
        %v3257 = vld [vmem:[#allocation10 + $0x28] sm:$0xff]
        %v3258 = vld [vmem:[#allocation10 + $0x30] sm:$0xff]
        %v3259 = vld [vmem:[#allocation10 + $0x38] sm:$0xff]
        %v3260 = vld [vmem:[#allocation10 + $0x40] sm:$0xff]
        %v3261 = vld [vmem:[#allocation10 + $0x48] sm:$0xff]
        %v3262 = vld [vmem:[#allocation10 + $0x50] sm:$0xff]
        %v3263 = vld [vmem:[#allocation10 + $0x58] sm:$0xff]
        %v3264 = vld [vmem:[#allocation10 + $0x60] sm:$0xff]
        %v3265 = vld [vmem:[#allocation10 + $0x68] sm:$0xff]
        %v3266 = vld [vmem:[#allocation10 + $0x70] sm:$0xff]
        %v3267 = vld [vmem:[#allocation10 + $0x78] sm:$0xff]
        %v3268 = vld [vmem:[%s6] sm:$0x1]
        %v3270 = vlaneseq
        %v3271 = vshrl.u32 %v3270, 7
        %v3272 = vsub.s32 0, %v3271
        %v3273 = vrot.slane %v3268, %v3272
        %3275 = vmatprep.subr.mxu0 0.0
        %3276 = vmatpush1.msra.mxu0 %v3267
        %3277 = vmatprep.subr.mxu0 0.0
        %3278 = vmatpush1.msra.mxu0 %v3266
        %3279 = vmatprep.subr.mxu0 0.0
        %3280 = vmatpush1.msra.mxu0 %v3265
        %3281 = vmatprep.subr.mxu0 0.0
        %3282 = vmatpush1.msra.mxu0 %v3264
        %3283 = vmatprep.subr.mxu0 0.0
        %3284 = vmatpush1.msra.mxu0 %v3263
        %3285 = vmatprep.subr.mxu0 0.0
        %3286 = vmatpush1.msra.mxu0 %v3262
        %3287 = vmatprep.subr.mxu0 0.0
        %3288 = vmatpush1.msra.mxu0 %v3261
        %3289 = vmatprep.subr.mxu0 0.0
        %3290 = vmatpush1.msra.mxu0 %v3260
        %3291 = vmatprep.subr.mxu0 0.0
        %3292 = vmatpush1.msra.mxu0 %v3259
        %3293 = vmatprep.subr.mxu0 0.0
        %3294 = vmatpush1.msra.mxu0 %v3258
        %3295 = vmatprep.subr.mxu0 0.0
        %3296 = vmatpush1.msra.mxu0 %v3257
        %3297 = vmatprep.subr.mxu0 0.0
        %3298 = vmatpush1.msra.mxu0 %v3256
        %3299 = vmatprep.subr.mxu0 0.0
        %3300 = vmatpush1.msra.mxu0 %v3255
        %3301 = vmatprep.subr.mxu0 0.0
        %3302 = vmatpush1.msra.mxu0 %v3254
        %3303 = vmatprep.subr.mxu0 0.0
        %3304 = vmatpush1.msra.mxu0 %v3253
        %3305 = vmatprep.subr.mxu0 0.0
        %3306 = vmatpush1.msra.mxu0 %v3252
        %3307 = vmatprep.subr.mxu0 0.0
        %3308 = vmatpush2.msra.mxu0 0.0
        %3309 = vmatprep.subr.mxu0 0.0
        %3310 = vmatpush2.msra.mxu0 0.0
        %3311 = vmatprep.subr.mxu0 0.0
        %3312 = vmatpush2.msra.mxu0 0.0
        %3313 = vmatprep.subr.mxu0 0.0
        %3314 = vmatpush2.msra.mxu0 0.0
        %3315 = vmatprep.subr.mxu0 0.0
        %3316 = vmatpush2.msra.mxu0 0.0
        %3317 = vmatprep.subr.mxu0 0.0
        %3318 = vmatpush2.msra.mxu0 0.0
        %3319 = vmatprep.subr.mxu0 0.0
        %3320 = vmatpush2.msra.mxu0 0.0
        %3321 = vmatprep.subr.mxu0 0.0
        %3322 = vmatpush2.msra.mxu0 0.0
        %3323 = vmatprep.subr.mxu0 0.0
        %3324 = vmatpush2.msra.mxu0 0.0
        %3325 = vmatprep.subr.mxu0 0.0
        %3326 = vmatpush2.msra.mxu0 0.0
        %3327 = vmatprep.subr.mxu0 0.0
        %3328 = vmatpush2.msra.mxu0 0.0
        %3329 = vmatprep.subr.mxu0 0.0
        %3330 = vmatpush2.msra.mxu0 0.0
        %3331 = vmatprep.subr.mxu0 0.0
        %3332 = vmatpush2.msra.mxu0 0.0
        %3333 = vmatprep.subr.mxu0 0.0
        %3334 = vmatpush2.msra.mxu0 0.0
        %3335 = vmatprep.subr.mxu0 0.0
        %3336 = vmatpush2.msra.mxu0 0.0
        %3337 = vmatprep.subr.mxu0 0.0
        %3338 = vmatpush2.msra.mxu0 0.0
        %3339 = vmatprep.mubr.f32.mxu0 0.0
        %3340 = vmatmul.mubr.f32.gmra.mxu0 %v3251
        %v3341 = vpop.f32.mrf.mxu0
        %v3342 = vadd.f32 %v3273, %v3341
        %v3343 = vpop.f32.mrf.mxu0
        %3344 = vdwg.mxu0
        %v3345 = vadd.f32 %v3342, %v539
        %v3346 = vld [vmem:[%s7] sm:$0x1]
        %v3347 = vld [vmem:[%s8] sm:$0x1]
        %3348 = vadd.xlane.f32.xlu0 %v3345
        %v3349 = vpop.xlane.xlu0 %3348
        %v3350 = vmul.f32 %v3349, %v544
        %v3351 = vsub.f32 %v3345, %v3350
        %v3352 = vmul.f32 %v3351, %v3351
        %3353 = vadd.xlane.f32.xlu0 %v3352
        %v3354 = vpop.xlane.xlu0 %3353
        %v3355 = vmul.f32 %v3354, %v544
        %v3356 = vadd.f32 %v3355, 1e-05
        %v3357 = vrsqrt.pop %v3356
        %v3358 = vmul.f32 %v3351, %v3357
        %v3360 = vlaneseq
        %v3361 = vshrl.u32 %v3360, 7
        %v3362 = vsub.s32 0, %v3361
        %v3363 = vrot.slane %v3346, %v3362
        %v3365 = vmul.f32 %v3358, %v3363
        %v3367 = vlaneseq
        %v3368 = vshrl.u32 %v3367, 7
        %v3369 = vsub.s32 0, %v3368
        %v3370 = vrot.slane %v3347, %v3369
        %v3372 = vadd.f32 %v3365, %v3370
        %v3373 = vld [vmem:[#allocation11] sm:$0xff]
        %v3374 = vld [vmem:[#allocation11 + $0x8] sm:$0xff]
        %v3375 = vld [vmem:[#allocation11 + $0x10] sm:$0xff]
        %v3376 = vld [vmem:[#allocation11 + $0x18] sm:$0xff]
        %v3377 = vld [vmem:[#allocation11 + $0x20] sm:$0xff]
        %v3378 = vld [vmem:[#allocation11 + $0x28] sm:$0xff]
        %v3379 = vld [vmem:[#allocation11 + $0x30] sm:$0xff]
        %v3380 = vld [vmem:[#allocation11 + $0x38] sm:$0xff]
        %v3381 = vld [vmem:[#allocation11 + $0x40] sm:$0xff]
        %v3382 = vld [vmem:[#allocation11 + $0x48] sm:$0xff]
        %v3383 = vld [vmem:[#allocation11 + $0x50] sm:$0xff]
        %v3384 = vld [vmem:[#allocation11 + $0x58] sm:$0xff]
        %v3385 = vld [vmem:[#allocation11 + $0x60] sm:$0xff]
        %v3386 = vld [vmem:[#allocation11 + $0x68] sm:$0xff]
        %v3387 = vld [vmem:[#allocation11 + $0x70] sm:$0xff]
        %v3388 = vld [vmem:[#allocation11 + $0x78] sm:$0xff]
        %v3389 = vld [vmem:[#allocation11 + $0x80] sm:$0xff]
        %v3390 = vld [vmem:[#allocation11 + $0x88] sm:$0xff]
        %v3391 = vld [vmem:[#allocation11 + $0x90] sm:$0xff]
        %v3392 = vld [vmem:[#allocation11 + $0x98] sm:$0xff]
        %v3393 = vld [vmem:[#allocation11 + $0xa0] sm:$0xff]
        %v3394 = vld [vmem:[#allocation11 + $0xa8] sm:$0xff]
        %v3395 = vld [vmem:[#allocation11 + $0xb0] sm:$0xff]
        %v3396 = vld [vmem:[#allocation11 + $0xb8] sm:$0xff]
        %v3397 = vld [vmem:[#allocation11 + $0xc0] sm:$0xff]
        %v3398 = vld [vmem:[#allocation11 + $0xc8] sm:$0xff]
        %v3399 = vld [vmem:[#allocation11 + $0xd0] sm:$0xff]
        %v3400 = vld [vmem:[#allocation11 + $0xd8] sm:$0xff]
        %v3401 = vld [vmem:[#allocation11 + $0xe0] sm:$0xff]
        %v3402 = vld [vmem:[#allocation11 + $0xe8] sm:$0xff]
        %v3403 = vld [vmem:[#allocation11 + $0xf0] sm:$0xff]
        %v3404 = vld [vmem:[#allocation11 + $0xf8] sm:$0xff]
        %v3405 = vld [vmem:[%s10] sm:$0x3]
        %v3407 = vlaneseq
        %v3408 = vshrl.u32 %v3407, 7
        %v3409 = vsub.s32 0, %v3408
        %v3410 = vrot.slane %v3405, %v3409
        %v3411 = vlaneseq
        %v3412 = vshrl.u32 %v3411, 7
        %v3413 = vsub.s32 1, %v3412
        %v3414 = vrot.slane %v3405, %v3413
        %3417 = vmatprep.subr.mxu0 %v3404
        %3418 = vmatpush1.msra.mxu0 %v3403
        %3419 = vmatprep.subr.mxu0 %v3402
        %3420 = vmatpush1.msra.mxu0 %v3401
        %3421 = vmatprep.subr.mxu0 %v3400
        %3422 = vmatpush1.msra.mxu0 %v3399
        %3423 = vmatprep.subr.mxu0 %v3398
        %3424 = vmatpush1.msra.mxu0 %v3397
        %3425 = vmatprep.subr.mxu0 %v3396
        %3426 = vmatpush1.msra.mxu0 %v3395
        %3427 = vmatprep.subr.mxu0 %v3394
        %3428 = vmatpush1.msra.mxu0 %v3393
        %3429 = vmatprep.subr.mxu0 %v3392
        %3430 = vmatpush1.msra.mxu0 %v3391
        %3431 = vmatprep.subr.mxu0 %v3390
        %3432 = vmatpush1.msra.mxu0 %v3389
        %3433 = vmatprep.subr.mxu0 %v3388
        %3434 = vmatpush1.msra.mxu0 %v3387
        %3435 = vmatprep.subr.mxu0 %v3386
        %3436 = vmatpush1.msra.mxu0 %v3385
        %3437 = vmatprep.subr.mxu0 %v3384
        %3438 = vmatpush1.msra.mxu0 %v3383
        %3439 = vmatprep.subr.mxu0 %v3382
        %3440 = vmatpush1.msra.mxu0 %v3381
        %3441 = vmatprep.subr.mxu0 %v3380
        %3442 = vmatpush1.msra.mxu0 %v3379
        %3443 = vmatprep.subr.mxu0 %v3378
        %3444 = vmatpush1.msra.mxu0 %v3377
        %3445 = vmatprep.subr.mxu0 %v3376
        %3446 = vmatpush1.msra.mxu0 %v3375
        %3447 = vmatprep.subr.mxu0 %v3374
        %3448 = vmatpush1.msra.mxu0 %v3373
        %3449 = vmatprep.subr.mxu0 0.0
        %3450 = vmatpush2.msra.mxu0 0.0
        %3451 = vmatprep.subr.mxu0 0.0
        %3452 = vmatpush2.msra.mxu0 0.0
        %3453 = vmatprep.subr.mxu0 0.0
        %3454 = vmatpush2.msra.mxu0 0.0
        %3455 = vmatprep.subr.mxu0 0.0
        %3456 = vmatpush2.msra.mxu0 0.0
        %3457 = vmatprep.subr.mxu0 0.0
        %3458 = vmatpush2.msra.mxu0 0.0
        %3459 = vmatprep.subr.mxu0 0.0
        %3460 = vmatpush2.msra.mxu0 0.0
        %3461 = vmatprep.subr.mxu0 0.0
        %3462 = vmatpush2.msra.mxu0 0.0
        %3463 = vmatprep.subr.mxu0 0.0
        %3464 = vmatpush2.msra.mxu0 0.0
        %3465 = vmatprep.subr.mxu0 0.0
        %3466 = vmatpush2.msra.mxu0 0.0
        %3467 = vmatprep.subr.mxu0 0.0
        %3468 = vmatpush2.msra.mxu0 0.0
        %3469 = vmatprep.subr.mxu0 0.0
        %3470 = vmatpush2.msra.mxu0 0.0
        %3471 = vmatprep.subr.mxu0 0.0
        %3472 = vmatpush2.msra.mxu0 0.0
        %3473 = vmatprep.subr.mxu0 0.0
        %3474 = vmatpush2.msra.mxu0 0.0
        %3475 = vmatprep.subr.mxu0 0.0
        %3476 = vmatpush2.msra.mxu0 0.0
        %3477 = vmatprep.subr.mxu0 0.0
        %3478 = vmatpush2.msra.mxu0 0.0
        %3479 = vmatprep.subr.mxu0 0.0
        %3480 = vmatpush2.msra.mxu0 0.0
        %3481 = vmatprep.mubr.f32.mxu0 0.0
        %3482 = vmatmul.mubr.f32.gmra.mxu0 %v3372
        %v3483 = vpop.f32.mrf.mxu0
        %v3484 = vadd.f32 %v3410, %v3483
        %v3485 = vpop.f32.mrf.mxu0
        %v3486 = vadd.f32 %v3414, %v3485
        %3487 = vdwg.mxu0
        %v3488 = vmul.f32 %v3484, 0.5
        %v3489 = vmul.f32 %v3486, 0.5
        %v3490 = vmul.f32 %v3484, 0.70710677
        %v3491 = vmul.f32 %v3486, 0.70710677
        %v3492 = verf.f32.pop %v3490
        %v3493 = verf.f32.pop %v3491
        %v3494 = vadd.f32 %v3492, 1.0
        %v3495 = vadd.f32 %v3493, 1.0
        %v3496 = vmul.f32 %v3488, %v3494
        %v3497 = vmul.f32 %v3489, %v3495
        %v3498 = vld [vmem:[#allocation13] sm:$0xff]
        %v3499 = vld [vmem:[#allocation13 + $0x8] sm:$0xff]
        %v3500 = vld [vmem:[#allocation13 + $0x10] sm:$0xff]
        %v3501 = vld [vmem:[#allocation13 + $0x18] sm:$0xff]
        %v3502 = vld [vmem:[#allocation13 + $0x20] sm:$0xff]
        %v3503 = vld [vmem:[#allocation13 + $0x28] sm:$0xff]
        %v3504 = vld [vmem:[#allocation13 + $0x30] sm:$0xff]
        %v3505 = vld [vmem:[#allocation13 + $0x38] sm:$0xff]
        %v3506 = vld [vmem:[#allocation13 + $0x40] sm:$0xff]
        %v3507 = vld [vmem:[#allocation13 + $0x48] sm:$0xff]
        %v3508 = vld [vmem:[#allocation13 + $0x50] sm:$0xff]
        %v3509 = vld [vmem:[#allocation13 + $0x58] sm:$0xff]
        %v3510 = vld [vmem:[#allocation13 + $0x60] sm:$0xff]
        %v3511 = vld [vmem:[#allocation13 + $0x68] sm:$0xff]
        %v3512 = vld [vmem:[#allocation13 + $0x70] sm:$0xff]
        %v3513 = vld [vmem:[#allocation13 + $0x78] sm:$0xff]
        %v3514 = vld [vmem:[#allocation13 + $0x80] sm:$0xff]
        %v3515 = vld [vmem:[#allocation13 + $0x88] sm:$0xff]
        %v3516 = vld [vmem:[#allocation13 + $0x90] sm:$0xff]
        %v3517 = vld [vmem:[#allocation13 + $0x98] sm:$0xff]
        %v3518 = vld [vmem:[#allocation13 + $0xa0] sm:$0xff]
        %v3519 = vld [vmem:[#allocation13 + $0xa8] sm:$0xff]
        %v3520 = vld [vmem:[#allocation13 + $0xb0] sm:$0xff]
        %v3521 = vld [vmem:[#allocation13 + $0xb8] sm:$0xff]
        %v3522 = vld [vmem:[#allocation13 + $0xc0] sm:$0xff]
        %v3523 = vld [vmem:[#allocation13 + $0xc8] sm:$0xff]
        %v3524 = vld [vmem:[#allocation13 + $0xd0] sm:$0xff]
        %v3525 = vld [vmem:[#allocation13 + $0xd8] sm:$0xff]
        %v3526 = vld [vmem:[#allocation13 + $0xe0] sm:$0xff]
        %v3527 = vld [vmem:[#allocation13 + $0xe8] sm:$0xff]
        %v3528 = vld [vmem:[#allocation13 + $0xf0] sm:$0xff]
        %v3529 = vld [vmem:[#allocation13 + $0xf8] sm:$0xff]
        %v3530 = vld [vmem:[%s12] sm:$0x1]
        %v3532 = vlaneseq
        %v3533 = vshrl.u32 %v3532, 7
        %v3534 = vsub.s32 0, %v3533
        %v3535 = vrot.slane %v3530, %v3534
        %3537 = vmatprep.subr.mxu0 0.0
        %3538 = vmatpush1.msra.mxu0 %v3513
        %3539 = vmatprep.subr.mxu0 0.0
        %3540 = vmatpush1.msra.mxu0 %v3512
        %3541 = vmatprep.subr.mxu0 0.0
        %3542 = vmatpush1.msra.mxu0 %v3511
        %3543 = vmatprep.subr.mxu0 0.0
        %3544 = vmatpush1.msra.mxu0 %v3510
        %3545 = vmatprep.subr.mxu0 0.0
        %3546 = vmatpush1.msra.mxu0 %v3509
        %3547 = vmatprep.subr.mxu0 0.0
        %3548 = vmatpush1.msra.mxu0 %v3508
        %3549 = vmatprep.subr.mxu0 0.0
        %3550 = vmatpush1.msra.mxu0 %v3507
        %3551 = vmatprep.subr.mxu0 0.0
        %3552 = vmatpush1.msra.mxu0 %v3506
        %3553 = vmatprep.subr.mxu0 0.0
        %3554 = vmatpush1.msra.mxu0 %v3505
        %3555 = vmatprep.subr.mxu0 0.0
        %3556 = vmatpush1.msra.mxu0 %v3504
        %3557 = vmatprep.subr.mxu0 0.0
        %3558 = vmatpush1.msra.mxu0 %v3503
        %3559 = vmatprep.subr.mxu0 0.0
        %3560 = vmatpush1.msra.mxu0 %v3502
        %3561 = vmatprep.subr.mxu0 0.0
        %3562 = vmatpush1.msra.mxu0 %v3501
        %3563 = vmatprep.subr.mxu0 0.0
        %3564 = vmatpush1.msra.mxu0 %v3500
        %3565 = vmatprep.subr.mxu0 0.0
        %3566 = vmatpush1.msra.mxu0 %v3499
        %3567 = vmatprep.subr.mxu0 0.0
        %3568 = vmatpush1.msra.mxu0 %v3498
        %3569 = vmatprep.subr.mxu0 0.0
        %3570 = vmatpush2.msra.mxu0 %v3529
        %3571 = vmatprep.subr.mxu0 0.0
        %3572 = vmatpush2.msra.mxu0 %v3528
        %3573 = vmatprep.subr.mxu0 0.0
        %3574 = vmatpush2.msra.mxu0 %v3527
        %3575 = vmatprep.subr.mxu0 0.0
        %3576 = vmatpush2.msra.mxu0 %v3526
        %3577 = vmatprep.subr.mxu0 0.0
        %3578 = vmatpush2.msra.mxu0 %v3525
        %3579 = vmatprep.subr.mxu0 0.0
        %3580 = vmatpush2.msra.mxu0 %v3524
        %3581 = vmatprep.subr.mxu0 0.0
        %3582 = vmatpush2.msra.mxu0 %v3523
        %3583 = vmatprep.subr.mxu0 0.0
        %3584 = vmatpush2.msra.mxu0 %v3522
        %3585 = vmatprep.subr.mxu0 0.0
        %3586 = vmatpush2.msra.mxu0 %v3521
        %3587 = vmatprep.subr.mxu0 0.0
        %3588 = vmatpush2.msra.mxu0 %v3520
        %3589 = vmatprep.subr.mxu0 0.0
        %3590 = vmatpush2.msra.mxu0 %v3519
        %3591 = vmatprep.subr.mxu0 0.0
        %3592 = vmatpush2.msra.mxu0 %v3518
        %3593 = vmatprep.subr.mxu0 0.0
        %3594 = vmatpush2.msra.mxu0 %v3517
        %3595 = vmatprep.subr.mxu0 0.0
        %3596 = vmatpush2.msra.mxu0 %v3516
        %3597 = vmatprep.subr.mxu0 0.0
        %3598 = vmatpush2.msra.mxu0 %v3515
        %3599 = vmatprep.subr.mxu0 0.0
        %3600 = vmatpush2.msra.mxu0 %v3514
        %3601 = vmatprep.mubr.f32.mxu0 %v3497
        %3602 = vmatmul.mubr.f32.gmra.mxu0 %v3496
        %v3603 = vpop.f32.mrf.mxu0
        %v3604 = vadd.f32 %v3535, %v3603
        %v3605 = vpop.f32.mrf.mxu0
        %3606 = vdwg.mxu0
        %v3607 = vmul.f32 %v3604, 0.5
        %v3608 = vmul.f32 %v3604, 0.70710677
        %v3609 = verf.f32.pop %v3608
        %v3610 = vadd.f32 %v3609, 1.0
        %v3611 = vmul.f32 %v3607, %v3610
        %v3612 = vadd.f32 %v3611, %v3345
        %3613 = vst [vmem:[%s538] sm:$0xff] %v3612
        %s3614 = sand.u32 %s319, 1
        %s3615 = scalar_lea.sflag [#allocation4], %s3614
        %s3616 = sand.u32 %s319, 1
        %s3617 = smul.addr %s3616, 8
        %s3618 = scalar_lea.vmem [#allocation14], %s3617
        // Predicated region
        $region101: #{tpu_custom_call.1} parent=71 // pred_check
          %p3619 = pneg %p329
        $region102: #{tpu_custom_call.1} parent=71 // pred_check_branch
          %3621 = sbr.rel (%p3619) target = $region104
        $region103: #{tpu_custom_call.1} parent=71 // pred_region
          %s3623 = ssub.s32 128, 128
          %3624 = vsyncadd %s3615, %s3623
          %s3625 = smul.addr %s33, 128
          %s3626 = scalar_lea.hbm %s13, %s3625
          %s3628 = sshll.u32 %s3618, 4
          %s3629 = int_to_ptr.vmem [resolvable:$true] %s3628
          %3631 = dma.vmem_to_hbm [thread:$0]  %s3629, 128, %s3626, %s3615
        $region104: #{tpu_custom_call.1} parent=71 // pred_fallthru
          _
      $region72: #{tpu_custom_call.1} parent=5 // pred_fallthru
        _
      %p3632 = scmp.le.s32.totalorder 2, %s28
      // Predicated region
      $region105: #{tpu_custom_call.1} parent=5 // pred_check
        %p3633 = pneg %p3632
      $region106: #{tpu_custom_call.1} parent=5 // pred_check_branch
        %3635 = sbr.rel (%p3633) target = $region108
      $region107: #{tpu_custom_call.1} parent=5 // pred_region
        %s3636 = ssub.s32 %s28, 2
        // Predicated region
        $region109: #{tpu_custom_call.1} parent=107 // pred_check
          %p3637 = pneg %p335
        $region110: #{tpu_custom_call.1} parent=107 // pred_check_branch
          %3639 = sbr.rel (%p3637) target = $region112
        $region111: #{tpu_custom_call.1} parent=107 // pred_region
          %s3640 = sand.u32 %s320, 1
          %s3641 = scalar_lea.sflag [#allocation4], %s3640
          %s3642 = sand.u32 %s320, 1
          %s3643 = smul.addr %s3642, 8
          %s3644 = scalar_lea.vmem [#allocation14], %s3643
          %3645 = dma.done %s3641, 128
        $region112: #{tpu_custom_call.1} parent=107 // pred_fallthru
          _
      $region108: #{tpu_custom_call.1} parent=5 // pred_fallthru
        _
    $region6: #{tpu_custom_call.1} parent=1 // loop_footer
      %s32 = sadd.s32 1, %s28
    $region7: #{tpu_custom_call.1} parent=1 // loop_footer_branch
      %27 = sbr.rel target = $region3
    $region8: #{tpu_custom_call.1} parent=1 // loop_exit
      _
    %3646 = vsyncpa [#allocation3], 1
    %s3647 = scalar_lea.sflag [#allocation3], 1
    %3648 = vsyncpa %s3647, 1
    %3649 = vsyncpa [#allocation6], 1
    %3650 = vsyncpa [#allocation9], 1
    %3651 = vsyncpa [#allocation12], 1
    %3652 = vsyncpa [#allocation4], 1
    %s3653 = scalar_lea.sflag [#allocation4], 1
    %3654 = vsyncpa %s3653, 1

</llo_original>
